<compile_context>
chip_gen: v5e
topology: v5e:2x2
jax: 0.10.0
libtpu: 0.0.40
codegen_flags: <defaults>
</compile_context>

<pallas_src>
import functools

import jax
import jax.numpy as jnp
from jax.experimental import pallas as pl
from jax.experimental.pallas import tpu as pltpu

EPS = 1e-5


# --------------------------------------------------------------------------
# Kernels (each runs over a grid of images; one image = H*W rows per block)
# --------------------------------------------------------------------------

def conv1_kernel(x_ref, w1_ref, h1_ref, st_ref):
    """1x1 conv (matmul) + per-block BN1 partial stats (sum, sumsq)."""
    # v5e note: x could be streamed bf16 to halve HBM traffic; kept f32 here
    # so the residual add and the 1e-3 tolerance vs. the f32 reference hold.
    h = jnp.dot(x_ref[...].astype(jnp.bfloat16), w1_ref[...],
                preferred_element_type=jnp.float32)          # (rows, Cb) f32
    h1_ref[...] = h
    cb = h.shape[1]
    st_ref[:, 0:1, :] = jnp.sum(h, axis=0, keepdims=True).reshape(1, 1, cb)
    st_ref[:, 1:2, :] = jnp.sum(h * h, axis=0, keepdims=True).reshape(1, 1, cb)


def conv2_kernel(h1_ref, w2_ref, sc_ref, mask_ref, h2_ref, st_ref, *, W, Cb):
    """BN1(scale/shift)+ReLU -> 3x3 conv (pad=1) via 9 accumulating matmuls
    with pltpu.roll row shifts, + per-block BN2 partial stats."""
    scale = sc_ref[0:1, :]
    shift = sc_ref[1:2, :]
    a = jnp.maximum(h1_ref[...] * scale + shift, 0.0)        # (rows, Cb) f32
    rows = a.shape[0]
    mask = mask_ref[...]                                      # (rows, 9) f32

    acc = jnp.zeros((rows, Cb), jnp.float32)
    t = 0
    for dy in (-1, 0, 1):
        for dx in (-1, 0, 1):
            s = dy * W + dx              # flattened row offset of this tap
            if s == 0:
                shifted = a
            else:
                # shifted[r] = a[(r + s) mod rows]; wrapped rows (image
                # borders / block boundary) are zeroed by the mask below.
                shifted = pltpu.roll(a, shift=(-s) % rows, axis=0)
            part = jnp.dot(shifted.astype(jnp.bfloat16), w2_ref[t],
                           preferred_element_type=jnp.float32)
            if s == 0:
                acc = acc + part                      # center tap: no mask
            else:
                # masking the f32 product rows == masking the operand rows
                acc = acc + part * mask[:, t:t + 1]
            t += 1

    h2_ref[...] = acc
    st_ref[:, 0:1, :] = jnp.sum(acc, axis=0, keepdims=True).reshape(1, 1, Cb)
    st_ref[:, 1:2, :] = jnp.sum(acc * acc, axis=0, keepdims=True).reshape(1, 1, Cb)


def conv3_kernel(h2_ref, w3_ref, sc_ref, h3_ref, st_ref):
    """BN2(scale/shift)+ReLU -> 1x1 conv + per-block BN3 partial stats."""
    scale = sc_ref[0:1, :]
    shift = sc_ref[1:2, :]
    a = jnp.maximum(h2_ref[...] * scale + shift, 0.0)
    h3 = jnp.dot(a.astype(jnp.bfloat16), w3_ref[...],
                 preferred_element_type=jnp.float32)          # (rows, Cin)
    h3_ref[...] = h3
    cin = h3.shape[1]
    st_ref[:, 0:1, :] = jnp.sum(h3, axis=0, keepdims=True).reshape(1, 1, cin)
    st_ref[:, 1:2, :] = jnp.sum(h3 * h3, axis=0, keepdims=True).reshape(1, 1, cin)


def bn_residual_kernel(h3_ref, x_ref, sc_ref, o_ref):
    """BN3(scale/shift) + identity + ReLU."""
    scale = sc_ref[0:1, :]
    shift = sc_ref[1:2, :]
    o_ref[...] = jnp.maximum(h3_ref[...] * scale + shift + x_ref[...],
                             0.0).astype(o_ref.dtype)


# --------------------------------------------------------------------------
# Wrapper
# --------------------------------------------------------------------------

def _compiler_params():
    # Derive the scoped-VMEM limit from the physical VMEM of this chip
    # (v7x: 64 MiB, v5e/v6e: 128 MiB) minus headroom; fall back to the
    # compiler default if the query is unavailable.
    try:
        vmem = int(pltpu.get_tpu_info().vmem_capacity_bytes * 3 // 4)
    except Exception:
        vmem = None
    return pltpu.CompilerParams(dimension_semantics=("parallel",),
                                vmem_limit_bytes=vmem)


def _make_border_mask(H, W):
    """(H*W, 9) f32 mask: 1.0 where the 3x3 tap (dy, dx) is in-bounds."""
    y = jnp.arange(H * W) // W
    x = jnp.arange(H * W) % W
    cols = []
    for dy in (-1, 0, 1):
        for dx in (-1, 0, 1):
            ok = ((y + dy >= 0) & (y + dy <= H - 1) &
                  (x + dx >= 0) & (x + dx <= W - 1))
            cols.append(ok)
    return jnp.stack(cols, axis=1).astype(jnp.float32)


def _scale_shift(stats, gamma, beta, count):
    """Combine per-block (sum, sumsq) partials -> fused BN scale/shift (2, C).

    Single-pass variance (E[x^2]-E[x]^2) in f32 with a max(.,0) guard; at
    ResNet-scale activations a Welford / two-pass combine would be preferred.
    """
    s = jnp.sum(stats[:, 0, :], axis=0)
    ss = jnp.sum(stats[:, 1, :], axis=0)
    mean = s / count
    var = jnp.maximum(ss / count - mean * mean, 0.0)
    scale = gamma.reshape(-1) * jax.lax.rsqrt(var + EPS)
    shift = beta.reshape(-1) - mean * scale
    return jnp.stack([scale, shift], axis=0)                 # (2, C) f32


def bottleneck_block(x_nchw, params):
    """x_nchw: (N, Cin, H, W) float32 -> (N, Cin, H, W) float32."""
    N, Cin, H, W = x_nchw.shape
    Cb = params["w1"].shape[1]
    HW = H * W
    assert HW % 8 == 0, "H*W must be a multiple of 8 (sublane alignment)"
    NHW = N * HW
    rows = HW                      # one image per block; >=256 rows fills the
    grid = (N,)                    # MXU M dim on v6e/v7x at real ResNet sizes

    # channels-last, spatially flattened: activations are (N*H*W, C) matrices.
    # TODO(synk): at tiny Cin (4 here) a lane-dense last dim (folding a spatial
    # factor) would avoid masked vst.msk stores; irrelevant at real Cin=256.
    x_flat = jnp.transpose(x_nchw, (0, 2, 3, 1)).reshape(NHW, Cin)

    # bf16 weights for the MXU (accumulation stays f32 inside the kernels).
    w1 = params["w1"].astype(jnp.bfloat16)                   # (Cin, Cb)
    w2 = params["w2"].astype(jnp.bfloat16)                   # (9, Cb, Cb)
    w3 = params["w3"].astype(jnp.bfloat16)                   # (Cb, Cin)

    mask = _make_border_mask(H, W)                            # (HW, 9) f32
    cparams = _compiler_params()

    row_cb = pl.BlockSpec((rows, Cb), lambda n: (n, 0))
    row_cin = pl.BlockSpec((rows, Cin), lambda n: (n, 0))
    st_cb = pl.BlockSpec((1, 2, Cb), lambda n: (n, 0, 0))
    st_cin = pl.BlockSpec((1, 2, Cin), lambda n: (n, 0, 0))

    def full(shape):
        return pl.BlockSpec(shape, lambda n, _s=shape: tuple(0 for _ in _s))

    # --- stage 1: conv1 (1x1) + per-image BN1 partial stats --------------
    h1, st1 = pl.pallas_call(
        conv1_kernel,
        grid=grid,
        in_specs=[row_cin, full((Cin, Cb))],
        out_specs=(row_cb, st_cb),
        out_shape=(jax.ShapeDtypeStruct((NHW, Cb), jnp.float32),
                   jax.ShapeDtypeStruct((N, 2, Cb), jnp.float32)),
        compiler_params=cparams,
    )(x_flat, w1)
    sc1 = _scale_shift(st1, params["g1"], params["b1"], NHW)

    # --- stage 2: BN1+ReLU -> conv2 (3x3, per-tap roll+matmul) + stats ---
    h2, st2 = pl.pallas_call(
        functools.partial(conv2_kernel, W=W, Cb=Cb),
        grid=grid,
        in_specs=[row_cb, full((9, Cb, Cb)), full((2, Cb)), full((rows, 9))],
        out_specs=(row_cb, st_cb),
        out_shape=(jax.ShapeDtypeStruct((NHW, Cb), jnp.float32),
                   jax.ShapeDtypeStruct((N, 2, Cb), jnp.float32)),
        compiler_params=cparams,
    )(h1, w2, sc1, mask)
    sc2 = _scale_shift(st2, params["g2"], params["b2"], NHW)

    # --- stage 3: BN2+ReLU -> conv3 (1x1) + stats -------------------------
    h3, st3 = pl.pallas_call(
        conv3_kernel,
        grid=grid,
        in_specs=[row_cb, full((Cb, Cin)), full((2, Cb))],
        out_specs=(row_cin, st_cin),
        out_shape=(jax.ShapeDtypeStruct((NHW, Cin), jnp.float32),
                   jax.ShapeDtypeStruct((N, 2, Cin), jnp.float32)),
        compiler_params=cparams,
    )(h2, w3, sc2)
    sc3 = _scale_shift(st3, params["g3"], params["b3"], NHW)

    # --- stage 4: BN3 + identity + ReLU -----------------------------------
    out_flat = pl.pallas_call(
        bn_residual_kernel,
        grid=grid,
        in_specs=[row_cin, row_cin, full((2, Cin))],
        out_specs=row_cin,
        out_shape=jax.ShapeDtypeStruct((NHW, Cin), x_nchw.dtype),
        compiler_params=cparams,
    )(h3, x_flat, sc3)

    return jnp.transpose(out_flat.reshape(N, H, W, Cin), (0, 3, 1, 2))


# --------------------------------------------------------------------------
# Pure-JAX reference (training-mode BN, same bf16-in / f32-acc matmuls)
# --------------------------------------------------------------------------

def reference(x_nchw, params):
    x = jnp.transpose(x_nchw, (0, 2, 3, 1)).astype(jnp.float32)
    N, H, W, Cin = x.shape
    Cb = params["w1"].shape[1]
    bf = jnp.bfloat16

    def bn(v, g, b):
        m = jnp.mean(v, axis=(0, 1, 2), keepdims=True)
        var = jnp.mean((v - m) ** 2, axis=(0, 1, 2), keepdims=True)
        return (v - m) / jnp.sqrt(var + EPS) * g.reshape(1, 1, 1, -1) \
            + b.reshape(1, 1, 1, -1)

    w1 = params["w1"].astype(bf)
    w2 = params["w2"].astype(bf)
    w3 = params["w3"].astype(bf)

    h = jnp.einsum("nhwc,cd->nhwd", x.astype(bf), w1,
                   preferred_element_type=jnp.float32)
    h = jnp.maximum(bn(h, params["g1"], params["b1"]), 0.0)
    hp = jnp.pad(h, ((0, 0), (1, 1), (1, 1), (0, 0))).astype(bf)
    acc = jnp.zeros((N, H, W, Cb), jnp.float32)
    for tap in range(9):
        dy, dx = tap // 3, tap % 3
        acc = acc + jnp.einsum("nhwc,cd->nhwd",
                               hp[:, dy:dy + H, dx:dx + W, :], w2[tap],
                               preferred_element_type=jnp.float32)
    h2 = jnp.maximum(bn(acc, params["g2"], params["b2"]), 0.0)
    h3 = jnp.einsum("nhwc,cd->nhwd", h2.astype(bf), w3,
                    preferred_element_type=jnp.float32)
    out = jnp.maximum(bn(h3, params["g3"], params["b3"]) + x, 0.0)
    return jnp.transpose(out, (0, 3, 1, 2))


def make_params(key, in_channels, bottleneck_channels):
    k1, k2, k3 = jax.random.split(key, 3)
    Cin, Cb = in_channels, bottleneck_channels
    # conv weights stored as (Cin_of_layer, Cout_of_layer); 3x3 as (9, Cb, Cb)
    w1 = jax.random.normal(k1, (Cin, Cb), jnp.float32) * (1.0 / jnp.sqrt(Cin))
    w2 = jax.random.normal(k2, (9, Cb, Cb), jnp.float32) * (1.0 / jnp.sqrt(9 * Cb))
    w3 = jax.random.normal(k3, (Cb, Cin), jnp.float32) * (1.0 / jnp.sqrt(Cb))
    # BatchNorm affine params: PyTorch __init__ defaults (gamma=1, beta=0)
    return {
        "w1": w1, "w2": w2, "w3": w3,
        "g1": jnp.ones((1, Cb), jnp.float32), "b1": jnp.zeros((1, Cb), jnp.float32),
        "g2": jnp.ones((1, Cb), jnp.float32), "b2": jnp.zeros((1, Cb), jnp.float32),
        "g3": jnp.ones((1, Cin), jnp.float32), "b3": jnp.zeros((1, Cin), jnp.float32),
    }


if __name__ == "__main__":
    key = jax.random.PRNGKey(0)
    kx, kp = jax.random.split(key)

    N, Cin, H, W = 2, 4, 16, 16
    Cb = 8
    x = jax.random.normal(kx, (N, Cin, H, W), jnp.float32)
    params = make_params(kp, Cin, Cb)

    fwd = jax.jit(bottleneck_block)
    out = jax.block_until_ready(fwd(x, params))
    ref = jax.block_until_ready(reference(x, params))

    assert out.shape == (N, Cin, H, W)
    err = float(jnp.max(jnp.abs(out - ref)))
    assert jnp.allclose(out, ref, rtol=2e-3, atol=2e-3), err
    print("KERNEL_OK")
</pallas_src>

<mosaic_0001>
module attributes {stable_mosaic.version = 11 : i64} {
  func.func @conv1_kernel(%arg0: i32, %arg1: memref<256x4xf32, #tpu.memory_space<vmem>>, %arg2: memref<4x8xbf16, #tpu.memory_space<vmem>>, %arg3: memref<256x8xf32, #tpu.memory_space<vmem>>, %arg4: memref<1x2x8xf32, #tpu.memory_space<vmem>>) attributes {dimension_semantics = [#tpu.dimension_semantics<parallel>], iteration_bounds = array<i64: 2>, scalar_prefetch = 0 : i64, scratch_operands = 0 : i64, tpu.core_type = #tpu.core_type<tc>, window_params = [{transform_indices = @transform_0, window_bounds = array<i64: 256, 4>}, {pipeline_mode = #tpu.pipeline_mode<synchronous>, transform_indices = @transform_1, window_bounds = array<i64: 4, 8>}, {transform_indices = @transform_2, window_bounds = array<i64: 256, 8>}, {transform_indices = @transform_3, window_bounds = array<i64: 1, 2, 8>}]} {
    %c0 = arith.constant 0 : index
    %c0_0 = arith.constant 0 : index
    %0 = vector.load %arg1[%c0, %c0_0] : memref<256x4xf32, #tpu.memory_space<vmem>>, vector<256x4xf32>
    %1 = arith.truncf %0 : vector<256x4xf32> to vector<256x4xbf16>
    %c0_1 = arith.constant 0 : index
    %c0_2 = arith.constant 0 : index
    %2 = vector.load %arg2[%c0_1, %c0_2] : memref<4x8xbf16, #tpu.memory_space<vmem>>, vector<4x8xbf16>
    %cst = arith.constant dense<0.000000e+00> : vector<256x8xf32>
    %3 = tpu.matmul %1, %2, %cst {dimension_numbers = #tpu.dot_dimension_numbers<[1], [0], [0], [1], [0, 0, 1, 1], [], []>} : vector<256x4xbf16>, vector<4x8xbf16>, vector<256x8xf32> -> vector<256x8xf32>
    %c0_3 = arith.constant 0 : index
    %c0_4 = arith.constant 0 : index
    %4 = vector.load %arg3[%c0_3, %c0_4] : memref<256x8xf32, #tpu.memory_space<vmem>>, vector<256x8xf32>
    tpu.vector_store %arg3[%c0_3, %c0_4], %3 {strides = array<i32>} : memref<256x8xf32, #tpu.memory_space<vmem>>, vector<256x8xf32>,
    %cst_5 = arith.constant dense<0.000000e+00> : vector<8xf32>
    %5 = vector.multi_reduction <add>, %3, %cst_5 [0] : vector<256x8xf32> to vector<8xf32>
    %6 = vector.shape_cast %5 : vector<8xf32> to vector<1x8xf32>
    %7 = vector.shape_cast %6 : vector<1x8xf32> to vector<1x1x8xf32>
    %c0_6 = arith.constant 0 : index
    %c0_7 = arith.constant 0 : index
    %c0_8 = arith.constant 0 : index
    %8 = vector.load %arg4[%c0_6, %c0_7, %c0_8] : memref<1x2x8xf32, #tpu.memory_space<vmem>>, vector<1x1x8xf32>
    tpu.vector_store %arg4[%c0_6, %c0_7, %c0_8], %7 {strides = array<i32>} : memref<1x2x8xf32, #tpu.memory_space<vmem>>, vector<1x1x8xf32>,
    %9 = arith.mulf %3, %3 : vector<256x8xf32>
    %cst_9 = arith.constant dense<0.000000e+00> : vector<8xf32>
    %10 = vector.multi_reduction <add>, %9, %cst_9 [0] : vector<256x8xf32> to vector<8xf32>
    %11 = vector.shape_cast %10 : vector<8xf32> to vector<1x8xf32>
    %12 = vector.shape_cast %11 : vector<1x8xf32> to vector<1x1x8xf32>
    %c0_10 = arith.constant 0 : index
    %c1 = arith.constant 1 : index
    %c0_11 = arith.constant 0 : index
    %13 = vector.load %arg4[%c0_10, %c1, %c0_11] : memref<1x2x8xf32, #tpu.memory_space<vmem>>, vector<1x1x8xf32>
    tpu.vector_store %arg4[%c0_10, %c1, %c0_11], %12 {strides = array<i32>} : memref<1x2x8xf32, #tpu.memory_space<vmem>>, vector<1x1x8xf32>,
    return
  }
  func.func @transform_0(%arg0: i32) -> (i32, i32) {
    %c0_i32 = arith.constant 0 : i32
    %c0_i32_0 = arith.constant 0 : i32
    return %arg0, %c0_i32 : i32, i32
  }
  func.func @transform_1(%arg0: i32) -> (i32, i32) {
    %c0_i32 = arith.constant 0 : i32
    %c0_i32_0 = arith.constant 0 : i32
    %c0_i32_1 = arith.constant 0 : i32
    return %c0_i32, %c0_i32_0 : i32, i32
  }
  func.func @transform_2(%arg0: i32) -> (i32, i32) {
    %c0_i32 = arith.constant 0 : i32
    %c0_i32_0 = arith.constant 0 : i32
    return %arg0, %c0_i32 : i32, i32
  }
  func.func @transform_3(%arg0: i32) -> (i32, i32, i32) {
    %c0_i32 = arith.constant 0 : i32
    %c0_i32_0 = arith.constant 0 : i32
    %c0_i32_1 = arith.constant 0 : i32
    return %arg0, %c0_i32, %c0_i32_0 : i32, i32, i32
  }
}

module attributes {stable_mosaic.version = 11 : i64} {
  func.func @conv3_kernel(%arg0: i32, %arg1: memref<256x8xf32, #tpu.memory_space<vmem>>, %arg2: memref<8x4xbf16, #tpu.memory_space<vmem>>, %arg3: memref<2x8xf32, #tpu.memory_space<vmem>>, %arg4: memref<256x4xf32, #tpu.memory_space<vmem>>, %arg5: memref<1x2x4xf32, #tpu.memory_space<vmem>>) attributes {dimension_semantics = [#tpu.dimension_semantics<parallel>], iteration_bounds = array<i64: 2>, scalar_prefetch = 0 : i64, scratch_operands = 0 : i64, tpu.core_type = #tpu.core_type<tc>, window_params = [{transform_indices = @transform_0, window_bounds = array<i64: 256, 8>}, {pipeline_mode = #tpu.pipeline_mode<synchronous>, transform_indices = @transform_1, window_bounds = array<i64: 8, 4>}, {pipeline_mode = #tpu.pipeline_mode<synchronous>, transform_indices = @transform_2, window_bounds = array<i64: 2, 8>}, {transform_indices = @transform_3, window_bounds = array<i64: 256, 4>}, {transform_indices = @transform_4, window_bounds = array<i64: 1, 2, 4>}]} {
    %c0 = arith.constant 0 : index
    %c0_0 = arith.constant 0 : index
    %0 = vector.load %arg3[%c0, %c0_0] : memref<2x8xf32, #tpu.memory_space<vmem>>, vector<1x8xf32>
    %c1 = arith.constant 1 : index
    %c0_1 = arith.constant 0 : index
    %1 = vector.load %arg3[%c1, %c0_1] : memref<2x8xf32, #tpu.memory_space<vmem>>, vector<1x8xf32>
    %c0_2 = arith.constant 0 : index
    %c0_3 = arith.constant 0 : index
    %2 = vector.load %arg1[%c0_2, %c0_3] : memref<256x8xf32, #tpu.memory_space<vmem>>, vector<256x8xf32>
    %3 = vector.broadcast %0 : vector<1x8xf32> to vector<256x8xf32>
    %4 = arith.mulf %2, %3 : vector<256x8xf32>
    %5 = vector.broadcast %1 : vector<1x8xf32> to vector<256x8xf32>
    %6 = arith.addf %4, %5 : vector<256x8xf32>
    %cst = arith.constant 0.000000e+00 : f32
    %7 = vector.broadcast %cst : f32 to vector<256x8xf32>
    %8 = arith.maximumf %6, %7 : vector<256x8xf32>
    %9 = arith.truncf %8 : vector<256x8xf32> to vector<256x8xbf16>
    %c0_4 = arith.constant 0 : index
    %c0_5 = arith.constant 0 : index
    %10 = vector.load %arg2[%c0_4, %c0_5] : memref<8x4xbf16, #tpu.memory_space<vmem>>, vector<8x4xbf16>
    %cst_6 = arith.constant dense<0.000000e+00> : vector<256x4xf32>
    %11 = tpu.matmul %9, %10, %cst_6 {dimension_numbers = #tpu.dot_dimension_numbers<[1], [0], [0], [1], [0, 0, 1, 1], [], []>} : vector<256x8xbf16>, vector<8x4xbf16>, vector<256x4xf32> -> vector<256x4xf32>
    %c0_7 = arith.constant 0 : index
    %c0_8 = arith.constant 0 : index
    %12 = vector.load %arg4[%c0_7, %c0_8] : memref<256x4xf32, #tpu.memory_space<vmem>>, vector<256x4xf32>
    tpu.vector_store %arg4[%c0_7, %c0_8], %11 {strides = array<i32>} : memref<256x4xf32, #tpu.memory_space<vmem>>, vector<256x4xf32>,
    %cst_9 = arith.constant dense<0.000000e+00> : vector<4xf32>
    %13 = vector.multi_reduction <add>, %11, %cst_9 [0] : vector<256x4xf32> to vector<4xf32>
    %14 = vector.shape_cast %13 : vector<4xf32> to vector<1x4xf32>
    %15 = vector.shape_cast %14 : vector<1x4xf32> to vector<1x1x4xf32>
    %c0_10 = arith.constant 0 : index
    %c0_11 = arith.constant 0 : index
    %c0_12 = arith.constant 0 : index
    %16 = vector.load %arg5[%c0_10, %c0_11, %c0_12] : memref<1x2x4xf32, #tpu.memory_space<vmem>>, vector<1x1x4xf32>
    tpu.vector_store %arg5[%c0_10, %c0_11, %c0_12], %15 {strides = array<i32>} : memref<1x2x4xf32, #tpu.memory_space<vmem>>, vector<1x1x4xf32>,
    %17 = arith.mulf %11, %11 : vector<256x4xf32>
    %cst_13 = arith.constant dense<0.000000e+00> : vector<4xf32>
    %18 = vector.multi_reduction <add>, %17, %cst_13 [0] : vector<256x4xf32> to vector<4xf32>
    %19 = vector.shape_cast %18 : vector<4xf32> to vector<1x4xf32>
    %20 = vector.shape_cast %19 : vector<1x4xf32> to vector<1x1x4xf32>
    %c0_14 = arith.constant 0 : index
    %c1_15 = arith.constant 1 : index
    %c0_16 = arith.constant 0 : index
    %21 = vector.load %arg5[%c0_14, %c1_15, %c0_16] : memref<1x2x4xf32, #tpu.memory_space<vmem>>, vector<1x1x4xf32>
    tpu.vector_store %arg5[%c0_14, %c1_15, %c0_16], %20 {strides = array<i32>} : memref<1x2x4xf32, #tpu.memory_space<vmem>>, vector<1x1x4xf32>,
    return
  }
  func.func @transform_0(%arg0: i32) -> (i32, i32) {
    %c0_i32 = arith.constant 0 : i32
    %c0_i32_0 = arith.constant 0 : i32
    return %arg0, %c0_i32 : i32, i32
  }
  func.func @transform_1(%arg0: i32) -> (i32, i32) {
    %c0_i32 = arith.constant 0 : i32
    %c0_i32_0 = arith.constant 0 : i32
    %c0_i32_1 = arith.constant 0 : i32
    return %c0_i32, %c0_i32_0 : i32, i32
  }
  func.func @transform_2(%arg0: i32) -> (i32, i32) {
    %c0_i32 = arith.constant 0 : i32
    %c0_i32_0 = arith.constant 0 : i32
    %c0_i32_1 = arith.constant 0 : i32
    return %c0_i32, %c0_i32_0 : i32, i32
  }
  func.func @transform_3(%arg0: i32) -> (i32, i32) {
    %c0_i32 = arith.constant 0 : i32
    %c0_i32_0 = arith.constant 0 : i32
    return %arg0, %c0_i32 : i32, i32
  }
  func.func @transform_4(%arg0: i32) -> (i32, i32, i32) {
    %c0_i32 = arith.constant 0 : i32
    %c0_i32_0 = arith.constant 0 : i32
    %c0_i32_1 = arith.constant 0 : i32
    return %arg0, %c0_i32, %c0_i32_0 : i32, i32, i32
  }
}

module attributes {stable_mosaic.version = 11 : i64} {
  func.func @conv2_kernel(%arg0: i32, %arg1: memref<256x8xf32, #tpu.memory_space<vmem>>, %arg2: memref<9x8x8xbf16, #tpu.memory_space<vmem>>, %arg3: memref<2x8xf32, #tpu.memory_space<vmem>>, %arg4: memref<256x9xf32, #tpu.memory_space<vmem>>, %arg5: memref<256x8xf32, #tpu.memory_space<vmem>>, %arg6: memref<1x2x8xf32, #tpu.memory_space<vmem>>) attributes {dimension_semantics = [#tpu.dimension_semantics<parallel>], iteration_bounds = array<i64: 2>, scalar_prefetch = 0 : i64, scratch_operands = 0 : i64, tpu.core_type = #tpu.core_type<tc>, window_params = [{transform_indices = @transform_0, window_bounds = array<i64: 256, 8>}, {pipeline_mode = #tpu.pipeline_mode<synchronous>, transform_indices = @transform_1, window_bounds = array<i64: 9, 8, 8>}, {pipeline_mode = #tpu.pipeline_mode<synchronous>, transform_indices = @transform_2, window_bounds = array<i64: 2, 8>}, {pipeline_mode = #tpu.pipeline_mode<synchronous>, transform_indices = @transform_3, window_bounds = array<i64: 256, 9>}, {transform_indices = @transform_4, window_bounds = array<i64: 256, 8>}, {transform_indices = @transform_5, window_bounds = array<i64: 1, 2, 8>}]} {
    %c0 = arith.constant 0 : index
    %c0_0 = arith.constant 0 : index
    %0 = vector.load %arg3[%c0, %c0_0] : memref<2x8xf32, #tpu.memory_space<vmem>>, vector<1x8xf32>
    %c1 = arith.constant 1 : index
    %c0_1 = arith.constant 0 : index
    %1 = vector.load %arg3[%c1, %c0_1] : memref<2x8xf32, #tpu.memory_space<vmem>>, vector<1x8xf32>
    %c0_2 = arith.constant 0 : index
    %c0_3 = arith.constant 0 : index
    %2 = vector.load %arg1[%c0_2, %c0_3] : memref<256x8xf32, #tpu.memory_space<vmem>>, vector<256x8xf32>
    %3 = vector.broadcast %0 : vector<1x8xf32> to vector<256x8xf32>
    %4 = arith.mulf %2, %3 : vector<256x8xf32>
    %5 = vector.broadcast %1 : vector<1x8xf32> to vector<256x8xf32>
    %6 = arith.addf %4, %5 : vector<256x8xf32>
    %cst = arith.constant 0.000000e+00 : f32
    %7 = vector.broadcast %cst : f32 to vector<256x8xf32>
    %8 = arith.maximumf %6, %7 : vector<256x8xf32>
    %c0_4 = arith.constant 0 : index
    %c0_5 = arith.constant 0 : index
    %9 = vector.load %arg4[%c0_4, %c0_5] : memref<256x9xf32, #tpu.memory_space<vmem>>, vector<256x9xf32>
    %cst_6 = arith.constant 0.000000e+00 : f32
    %10 = vector.broadcast %cst_6 : f32 to vector<256x8xf32>
    %c17_i32 = arith.constant 17 : i32
    %11 = tpu.dynamic_rotate %8 by %c17_i32 dim 0 : vector<256x8xf32>, i32 -> vector<256x8xf32>
    %12 = arith.truncf %11 : vector<256x8xf32> to vector<256x8xbf16>
    %c0_7 = arith.constant 0 : index
    %c0_8 = arith.constant 0 : index
    %c0_9 = arith.constant 0 : index
    %13 = vector.load %arg2[%c0_7, %c0_8, %c0_9] : memref<9x8x8xbf16, #tpu.memory_space<vmem>>, vector<1x8x8xbf16>
    %14 = vector.shape_cast %13 : vector<1x8x8xbf16> to vector<8x8xbf16>
    %cst_10 = arith.constant dense<0.000000e+00> : vector<256x8xf32>
    %15 = tpu.matmul %12, %14, %cst_10 {dimension_numbers = #tpu.dot_dimension_numbers<[1], [0], [0], [1], [0, 0, 1, 1], [], []>} : vector<256x8xbf16>, vector<8x8xbf16>, vector<256x8xf32> -> vector<256x8xf32>
    %16 = vector.extract_strided_slice %9 {offsets = [0, 0], sizes = [256, 1], strides = [1, 1]} : vector<256x9xf32> to vector<256x1xf32>
    %17 = vector.broadcast %16 : vector<256x1xf32> to vector<256x8xf32>
    %18 = arith.mulf %15, %17 : vector<256x8xf32>
    %19 = arith.addf %10, %18 : vector<256x8xf32>
    %c16_i32 = arith.constant 16 : i32
    %20 = tpu.dynamic_rotate %8 by %c16_i32 dim 0 : vector<256x8xf32>, i32 -> vector<256x8xf32>
    %21 = arith.truncf %20 : vector<256x8xf32> to vector<256x8xbf16>
    %c1_11 = arith.constant 1 : index
    %c0_12 = arith.constant 0 : index
    %c0_13 = arith.constant 0 : index
    %22 = vector.load %arg2[%c1_11, %c0_12, %c0_13] : memref<9x8x8xbf16, #tpu.memory_space<vmem>>, vector<1x8x8xbf16>
    %23 = vector.shape_cast %22 : vector<1x8x8xbf16> to vector<8x8xbf16>
    %cst_14 = arith.constant dense<0.000000e+00> : vector<256x8xf32>
    %24 = tpu.matmul %21, %23, %cst_14 {dimension_numbers = #tpu.dot_dimension_numbers<[1], [0], [0], [1], [0, 0, 1, 1], [], []>} : vector<256x8xbf16>, vector<8x8xbf16>, vector<256x8xf32> -> vector<256x8xf32>
    %25 = vector.extract_strided_slice %9 {offsets = [0, 1], sizes = [256, 1], strides = [1, 1]} : vector<256x9xf32> to vector<256x1xf32>
    %26 = vector.broadcast %25 : vector<256x1xf32> to vector<256x8xf32>
    %27 = arith.mulf %24, %26 : vector<256x8xf32>
    %28 = arith.addf %19, %27 : vector<256x8xf32>
    %c15_i32 = arith.constant 15 : i32
    %29 = tpu.dynamic_rotate %8 by %c15_i32 dim 0 : vector<256x8xf32>, i32 -> vector<256x8xf32>
    %30 = arith.truncf %29 : vector<256x8xf32> to vector<256x8xbf16>
    %c2 = arith.constant 2 : index
    %c0_15 = arith.constant 0 : index
    %c0_16 = arith.constant 0 : index
    %31 = vector.load %arg2[%c2, %c0_15, %c0_16] : memref<9x8x8xbf16, #tpu.memory_space<vmem>>, vector<1x8x8xbf16>
    %32 = vector.shape_cast %31 : vector<1x8x8xbf16> to vector<8x8xbf16>
    %cst_17 = arith.constant dense<0.000000e+00> : vector<256x8xf32>
    %33 = tpu.matmul %30, %32, %cst_17 {dimension_numbers = #tpu.dot_dimension_numbers<[1], [0], [0], [1], [0, 0, 1, 1], [], []>} : vector<256x8xbf16>, vector<8x8xbf16>, vector<256x8xf32> -> vector<256x8xf32>
    %34 = vector.extract_strided_slice %9 {offsets = [0, 2], sizes = [256, 1], strides = [1, 1]} : vector<256x9xf32> to vector<256x1xf32>
    %35 = vector.broadcast %34 : vector<256x1xf32> to vector<256x8xf32>
    %36 = arith.mulf %33, %35 : vector<256x8xf32>
    %37 = arith.addf %28, %36 : vector<256x8xf32>
    %c1_i32 = arith.constant 1 : i32
    %38 = tpu.dynamic_rotate %8 by %c1_i32 dim 0 : vector<256x8xf32>, i32 -> vector<256x8xf32>
    %39 = arith.truncf %38 : vector<256x8xf32> to vector<256x8xbf16>
    %c3 = arith.constant 3 : index
    %c0_18 = arith.constant 0 : index
    %c0_19 = arith.constant 0 : index
    %40 = vector.load %arg2[%c3, %c0_18, %c0_19] : memref<9x8x8xbf16, #tpu.memory_space<vmem>>, vector<1x8x8xbf16>
    %41 = vector.shape_cast %40 : vector<1x8x8xbf16> to vector<8x8xbf16>
    %cst_20 = arith.constant dense<0.000000e+00> : vector<256x8xf32>
    %42 = tpu.matmul %39, %41, %cst_20 {dimension_numbers = #tpu.dot_dimension_numbers<[1], [0], [0], [1], [0, 0, 1, 1], [], []>} : vector<256x8xbf16>, vector<8x8xbf16>, vector<256x8xf32> -> vector<256x8xf32>
    %43 = vector.extract_strided_slice %9 {offsets = [0, 3], sizes = [256, 1], strides = [1, 1]} : vector<256x9xf32> to vector<256x1xf32>
    %44 = vector.broadcast %43 : vector<256x1xf32> to vector<256x8xf32>
    %45 = arith.mulf %42, %44 : vector<256x8xf32>
    %46 = arith.addf %37, %45 : vector<256x8xf32>
    %47 = arith.truncf %8 : vector<256x8xf32> to vector<256x8xbf16>
    %c4 = arith.constant 4 : index
    %c0_21 = arith.constant 0 : index
    %c0_22 = arith.constant 0 : index
    %48 = vector.load %arg2[%c4, %c0_21, %c0_22] : memref<9x8x8xbf16, #tpu.memory_space<vmem>>, vector<1x8x8xbf16>
    %49 = vector.shape_cast %48 : vector<1x8x8xbf16> to vector<8x8xbf16>
    %cst_23 = arith.constant dense<0.000000e+00> : vector<256x8xf32>
    %50 = tpu.matmul %47, %49, %cst_23 {dimension_numbers = #tpu.dot_dimension_numbers<[1], [0], [0], [1], [0, 0, 1, 1], [], []>} : vector<256x8xbf16>, vector<8x8xbf16>, vector<256x8xf32> -> vector<256x8xf32>
    %51 = arith.addf %46, %50 : vector<256x8xf32>
    %c255_i32 = arith.constant 255 : i32
    %52 = tpu.dynamic_rotate %8 by %c255_i32 dim 0 : vector<256x8xf32>, i32 -> vector<256x8xf32>
    %53 = arith.truncf %52 : vector<256x8xf32> to vector<256x8xbf16>
    %c5 = arith.constant 5 : index
    %c0_24 = arith.constant 0 : index
    %c0_25 = arith.constant 0 : index
    %54 = vector.load %arg2[%c5, %c0_24, %c0_25] : memref<9x8x8xbf16, #tpu.memory_space<vmem>>, vector<1x8x8xbf16>
    %55 = vector.shape_cast %54 : vector<1x8x8xbf16> to vector<8x8xbf16>
    %cst_26 = arith.constant dense<0.000000e+00> : vector<256x8xf32>
    %56 = tpu.matmul %53, %55, %cst_26 {dimension_numbers = #tpu.dot_dimension_numbers<[1], [0], [0], [1], [0, 0, 1, 1], [], []>} : vector<256x8xbf16>, vector<8x8xbf16>, vector<256x8xf32> -> vector<256x8xf32>
    %57 = vector.extract_strided_slice %9 {offsets = [0, 5], sizes = [256, 1], strides = [1, 1]} : vector<256x9xf32> to vector<256x1xf32>
    %58 = vector.broadcast %57 : vector<256x1xf32> to vector<256x8xf32>
    %59 = arith.mulf %56, %58 : vector<256x8xf32>
    %60 = arith.addf %51, %59 : vector<256x8xf32>
    %c241_i32 = arith.constant 241 : i32
    %61 = tpu.dynamic_rotate %8 by %c241_i32 dim 0 : vector<256x8xf32>, i32 -> vector<256x8xf32>
    %62 = arith.truncf %61 : vector<256x8xf32> to vector<256x8xbf16>
    %c6 = arith.constant 6 : index
    %c0_27 = arith.constant 0 : index
    %c0_28 = arith.constant 0 : index
    %63 = vector.load %arg2[%c6, %c0_27, %c0_28] : memref<9x8x8xbf16, #tpu.memory_space<vmem>>, vector<1x8x8xbf16>
    %64 = vector.shape_cast %63 : vector<1x8x8xbf16> to vector<8x8xbf16>
    %cst_29 = arith.constant dense<0.000000e+00> : vector<256x8xf32>
    %65 = tpu.matmul %62, %64, %cst_29 {dimension_numbers = #tpu.dot_dimension_numbers<[1], [0], [0], [1], [0, 0, 1, 1], [], []>} : vector<256x8xbf16>, vector<8x8xbf16>, vector<256x8xf32> -> vector<256x8xf32>
    %66 = vector.extract_strided_slice %9 {offsets = [0, 6], sizes = [256, 1], strides = [1, 1]} : vector<256x9xf32> to vector<256x1xf32>
    %67 = vector.broadcast %66 : vector<256x1xf32> to vector<256x8xf32>
    %68 = arith.mulf %65, %67 : vector<256x8xf32>
    %69 = arith.addf %60, %68 : vector<256x8xf32>
    %c240_i32 = arith.constant 240 : i32
    %70 = tpu.dynamic_rotate %8 by %c240_i32 dim 0 : vector<256x8xf32>, i32 -> vector<256x8xf32>
    %71 = arith.truncf %70 : vector<256x8xf32> to vector<256x8xbf16>
    %c7 = arith.constant 7 : index
    %c0_30 = arith.constant 0 : index
    %c0_31 = arith.constant 0 : index
    %72 = vector.load %arg2[%c7, %c0_30, %c0_31] : memref<9x8x8xbf16, #tpu.memory_space<vmem>>, vector<1x8x8xbf16>
    %73 = vector.shape_cast %72 : vector<1x8x8xbf16> to vector<8x8xbf16>
    %cst_32 = arith.constant dense<0.000000e+00> : vector<256x8xf32>
    %74 = tpu.matmul %71, %73, %cst_32 {dimension_numbers = #tpu.dot_dimension_numbers<[1], [0], [0], [1], [0, 0, 1, 1], [], []>} : vector<256x8xbf16>, vector<8x8xbf16>, vector<256x8xf32> -> vector<256x8xf32>
    %75 = vector.extract_strided_slice %9 {offsets = [0, 7], sizes = [256, 1], strides = [1, 1]} : vector<256x9xf32> to vector<256x1xf32>
    %76 = vector.broadcast %75 : vector<256x1xf32> to vector<256x8xf32>
    %77 = arith.mulf %74, %76 : vector<256x8xf32>
    %78 = arith.addf %69, %77 : vector<256x8xf32>
    %c239_i32 = arith.constant 239 : i32
    %79 = tpu.dynamic_rotate %8 by %c239_i32 dim 0 : vector<256x8xf32>, i32 -> vector<256x8xf32>
    %80 = arith.truncf %79 : vector<256x8xf32> to vector<256x8xbf16>
    %c8 = arith.constant 8 : index
    %c0_33 = arith.constant 0 : index
    %c0_34 = arith.constant 0 : index
    %81 = vector.load %arg2[%c8, %c0_33, %c0_34] : memref<9x8x8xbf16, #tpu.memory_space<vmem>>, vector<1x8x8xbf16>
    %82 = vector.shape_cast %81 : vector<1x8x8xbf16> to vector<8x8xbf16>
    %cst_35 = arith.constant dense<0.000000e+00> : vector<256x8xf32>
    %83 = tpu.matmul %80, %82, %cst_35 {dimension_numbers = #tpu.dot_dimension_numbers<[1], [0], [0], [1], [0, 0, 1, 1], [], []>} : vector<256x8xbf16>, vector<8x8xbf16>, vector<256x8xf32> -> vector<256x8xf32>
    %84 = vector.extract_strided_slice %9 {offsets = [0, 8], sizes = [256, 1], strides = [1, 1]} : vector<256x9xf32> to vector<256x1xf32>
    %85 = vector.broadcast %84 : vector<256x1xf32> to vector<256x8xf32>
    %86 = arith.mulf %83, %85 : vector<256x8xf32>
    %87 = arith.addf %78, %86 : vector<256x8xf32>
    %c0_36 = arith.constant 0 : index
    %c0_37 = arith.constant 0 : index
    %88 = vector.load %arg5[%c0_36, %c0_37] : memref<256x8xf32, #tpu.memory_space<vmem>>, vector<256x8xf32>
    tpu.vector_store %arg5[%c0_36, %c0_37], %87 {strides = array<i32>} : memref<256x8xf32, #tpu.memory_space<vmem>>, vector<256x8xf32>,
    %cst_38 = arith.constant dense<0.000000e+00> : vector<8xf32>
    %89 = vector.multi_reduction <add>, %87, %cst_38 [0] : vector<256x8xf32> to vector<8xf32>
    %90 = vector.shape_cast %89 : vector<8xf32> to vector<1x8xf32>
    %91 = vector.shape_cast %90 : vector<1x8xf32> to vector<1x1x8xf32>
    %c0_39 = arith.constant 0 : index
    %c0_40 = arith.constant 0 : index
    %c0_41 = arith.constant 0 : index
    %92 = vector.load %arg6[%c0_39, %c0_40, %c0_41] : memref<1x2x8xf32, #tpu.memory_space<vmem>>, vector<1x1x8xf32>
    tpu.vector_store %arg6[%c0_39, %c0_40, %c0_41], %91 {strides = array<i32>} : memref<1x2x8xf32, #tpu.memory_space<vmem>>, vector<1x1x8xf32>,
    %93 = arith.mulf %87, %87 : vector<256x8xf32>
    %cst_42 = arith.constant dense<0.000000e+00> : vector<8xf32>
    %94 = vector.multi_reduction <add>, %93, %cst_42 [0] : vector<256x8xf32> to vector<8xf32>
    %95 = vector.shape_cast %94 : vector<8xf32> to vector<1x8xf32>
    %96 = vector.shape_cast %95 : vector<1x8xf32> to vector<1x1x8xf32>
    %c0_43 = arith.constant 0 : index
    %c1_44 = arith.constant 1 : index
    %c0_45 = arith.constant 0 : index
    %97 = vector.load %arg6[%c0_43, %c1_44, %c0_45] : memref<1x2x8xf32, #tpu.memory_space<vmem>>, vector<1x1x8xf32>
    tpu.vector_store %arg6[%c0_43, %c1_44, %c0_45], %96 {strides = array<i32>} : memref<1x2x8xf32, #tpu.memory_space<vmem>>, vector<1x1x8xf32>,
    return
  }
  func.func @transform_0(%arg0: i32) -> (i32, i32) {
    %c0_i32 = arith.constant 0 : i32
    %c0_i32_0 = arith.constant 0 : i32
    return %arg0, %c0_i32 : i32, i32
  }
  func.func @transform_1(%arg0: i32) -> (i32, i32, i32) {
    %c0_i32 = arith.constant 0 : i32
    %c0_i32_0 = arith.constant 0 : i32
    %c0_i32_1 = arith.constant 0 : i32
    %c0_i32_2 = arith.constant 0 : i32
    return %c0_i32, %c0_i32_0, %c0_i32_1 : i32, i32, i32
  }
  func.func @transform_2(%arg0: i32) -> (i32, i32) {
    %c0_i32 = arith.constant 0 : i32
    %c0_i32_0 = arith.constant 0 : i32
    %c0_i32_1 = arith.constant 0 : i32
    return %c0_i32, %c0_i32_0 : i32, i32
  }
  func.func @transform_3(%arg0: i32) -> (i32, i32) {
    %c0_i32 = arith.constant 0 : i32
    %c0_i32_0 = arith.constant 0 : i32
    %c0_i32_1 = arith.constant 0 : i32
    return %c0_i32, %c0_i32_0 : i32, i32
  }
  func.func @transform_4(%arg0: i32) -> (i32, i32) {
    %c0_i32 = arith.constant 0 : i32
    %c0_i32_0 = arith.constant 0 : i32
    return %arg0, %c0_i32 : i32, i32
  }
  func.func @transform_5(%arg0: i32) -> (i32, i32, i32) {
    %c0_i32 = arith.constant 0 : i32
    %c0_i32_0 = arith.constant 0 : i32
    %c0_i32_1 = arith.constant 0 : i32
    return %arg0, %c0_i32, %c0_i32_0 : i32, i32, i32
  }
}

module attributes {stable_mosaic.version = 11 : i64} {
  func.func @bn_residual_kernel(%arg0: i32, %arg1: memref<256x4xf32, #tpu.memory_space<vmem>>, %arg2: memref<256x4xf32, #tpu.memory_space<vmem>>, %arg3: memref<2x4xf32, #tpu.memory_space<vmem>>, %arg4: memref<256x4xf32, #tpu.memory_space<vmem>>) attributes {dimension_semantics = [#tpu.dimension_semantics<parallel>], iteration_bounds = array<i64: 2>, scalar_prefetch = 0 : i64, scratch_operands = 0 : i64, tpu.core_type = #tpu.core_type<tc>, window_params = [{transform_indices = @transform_0, window_bounds = array<i64: 256, 4>}, {transform_indices = @transform_1, window_bounds = array<i64: 256, 4>}, {pipeline_mode = #tpu.pipeline_mode<synchronous>, transform_indices = @transform_2, window_bounds = array<i64: 2, 4>}, {transform_indices = @transform_3, window_bounds = array<i64: 256, 4>}]} {
    %c0 = arith.constant 0 : index
    %c0_0 = arith.constant 0 : index
    %0 = vector.load %arg3[%c0, %c0_0] : memref<2x4xf32, #tpu.memory_space<vmem>>, vector<1x4xf32>
    %c1 = arith.constant 1 : index
    %c0_1 = arith.constant 0 : index
    %1 = vector.load %arg3[%c1, %c0_1] : memref<2x4xf32, #tpu.memory_space<vmem>>, vector<1x4xf32>
    %c0_2 = arith.constant 0 : index
    %c0_3 = arith.constant 0 : index
    %2 = vector.load %arg1[%c0_2, %c0_3] : memref<256x4xf32, #tpu.memory_space<vmem>>, vector<256x4xf32>
    %3 = vector.broadcast %0 : vector<1x4xf32> to vector<256x4xf32>
    %4 = arith.mulf %2, %3 : vector<256x4xf32>
    %5 = vector.broadcast %1 : vector<1x4xf32> to vector<256x4xf32>
    %6 = arith.addf %4, %5 : vector<256x4xf32>
    %c0_4 = arith.constant 0 : index
    %c0_5 = arith.constant 0 : index
    %7 = vector.load %arg2[%c0_4, %c0_5] : memref<256x4xf32, #tpu.memory_space<vmem>>, vector<256x4xf32>
    %8 = arith.addf %6, %7 : vector<256x4xf32>
    %cst = arith.constant 0.000000e+00 : f32
    %9 = vector.broadcast %cst : f32 to vector<256x4xf32>
    %10 = arith.maximumf %8, %9 : vector<256x4xf32>
    %c0_6 = arith.constant 0 : index
    %c0_7 = arith.constant 0 : index
    %11 = vector.load %arg4[%c0_6, %c0_7] : memref<256x4xf32, #tpu.memory_space<vmem>>, vector<256x4xf32>
    tpu.vector_store %arg4[%c0_6, %c0_7], %10 {strides = array<i32>} : memref<256x4xf32, #tpu.memory_space<vmem>>, vector<256x4xf32>,
    return
  }
  func.func @transform_0(%arg0: i32) -> (i32, i32) {
    %c0_i32 = arith.constant 0 : i32
    %c0_i32_0 = arith.constant 0 : i32
    return %arg0, %c0_i32 : i32, i32
  }
  func.func @transform_1(%arg0: i32) -> (i32, i32) {
    %c0_i32 = arith.constant 0 : i32
    %c0_i32_0 = arith.constant 0 : i32
    return %arg0, %c0_i32 : i32, i32
  }
  func.func @transform_2(%arg0: i32) -> (i32, i32) {
    %c0_i32 = arith.constant 0 : i32
    %c0_i32_0 = arith.constant 0 : i32
    %c0_i32_1 = arith.constant 0 : i32
    return %c0_i32, %c0_i32_0 : i32, i32
  }
  func.func @transform_3(%arg0: i32) -> (i32, i32) {
    %c0_i32 = arith.constant 0 : i32
    %c0_i32_0 = arith.constant 0 : i32
    return %arg0, %c0_i32 : i32, i32
  }
}

</mosaic_0001>

<llo_original>
// kernel: bottleneck_block.4
$region0: #{bottleneck_block.4}
  #allocation0 [shape = 'u32[]', space=smem, size = 0x4, offset = 0x4, fixed_abs, tag = 'smem constant byte address 0x4 - core index']
  #allocation1 [shape = 'u32[72,128]{1,0:T(1,128)}', space=vmem, size = 0x9000, scoped, tag = 'internal scratch']
  %s0 = inlined_call_operand.vmem [shape: f32[512,4], index: 0, kind: input, shape index: {}]
  %s1 = inlined_call_operand.vmem [shape: bf16[4,8], index: 1, kind: input, shape index: {}]
  %s2 = inlined_call_operand.vmem [shape: f32[512,8], index: 2, kind: output, shape index: {0}]
  %s3 = inlined_call_operand.vmem [shape: f32[2,2,8], index: 3, kind: output, shape index: {1}]
  %4 = xla_tuple %s2, %s3
  %s5 = sld [smem:[#allocation0]]
  $region49: #{bottleneck_block.4} parent=0
    _
  %s7 = ssub.s32 1, %s5
  %s8 = scalar_select 0, %s7, %s5
  loop: start=0, step=1, limit=4
  $region2: #{bottleneck_block.4} parent=0 // loop_pre_header
    _
  $region3: #{bottleneck_block.4} parent=0 // loop_header
    %s10 = sphi 0, %s14
    %p11 = scmp.ge.s32.totalorder %s10, 4
    %s20 = sphi 0, %s22
    %s23 = sphi 0, %s20
    %s24 = sphi 0, %s23
    %s40 = sphi 0, %s24
    %s44 = sphi 0, %s44
    %s46 = sphi 0, %s44
    %s47 = sphi 0, %s46
    %s61 = sphi 0, %s47
    %s67 = sphi 0, %s69
    %s70 = sphi 0, %s67
    %s71 = sphi 0, %s70
    %s87 = sphi 0, %s71
    %s93 = sphi 0, %s95
    %s96 = sphi 0, %s93
    %s97 = sphi 0, %s96
    %s113 = sphi 0, %s97
  $region4: #{bottleneck_block.4} parent=0 // loop_header_branch
    %13 = sbr.rel (%p11) target = $region8
  $region5: #{bottleneck_block.4} parent=0 // loop_body
    %s15 = ssub.s32 %s10, 1
    %s16 = ssub.s32 %s10, 2
    %s17 = sadd.s32 %s10, 1
    %s18 = ssub.s32 %s10, %s17
    %p19 = scmp.eq.s32.totalorder %s18, 0
    %s21 = sadd.s32 %s20, 1
    %s22 = scalar_select %p19, %s20, %s21
    %p25 = pneg %p19
    %p26 = scmp.eq.s32.totalorder %s10, 1
    %p27 = por %p25, %p26
    %p28 = scmp.ne.s32.totalorder %s20, %s23
    %p29 = scmp.eq.s32.totalorder %s10, 0
    %p30 = por %p28, %p29
    %p31 = scmp.ne.s32.totalorder %s20, %s23
    %p32 = scmp.eq.s32.totalorder %s15, 1
    %p33 = por %p31, %p32
    %p34 = scmp.ne.s32.totalorder %s23, %s24
    %p35 = scmp.eq.s32.totalorder %s15, 0
    %p36 = por %p34, %p35
    %p37 = scmp.ne.s32.totalorder %s23, %s24
    %p38 = scmp.eq.s32.totalorder %s16, 1
    %p39 = por %p37, %p38
    %p41 = scmp.ne.s32.totalorder %s24, %s40
    %p42 = scmp.eq.s32.totalorder %s16, 0
    %p43 = por %p41, %p42
    %s45 = sadd.s32 %s44, 1
    %p48 = scmp.eq.s32.totalorder %s10, 1
    %p49 = scmp.ne.s32.totalorder %s44, %s46
    %p50 = scmp.eq.s32.totalorder %s10, 0
    %p51 = por %p49, %p50
    %p52 = scmp.ne.s32.totalorder %s44, %s46
    %p53 = scmp.eq.s32.totalorder %s15, 1
    %p54 = por %p52, %p53
    %p55 = scmp.ne.s32.totalorder %s46, %s47
    %p56 = scmp.eq.s32.totalorder %s15, 0
    %p57 = por %p55, %p56
    %p58 = scmp.ne.s32.totalorder %s46, %s47
    %p59 = scmp.eq.s32.totalorder %s16, 1
    %p60 = por %p58, %p59
    %p62 = scmp.ne.s32.totalorder %s47, %s61
    %p63 = scmp.eq.s32.totalorder %s16, 0
    %p64 = por %p62, %p63
    %s65 = ssub.s32 %s10, %s17
    %p66 = scmp.eq.s32.totalorder %s65, 0
    %s68 = sadd.s32 %s67, 1
    %s69 = scalar_select %p66, %s67, %s68
    %p72 = pneg %p66
    %p73 = scmp.eq.s32.totalorder %s10, 1
    %p74 = por %p72, %p73
    %p75 = scmp.ne.s32.totalorder %s67, %s70
    %p76 = scmp.eq.s32.totalorder %s10, 0
    %p77 = por %p75, %p76
    %p78 = scmp.ne.s32.totalorder %s67, %s70
    %p79 = scmp.eq.s32.totalorder %s15, 1
    %p80 = por %p78, %p79
    %p81 = scmp.ne.s32.totalorder %s70, %s71
    %p82 = scmp.eq.s32.totalorder %s15, 0
    %p83 = por %p81, %p82
    %p84 = scmp.ne.s32.totalorder %s70, %s71
    %p85 = scmp.eq.s32.totalorder %s16, 1
    %p86 = por %p84, %p85
    %p88 = scmp.ne.s32.totalorder %s71, %s87
    %p89 = scmp.eq.s32.totalorder %s16, 0
    %p90 = por %p88, %p89
    %s91 = ssub.s32 %s10, %s17
    %p92 = scmp.eq.s32.totalorder %s91, 0
    %s94 = sadd.s32 %s93, 1
    %s95 = scalar_select %p92, %s93, %s94
    %p98 = pneg %p92
    %p99 = scmp.eq.s32.totalorder %s10, 1
    %p100 = por %p98, %p99
    %p101 = scmp.ne.s32.totalorder %s93, %s96
    %p102 = scmp.eq.s32.totalorder %s10, 0
    %p103 = por %p101, %p102
    %p104 = scmp.ne.s32.totalorder %s93, %s96
    %p105 = scmp.eq.s32.totalorder %s15, 1
    %p106 = por %p104, %p105
    %p107 = scmp.ne.s32.totalorder %s96, %s97
    %p108 = scmp.eq.s32.totalorder %s15, 0
    %p109 = por %p107, %p108
    %p110 = scmp.ne.s32.totalorder %s96, %s97
    %p111 = scmp.eq.s32.totalorder %s16, 1
    %p112 = por %p110, %p111
    %p114 = scmp.ne.s32.totalorder %s97, %s113
    %p115 = scmp.eq.s32.totalorder %s16, 0
    %p116 = por %p114, %p115
    %p117 = scmp.le.s32.totalorder 1, %s10
    %p118 = scmp.lt.s32.totalorder %s10, 3
    %p119 = pnand %p117, %p118
    %p120 = pneg %p119
    // Predicated region
    $region9: #{bottleneck_block.4} parent=5 // pred_check
      _
    $region10: #{bottleneck_block.4} parent=5 // pred_check_branch
      %122 = sbr.rel (%p119) target = $region12
    $region11: #{bottleneck_block.4} parent=5 // pred_region
      %s123 = ssub.s32 %s10, 1
      // Predicated region
      $region13: #{bottleneck_block.4} parent=11 // pred_check
        %p124 = pneg %p57
      $region14: #{bottleneck_block.4} parent=11 // pred_check_branch
        %126 = sbr.rel (%p124) target = $region16
      $region15: #{bottleneck_block.4} parent=11 // pred_region
        _
      $region16: #{bottleneck_block.4} parent=11 // pred_fallthru
        _
    $region12: #{bottleneck_block.4} parent=5 // pred_fallthru
      _
    %p127 = scmp.lt.s32.totalorder %s10, 2
    // Predicated region
    $region17: #{bottleneck_block.4} parent=5 // pred_check
      %p128 = pneg %p127
    $region18: #{bottleneck_block.4} parent=5 // pred_check_branch
      %130 = sbr.rel (%p128) target = $region20
    $region19: #{bottleneck_block.4} parent=5 // pred_region
      // Predicated region
      $region21: #{bottleneck_block.4} parent=19 // pred_check
        %p131 = pneg %p30
      $region22: #{bottleneck_block.4} parent=19 // pred_check_branch
        %133 = sbr.rel (%p131) target = $region24
      $region23: #{bottleneck_block.4} parent=19 // pred_region
        %s134 = smul.u32 32, %s10
        %p135 = scmp.lt.s32.totalorder %s134, 63
        %s136 = scalar_select %p135, %s134, 63
        %s137 = smul.addr %s136, 8
        %s138 = scalar_lea.vmem %s0, %s137
        %s139 = smul.u32 32, %s10
      $region24: #{bottleneck_block.4} parent=19 // pred_fallthru
        _
    $region20: #{bottleneck_block.4} parent=5 // pred_fallthru
      _
    %p140 = scmp.le.s32.totalorder 1, %s10
    %p141 = scmp.lt.s32.totalorder %s10, 3
    %p142 = pnand %p140, %p141
    %p143 = pneg %p142
    // Predicated region
    $region25: #{bottleneck_block.4} parent=5 // pred_check
      _
    $region26: #{bottleneck_block.4} parent=5 // pred_check_branch
      %145 = sbr.rel (%p142) target = $region28
    $region27: #{bottleneck_block.4} parent=5 // pred_region
      %s146 = ssub.s32 %s10, 1
      %s147 = smul.u32 32, %s15
      %p148 = scmp.lt.s32.totalorder %s147, 63
      %s149 = scalar_select %p148, %s147, 63
      %s150 = smul.addr %s149, 8
      %s151 = scalar_lea.vmem %s0, %s150
      %p152 = pneg %p36
      %p153 = pneg %p33
      %p154 = pneg %p57
      %p155 = pneg %p54
      %p156 = pneg %p83
      %p157 = pneg %p80
      %s158 = smul.u32 32, %s15
      %p159 = scmp.lt.s32.totalorder %s158, 63
      %s160 = scalar_select %p159, %s158, 63
      %s161 = smul.addr %s160, 8
      %s162 = scalar_lea.vmem %s2, %s161
      %p163 = pneg %p109
      %p164 = pneg %p106
      %p165 = scmp.lt.s32.totalorder %s15, 1
      %s166 = scalar_select %p165, %s15, 1
      %s167 = smul.addr %s166, 2
      %s168 = scalar_lea.vmem %s3, %s167
      %s169 = smul.u32 32, %s15
      %p170 = scmp.lt.s32.totalorder %s169, 63
      %s171 = scalar_select %p170, %s169, 63
      %s172 = smul.addr %s171, 8
      %s173 = scalar_lea.vmem %s0, %s172
      %s174 = smul.u32 32, %s15
      %s175 = smul.u32 32, %s15
      %p176 = scmp.lt.s32.totalorder %s175, 63
      %s177 = scalar_select %p176, %s175, 63
      %s178 = smul.addr %s177, 8
      %s179 = scalar_lea.vmem %s2, %s178
      %s180 = smul.u32 32, %s15
      %p181 = scmp.lt.s32.totalorder %s15, 1
      %s182 = scalar_select %p181, %s15, 1
      %s183 = smul.addr %s182, 2
      %s184 = scalar_lea.vmem %s3, %s183
      %v186 = vld [vmem:[%s173] sm:$0xff]
      %v187 = vld [vmem:[%s173 + $0x8] sm:$0xff]
      %v188 = vld [vmem:[%s173 + $0x10] sm:$0xff]
      %v189 = vld [vmem:[%s173 + $0x18] sm:$0xff]
      %v190 = vld [vmem:[%s173 + $0x20] sm:$0xff]
      %v191 = vld [vmem:[%s173 + $0x28] sm:$0xff]
      %v192 = vld [vmem:[%s173 + $0x30] sm:$0xff]
      %v193 = vld [vmem:[%s173 + $0x38] sm:$0xff]
      %v194 = vld [vmem:[%s173 + $0x40] sm:$0xff]
      %v195 = vld [vmem:[%s173 + $0x48] sm:$0xff]
      %v196 = vld [vmem:[%s173 + $0x50] sm:$0xff]
      %v197 = vld [vmem:[%s173 + $0x58] sm:$0xff]
      %v198 = vld [vmem:[%s173 + $0x60] sm:$0xff]
      %v199 = vld [vmem:[%s173 + $0x68] sm:$0xff]
      %v200 = vld [vmem:[%s173 + $0x70] sm:$0xff]
      %v201 = vld [vmem:[%s173 + $0x78] sm:$0xff]
      %v202 = vld [vmem:[%s173 + $0x80] sm:$0xff]
      %v203 = vld [vmem:[%s173 + $0x88] sm:$0xff]
      %v204 = vld [vmem:[%s173 + $0x90] sm:$0xff]
      %v205 = vld [vmem:[%s173 + $0x98] sm:$0xff]
      %v206 = vld [vmem:[%s173 + $0xa0] sm:$0xff]
      %v207 = vld [vmem:[%s173 + $0xa8] sm:$0xff]
      %v208 = vld [vmem:[%s173 + $0xb0] sm:$0xff]
      %v209 = vld [vmem:[%s173 + $0xb8] sm:$0xff]
      %v210 = vld [vmem:[%s173 + $0xc0] sm:$0xff]
      %v211 = vld [vmem:[%s173 + $0xc8] sm:$0xff]
      %v212 = vld [vmem:[%s173 + $0xd0] sm:$0xff]
      %v213 = vld [vmem:[%s173 + $0xd8] sm:$0xff]
      %v214 = vld [vmem:[%s173 + $0xe0] sm:$0xff]
      %v215 = vld [vmem:[%s173 + $0xe8] sm:$0xff]
      %v216 = vld [vmem:[%s173 + $0xf0] sm:$0xff]
      %v217 = vld [vmem:[%s173 + $0xf8] sm:$0xff]
      %v218 = vpack.c.bf16 %v187, %v186
      %v219 = vpack.c.bf16 %v189, %v188
      %v220 = vpack.c.bf16 %v191, %v190
      %v221 = vpack.c.bf16 %v193, %v192
      %v222 = vpack.c.bf16 %v195, %v194
      %v223 = vpack.c.bf16 %v197, %v196
      %v224 = vpack.c.bf16 %v199, %v198
      %v225 = vpack.c.bf16 %v201, %v200
      %v226 = vpack.c.bf16 %v203, %v202
      %v227 = vpack.c.bf16 %v205, %v204
      %v228 = vpack.c.bf16 %v207, %v206
      %v229 = vpack.c.bf16 %v209, %v208
      %v230 = vpack.c.bf16 %v211, %v210
      %v231 = vpack.c.bf16 %v213, %v212
      %v232 = vpack.c.bf16 %v215, %v214
      %v233 = vpack.c.bf16 %v217, %v216
      %v234 = vld [vmem:[%s1] sm:$0x3]
      %vm235 = vcmask 31744
      %v237 = vsel %vm235, %v218, 0
      %v240 = vsel %vm235, %v219, 0
      %v243 = vsel %vm235, %v220, 0
      %v246 = vsel %vm235, %v221, 0
      %v249 = vsel %vm235, %v222, 0
      %v252 = vsel %vm235, %v223, 0
      %v255 = vsel %vm235, %v224, 0
      %v258 = vsel %vm235, %v225, 0
      %v261 = vsel %vm235, %v226, 0
      %v264 = vsel %vm235, %v227, 0
      %v267 = vsel %vm235, %v228, 0
      %v270 = vsel %vm235, %v229, 0
      %v273 = vsel %vm235, %v230, 0
      %v276 = vsel %vm235, %v231, 0
      %v279 = vsel %vm235, %v232, 0
      %v282 = vsel %vm235, %v233, 0
      %vm284 = vcmask 1041408
      %v286 = vsel %vm284, %v234, 0
      %288 = vmatpush.bf16.msra.mxu0 0
      %289 = vmatpush.bf16.msra.mxu0 0
      %290 = vmatpush.bf16.msra.mxu0 0
      %291 = vmatpush.bf16.msra.mxu0 0
      %292 = vmatpush.bf16.msra.mxu0 0
      %293 = vmatpush.bf16.msra.mxu0 0
      %294 = vmatpush.bf16.msra.mxu0 0
      %295 = vmatpush.bf16.msra.mxu0 %v286
      %296 = vmatmul.bf16.gmra.mxu0 %v237
      %v297 = vpop.f32.mrf.mxu0
      %v298 = vadd.f32 0.0, %v297
      %v299 = vpop.f32.mrf.mxu0
      %v300 = vadd.f32 0.0, %v299
      %301 = vmatmul.bf16.gmra.mxu0 %v240
      %v302 = vpop.f32.mrf.mxu0
      %v303 = vadd.f32 0.0, %v302
      %v304 = vpop.f32.mrf.mxu0
      %v305 = vadd.f32 0.0, %v304
      %306 = vmatmul.bf16.gmra.mxu0 %v243
      %v307 = vpop.f32.mrf.mxu0
      %v308 = vadd.f32 0.0, %v307
      %v309 = vpop.f32.mrf.mxu0
      %v310 = vadd.f32 0.0, %v309
      %311 = vmatmul.bf16.gmra.mxu0 %v246
      %v312 = vpop.f32.mrf.mxu0
      %v313 = vadd.f32 0.0, %v312
      %v314 = vpop.f32.mrf.mxu0
      %v315 = vadd.f32 0.0, %v314
      %316 = vmatmul.bf16.gmra.mxu0 %v249
      %v317 = vpop.f32.mrf.mxu0
      %v318 = vadd.f32 0.0, %v317
      %v319 = vpop.f32.mrf.mxu0
      %v320 = vadd.f32 0.0, %v319
      %321 = vmatmul.bf16.gmra.mxu0 %v252
      %v322 = vpop.f32.mrf.mxu0
      %v323 = vadd.f32 0.0, %v322
      %v324 = vpop.f32.mrf.mxu0
      %v325 = vadd.f32 0.0, %v324
      %326 = vmatmul.bf16.gmra.mxu0 %v255
      %v327 = vpop.f32.mrf.mxu0
      %v328 = vadd.f32 0.0, %v327
      %v329 = vpop.f32.mrf.mxu0
      %v330 = vadd.f32 0.0, %v329
      %331 = vmatmul.bf16.gmra.mxu0 %v258
      %v332 = vpop.f32.mrf.mxu0
      %v333 = vadd.f32 0.0, %v332
      %v334 = vpop.f32.mrf.mxu0
      %v335 = vadd.f32 0.0, %v334
      %336 = vmatmul.bf16.gmra.mxu0 %v261
      %v337 = vpop.f32.mrf.mxu0
      %v338 = vadd.f32 0.0, %v337
      %v339 = vpop.f32.mrf.mxu0
      %v340 = vadd.f32 0.0, %v339
      %341 = vmatmul.bf16.gmra.mxu0 %v264
      %v342 = vpop.f32.mrf.mxu0
      %v343 = vadd.f32 0.0, %v342
      %v344 = vpop.f32.mrf.mxu0
      %v345 = vadd.f32 0.0, %v344
      %346 = vmatmul.bf16.gmra.mxu0 %v267
      %v347 = vpop.f32.mrf.mxu0
      %v348 = vadd.f32 0.0, %v347
      %v349 = vpop.f32.mrf.mxu0
      %v350 = vadd.f32 0.0, %v349
      %351 = vmatmul.bf16.gmra.mxu0 %v270
      %v352 = vpop.f32.mrf.mxu0
      %v353 = vadd.f32 0.0, %v352
      %v354 = vpop.f32.mrf.mxu0
      %v355 = vadd.f32 0.0, %v354
      %356 = vmatmul.bf16.gmra.mxu0 %v273
      %v357 = vpop.f32.mrf.mxu0
      %v358 = vadd.f32 0.0, %v357
      %v359 = vpop.f32.mrf.mxu0
      %v360 = vadd.f32 0.0, %v359
      %361 = vmatmul.bf16.gmra.mxu0 %v276
      %v362 = vpop.f32.mrf.mxu0
      %v363 = vadd.f32 0.0, %v362
      %v364 = vpop.f32.mrf.mxu0
      %v365 = vadd.f32 0.0, %v364
      %366 = vmatmul.bf16.gmra.mxu0 %v279
      %v367 = vpop.f32.mrf.mxu0
      %v368 = vadd.f32 0.0, %v367
      %v369 = vpop.f32.mrf.mxu0
      %v370 = vadd.f32 0.0, %v369
      %371 = vmatmul.bf16.gmra.mxu0 %v282
      %v372 = vpop.f32.mrf.mxu0
      %v373 = vadd.f32 0.0, %v372
      %v374 = vpop.f32.mrf.mxu0
      %v375 = vadd.f32 0.0, %v374
      %376 = vdwg.mxu0
      %vm377 = vcmask 64512
      %378 = vst.msk [vmem:[%s179] sm:$0xff] %vm377, %v298
      %379 = vst.msk [vmem:[%s179 + $0x8] sm:$0xff] %vm377, %v300
      %380 = vst.msk [vmem:[%s179 + $0x10] sm:$0xff] %vm377, %v303
      %381 = vst.msk [vmem:[%s179 + $0x18] sm:$0xff] %vm377, %v305
      %382 = vst.msk [vmem:[%s179 + $0x20] sm:$0xff] %vm377, %v308
      %383 = vst.msk [vmem:[%s179 + $0x28] sm:$0xff] %vm377, %v310
      %384 = vst.msk [vmem:[%s179 + $0x30] sm:$0xff] %vm377, %v313
      %385 = vst.msk [vmem:[%s179 + $0x38] sm:$0xff] %vm377, %v315
      %386 = vst.msk [vmem:[%s179 + $0x40] sm:$0xff] %vm377, %v318
      %387 = vst.msk [vmem:[%s179 + $0x48] sm:$0xff] %vm377, %v320
      %388 = vst.msk [vmem:[%s179 + $0x50] sm:$0xff] %vm377, %v323
      %389 = vst.msk [vmem:[%s179 + $0x58] sm:$0xff] %vm377, %v325
      %390 = vst.msk [vmem:[%s179 + $0x60] sm:$0xff] %vm377, %v328
      %391 = vst.msk [vmem:[%s179 + $0x68] sm:$0xff] %vm377, %v330
      %392 = vst.msk [vmem:[%s179 + $0x70] sm:$0xff] %vm377, %v333
      %393 = vst.msk [vmem:[%s179 + $0x78] sm:$0xff] %vm377, %v335
      %394 = vst.msk [vmem:[%s179 + $0x80] sm:$0xff] %vm377, %v338
      %395 = vst.msk [vmem:[%s179 + $0x88] sm:$0xff] %vm377, %v340
      %396 = vst.msk [vmem:[%s179 + $0x90] sm:$0xff] %vm377, %v343
      %397 = vst.msk [vmem:[%s179 + $0x98] sm:$0xff] %vm377, %v345
      %398 = vst.msk [vmem:[%s179 + $0xa0] sm:$0xff] %vm377, %v348
      %399 = vst.msk [vmem:[%s179 + $0xa8] sm:$0xff] %vm377, %v350
      %400 = vst.msk [vmem:[%s179 + $0xb0] sm:$0xff] %vm377, %v353
      %401 = vst.msk [vmem:[%s179 + $0xb8] sm:$0xff] %vm377, %v355
      %402 = vst.msk [vmem:[%s179 + $0xc0] sm:$0xff] %vm377, %v358
      %403 = vst.msk [vmem:[%s179 + $0xc8] sm:$0xff] %vm377, %v360
      %404 = vst.msk [vmem:[%s179 + $0xd0] sm:$0xff] %vm377, %v363
      %405 = vst.msk [vmem:[%s179 + $0xd8] sm:$0xff] %vm377, %v365
      %406 = vst.msk [vmem:[%s179 + $0xe0] sm:$0xff] %vm377, %v368
      %407 = vst.msk [vmem:[%s179 + $0xe8] sm:$0xff] %vm377, %v370
      %408 = vst.msk [vmem:[%s179 + $0xf0] sm:$0xff] %vm377, %v373
      %409 = vst.msk [vmem:[%s179 + $0xf8] sm:$0xff] %vm377, %v375
      %v410 = vsel %vm377, %v298, 0.0
      %v411 = vsel %vm377, %v300, 0.0
      %v412 = vadd.f32 %v410, %v411
      %v413 = vsel %vm377, %v303, 0.0
      %v414 = vadd.f32 %v412, %v413
      %v415 = vsel %vm377, %v305, 0.0
      %v416 = vadd.f32 %v414, %v415
      %v417 = vsel %vm377, %v308, 0.0
      %v418 = vadd.f32 %v416, %v417
      %v419 = vsel %vm377, %v310, 0.0
      %v420 = vadd.f32 %v418, %v419
      %v421 = vsel %vm377, %v313, 0.0
      %v422 = vadd.f32 %v420, %v421
      %v423 = vsel %vm377, %v315, 0.0
      %v424 = vadd.f32 %v422, %v423
      %v425 = vsel %vm377, %v318, 0.0
      %v426 = vadd.f32 %v424, %v425
      %v427 = vsel %vm377, %v320, 0.0
      %v428 = vadd.f32 %v426, %v427
      %v429 = vsel %vm377, %v323, 0.0
      %v430 = vadd.f32 %v428, %v429
      %v431 = vsel %vm377, %v325, 0.0
      %v432 = vadd.f32 %v430, %v431
      %v433 = vsel %vm377, %v328, 0.0
      %v434 = vadd.f32 %v432, %v433
      %v435 = vsel %vm377, %v330, 0.0
      %v436 = vadd.f32 %v434, %v435
      %v437 = vsel %vm377, %v333, 0.0
      %v438 = vadd.f32 %v436, %v437
      %v439 = vsel %vm377, %v335, 0.0
      %v440 = vadd.f32 %v438, %v439
      %v441 = vsel %vm377, %v338, 0.0
      %v442 = vadd.f32 %v440, %v441
      %v443 = vsel %vm377, %v340, 0.0
      %v444 = vadd.f32 %v442, %v443
      %v445 = vsel %vm377, %v343, 0.0
      %v446 = vadd.f32 %v444, %v445
      %v447 = vsel %vm377, %v345, 0.0
      %v448 = vadd.f32 %v446, %v447
      %v449 = vsel %vm377, %v348, 0.0
      %v450 = vadd.f32 %v448, %v449
      %v451 = vsel %vm377, %v350, 0.0
      %v452 = vadd.f32 %v450, %v451
      %v453 = vsel %vm377, %v353, 0.0
      %v454 = vadd.f32 %v452, %v453
      %v455 = vsel %vm377, %v355, 0.0
      %v456 = vadd.f32 %v454, %v455
      %v457 = vsel %vm377, %v358, 0.0
      %v458 = vadd.f32 %v456, %v457
      %v459 = vsel %vm377, %v360, 0.0
      %v460 = vadd.f32 %v458, %v459
      %v461 = vsel %vm377, %v363, 0.0
      %v462 = vadd.f32 %v460, %v461
      %v463 = vsel %vm377, %v365, 0.0
      %v464 = vadd.f32 %v462, %v463
      %v465 = vsel %vm377, %v368, 0.0
      %v466 = vadd.f32 %v464, %v465
      %v467 = vsel %vm377, %v370, 0.0
      %v468 = vadd.f32 %v466, %v467
      %v469 = vsel %vm377, %v373, 0.0
      %v470 = vadd.f32 %v468, %v469
      %v471 = vsel %vm377, %v375, 0.0
      %v472 = vadd.f32 %v470, %v471
      %v473 = vrot.slane %v472, 4
      %v474 = vadd.f32 %v472, %v473
      %v475 = vrot.slane %v474, 2
      %v476 = vadd.f32 %v474, %v475
      %v477 = vrot.slane %v476, 1
      %v478 = vadd.f32 %v476, %v477
      %vm479 = vcmask 57344
      %480 = vst.msk [vmem:[%s184] sm:$0x1] %vm479, %v478
      %v481 = vmul.f32 %v298, %v298
      %v482 = vmul.f32 %v300, %v300
      %v483 = vmul.f32 %v303, %v303
      %v484 = vmul.f32 %v305, %v305
      %v485 = vmul.f32 %v308, %v308
      %v486 = vmul.f32 %v310, %v310
      %v487 = vmul.f32 %v313, %v313
      %v488 = vmul.f32 %v315, %v315
      %v489 = vmul.f32 %v318, %v318
      %v490 = vmul.f32 %v320, %v320
      %v491 = vmul.f32 %v323, %v323
      %v492 = vmul.f32 %v325, %v325
      %v493 = vmul.f32 %v328, %v328
      %v494 = vmul.f32 %v330, %v330
      %v495 = vmul.f32 %v333, %v333
      %v496 = vmul.f32 %v335, %v335
      %v497 = vmul.f32 %v338, %v338
      %v498 = vmul.f32 %v340, %v340
      %v499 = vmul.f32 %v343, %v343
      %v500 = vmul.f32 %v345, %v345
      %v501 = vmul.f32 %v348, %v348
      %v502 = vmul.f32 %v350, %v350
      %v503 = vmul.f32 %v353, %v353
      %v504 = vmul.f32 %v355, %v355
      %v505 = vmul.f32 %v358, %v358
      %v506 = vmul.f32 %v360, %v360
      %v507 = vmul.f32 %v363, %v363
      %v508 = vmul.f32 %v365, %v365
      %v509 = vmul.f32 %v368, %v368
      %v510 = vmul.f32 %v370, %v370
      %v511 = vmul.f32 %v373, %v373
      %v512 = vmul.f32 %v375, %v375
      %v513 = vsel %vm377, %v481, 0.0
      %v514 = vsel %vm377, %v482, 0.0
      %v515 = vadd.f32 %v513, %v514
      %v516 = vsel %vm377, %v483, 0.0
      %v517 = vadd.f32 %v515, %v516
      %v518 = vsel %vm377, %v484, 0.0
      %v519 = vadd.f32 %v517, %v518
      %v520 = vsel %vm377, %v485, 0.0
      %v521 = vadd.f32 %v519, %v520
      %v522 = vsel %vm377, %v486, 0.0
      %v523 = vadd.f32 %v521, %v522
      %v524 = vsel %vm377, %v487, 0.0
      %v525 = vadd.f32 %v523, %v524
      %v526 = vsel %vm377, %v488, 0.0
      %v527 = vadd.f32 %v525, %v526
      %v528 = vsel %vm377, %v489, 0.0
      %v529 = vadd.f32 %v527, %v528
      %v530 = vsel %vm377, %v490, 0.0
      %v531 = vadd.f32 %v529, %v530
      %v532 = vsel %vm377, %v491, 0.0
      %v533 = vadd.f32 %v531, %v532
      %v534 = vsel %vm377, %v492, 0.0
      %v535 = vadd.f32 %v533, %v534
      %v536 = vsel %vm377, %v493, 0.0
      %v537 = vadd.f32 %v535, %v536
      %v538 = vsel %vm377, %v494, 0.0
      %v539 = vadd.f32 %v537, %v538
      %v540 = vsel %vm377, %v495, 0.0
      %v541 = vadd.f32 %v539, %v540
      %v542 = vsel %vm377, %v496, 0.0
      %v543 = vadd.f32 %v541, %v542
      %v544 = vsel %vm377, %v497, 0.0
      %v545 = vadd.f32 %v543, %v544
      %v546 = vsel %vm377, %v498, 0.0
      %v547 = vadd.f32 %v545, %v546
      %v548 = vsel %vm377, %v499, 0.0
      %v549 = vadd.f32 %v547, %v548
      %v550 = vsel %vm377, %v500, 0.0
      %v551 = vadd.f32 %v549, %v550
      %v552 = vsel %vm377, %v501, 0.0
      %v553 = vadd.f32 %v551, %v552
      %v554 = vsel %vm377, %v502, 0.0
      %v555 = vadd.f32 %v553, %v554
      %v556 = vsel %vm377, %v503, 0.0
      %v557 = vadd.f32 %v555, %v556
      %v558 = vsel %vm377, %v504, 0.0
      %v559 = vadd.f32 %v557, %v558
      %v560 = vsel %vm377, %v505, 0.0
      %v561 = vadd.f32 %v559, %v560
      %v562 = vsel %vm377, %v506, 0.0
      %v563 = vadd.f32 %v561, %v562
      %v564 = vsel %vm377, %v507, 0.0
      %v565 = vadd.f32 %v563, %v564
      %v566 = vsel %vm377, %v508, 0.0
      %v567 = vadd.f32 %v565, %v566
      %v568 = vsel %vm377, %v509, 0.0
      %v569 = vadd.f32 %v567, %v568
      %v570 = vsel %vm377, %v510, 0.0
      %v571 = vadd.f32 %v569, %v570
      %v572 = vsel %vm377, %v511, 0.0
      %v573 = vadd.f32 %v571, %v572
      %v574 = vsel %vm377, %v512, 0.0
      %v575 = vadd.f32 %v573, %v574
      %v576 = vrot.slane %v575, 4
      %v577 = vadd.f32 %v575, %v576
      %v578 = vrot.slane %v577, 2
      %v579 = vadd.f32 %v577, %v578
      %v580 = vrot.slane %v579, 1
      %v581 = vadd.f32 %v579, %v580
      %582 = vst.msk [vmem:[%s184 + $0x1] sm:$0x1] %vm479, %v581
      %s583 = smul.u32 32, %s15
      %p584 = scmp.lt.s32.totalorder %s583, 63
      %s585 = scalar_select %p584, %s583, 63
      %s586 = smul.addr %s585, 8
      %s587 = scalar_lea.vmem %s2, %s586
      %p588 = scmp.lt.s32.totalorder %s15, 1
      %s589 = scalar_select %p588, %s15, 1
      %s590 = smul.addr %s589, 2
      %s591 = scalar_lea.vmem %s3, %s590
      // Predicated region
      $region29: #{bottleneck_block.4} parent=27 // pred_check
        %p592 = pneg %p80
      $region30: #{bottleneck_block.4} parent=27 // pred_check_branch
        %594 = sbr.rel (%p592) target = $region32
      $region31: #{bottleneck_block.4} parent=27 // pred_region
        %s595 = smul.u32 32, %s15
      $region32: #{bottleneck_block.4} parent=27 // pred_fallthru
        _
      // Predicated region
      $region33: #{bottleneck_block.4} parent=27 // pred_check
        %p596 = pneg %p106
      $region34: #{bottleneck_block.4} parent=27 // pred_check_branch
        %598 = sbr.rel (%p596) target = $region36
      $region35: #{bottleneck_block.4} parent=27 // pred_region
        _
      $region36: #{bottleneck_block.4} parent=27 // pred_fallthru
        _
    $region28: #{bottleneck_block.4} parent=5 // pred_fallthru
      _
    %p599 = scmp.le.s32.totalorder 2, %s10
    // Predicated region
    $region37: #{bottleneck_block.4} parent=5 // pred_check
      %p600 = pneg %p599
    $region38: #{bottleneck_block.4} parent=5 // pred_check_branch
      %602 = sbr.rel (%p600) target = $region40
    $region39: #{bottleneck_block.4} parent=5 // pred_region
      %s603 = ssub.s32 %s10, 2
      // Predicated region
      $region41: #{bottleneck_block.4} parent=39 // pred_check
        %p604 = pneg %p86
      $region42: #{bottleneck_block.4} parent=39 // pred_check_branch
        %606 = sbr.rel (%p604) target = $region44
      $region43: #{bottleneck_block.4} parent=39 // pred_region
        %s607 = smul.u32 32, %s16
        %p608 = scmp.lt.s32.totalorder %s607, 63
        %s609 = scalar_select %p608, %s607, 63
        %s610 = smul.addr %s609, 8
        %s611 = scalar_lea.vmem %s2, %s610
      $region44: #{bottleneck_block.4} parent=39 // pred_fallthru
        _
      // Predicated region
      $region45: #{bottleneck_block.4} parent=39 // pred_check
        %p612 = pneg %p112
      $region46: #{bottleneck_block.4} parent=39 // pred_check_branch
        %614 = sbr.rel (%p612) target = $region48
      $region47: #{bottleneck_block.4} parent=39 // pred_region
        %p615 = scmp.lt.s32.totalorder %s16, 1
        %s616 = scalar_select %p615, %s16, 1
        %s617 = smul.addr %s616, 2
        %s618 = scalar_lea.vmem %s3, %s617
      $region48: #{bottleneck_block.4} parent=39 // pred_fallthru
        _
    $region40: #{bottleneck_block.4} parent=5 // pred_fallthru
      _
  $region6: #{bottleneck_block.4} parent=0 // loop_footer
    %s14 = sadd.s32 1, %s10
  $region7: #{bottleneck_block.4} parent=0 // loop_footer_branch
    %9 = sbr.rel target = $region3
  $region8: #{bottleneck_block.4} parent=0 // loop_exit
    _

// kernel: bottleneck_block.6
$region0: #{bottleneck_block.6}
  #allocation0 [shape = 'u32[]', space=smem, size = 0x4, offset = 0x4, fixed_abs, tag = 'smem constant byte address 0x4 - core index']
  #allocation1 [shape = 'u32[72,128]{1,0:T(1,128)}', space=vmem, size = 0x9000, scoped, tag = 'internal scratch']
  %s0 = inlined_call_operand.vmem [shape: f32[512,8], index: 0, kind: input, shape index: {}]
  %s1 = inlined_call_operand.vmem [shape: bf16[8,4], index: 1, kind: input, shape index: {}]
  %s2 = inlined_call_operand.vmem [shape: f32[2,8], index: 2, kind: input, shape index: {}]
  %s3 = inlined_call_operand.vmem [shape: f32[512,4], index: 3, kind: output, shape index: {0}]
  %s4 = inlined_call_operand.vmem [shape: f32[2,2,4], index: 4, kind: output, shape index: {1}]
  %5 = xla_tuple %s3, %s4
  %s6 = sld [smem:[#allocation0]]
  $region53: #{bottleneck_block.6} parent=0
    _
  %s8 = ssub.s32 1, %s6
  %s9 = scalar_select 0, %s8, %s6
  loop: start=0, step=1, limit=4
  $region2: #{bottleneck_block.6} parent=0 // loop_pre_header
    _
  $region3: #{bottleneck_block.6} parent=0 // loop_header
    %s11 = sphi 0, %s15
    %p12 = scmp.ge.s32.totalorder %s11, 4
    %s21 = sphi 0, %s23
    %s24 = sphi 0, %s21
    %s25 = sphi 0, %s24
    %s41 = sphi 0, %s25
    %s45 = sphi 0, %s45
    %s47 = sphi 0, %s45
    %s48 = sphi 0, %s47
    %s62 = sphi 0, %s48
    %s66 = sphi 0, %s66
    %s68 = sphi 0, %s66
    %s69 = sphi 0, %s68
    %s83 = sphi 0, %s69
    %s89 = sphi 0, %s91
    %s92 = sphi 0, %s89
    %s93 = sphi 0, %s92
    %s109 = sphi 0, %s93
    %s115 = sphi 0, %s117
    %s118 = sphi 0, %s115
    %s119 = sphi 0, %s118
    %s135 = sphi 0, %s119
  $region4: #{bottleneck_block.6} parent=0 // loop_header_branch
    %14 = sbr.rel (%p12) target = $region8
  $region5: #{bottleneck_block.6} parent=0 // loop_body
    %s16 = ssub.s32 %s11, 1
    %s17 = ssub.s32 %s11, 2
    %s18 = sadd.s32 %s11, 1
    %s19 = ssub.s32 %s11, %s18
    %p20 = scmp.eq.s32.totalorder %s19, 0
    %s22 = sadd.s32 %s21, 1
    %s23 = scalar_select %p20, %s21, %s22
    %p26 = pneg %p20
    %p27 = scmp.eq.s32.totalorder %s11, 1
    %p28 = por %p26, %p27
    %p29 = scmp.ne.s32.totalorder %s21, %s24
    %p30 = scmp.eq.s32.totalorder %s11, 0
    %p31 = por %p29, %p30
    %p32 = scmp.ne.s32.totalorder %s21, %s24
    %p33 = scmp.eq.s32.totalorder %s16, 1
    %p34 = por %p32, %p33
    %p35 = scmp.ne.s32.totalorder %s24, %s25
    %p36 = scmp.eq.s32.totalorder %s16, 0
    %p37 = por %p35, %p36
    %p38 = scmp.ne.s32.totalorder %s24, %s25
    %p39 = scmp.eq.s32.totalorder %s17, 1
    %p40 = por %p38, %p39
    %p42 = scmp.ne.s32.totalorder %s25, %s41
    %p43 = scmp.eq.s32.totalorder %s17, 0
    %p44 = por %p42, %p43
    %s46 = sadd.s32 %s45, 1
    %p49 = scmp.eq.s32.totalorder %s11, 1
    %p50 = scmp.ne.s32.totalorder %s45, %s47
    %p51 = scmp.eq.s32.totalorder %s11, 0
    %p52 = por %p50, %p51
    %p53 = scmp.ne.s32.totalorder %s45, %s47
    %p54 = scmp.eq.s32.totalorder %s16, 1
    %p55 = por %p53, %p54
    %p56 = scmp.ne.s32.totalorder %s47, %s48
    %p57 = scmp.eq.s32.totalorder %s16, 0
    %p58 = por %p56, %p57
    %p59 = scmp.ne.s32.totalorder %s47, %s48
    %p60 = scmp.eq.s32.totalorder %s17, 1
    %p61 = por %p59, %p60
    %p63 = scmp.ne.s32.totalorder %s48, %s62
    %p64 = scmp.eq.s32.totalorder %s17, 0
    %p65 = por %p63, %p64
    %s67 = sadd.s32 %s66, 1
    %p70 = scmp.eq.s32.totalorder %s11, 1
    %p71 = scmp.ne.s32.totalorder %s66, %s68
    %p72 = scmp.eq.s32.totalorder %s11, 0
    %p73 = por %p71, %p72
    %p74 = scmp.ne.s32.totalorder %s66, %s68
    %p75 = scmp.eq.s32.totalorder %s16, 1
    %p76 = por %p74, %p75
    %p77 = scmp.ne.s32.totalorder %s68, %s69
    %p78 = scmp.eq.s32.totalorder %s16, 0
    %p79 = por %p77, %p78
    %p80 = scmp.ne.s32.totalorder %s68, %s69
    %p81 = scmp.eq.s32.totalorder %s17, 1
    %p82 = por %p80, %p81
    %p84 = scmp.ne.s32.totalorder %s69, %s83
    %p85 = scmp.eq.s32.totalorder %s17, 0
    %p86 = por %p84, %p85
    %s87 = ssub.s32 %s11, %s18
    %p88 = scmp.eq.s32.totalorder %s87, 0
    %s90 = sadd.s32 %s89, 1
    %s91 = scalar_select %p88, %s89, %s90
    %p94 = pneg %p88
    %p95 = scmp.eq.s32.totalorder %s11, 1
    %p96 = por %p94, %p95
    %p97 = scmp.ne.s32.totalorder %s89, %s92
    %p98 = scmp.eq.s32.totalorder %s11, 0
    %p99 = por %p97, %p98
    %p100 = scmp.ne.s32.totalorder %s89, %s92
    %p101 = scmp.eq.s32.totalorder %s16, 1
    %p102 = por %p100, %p101
    %p103 = scmp.ne.s32.totalorder %s92, %s93
    %p104 = scmp.eq.s32.totalorder %s16, 0
    %p105 = por %p103, %p104
    %p106 = scmp.ne.s32.totalorder %s92, %s93
    %p107 = scmp.eq.s32.totalorder %s17, 1
    %p108 = por %p106, %p107
    %p110 = scmp.ne.s32.totalorder %s93, %s109
    %p111 = scmp.eq.s32.totalorder %s17, 0
    %p112 = por %p110, %p111
    %s113 = ssub.s32 %s11, %s18
    %p114 = scmp.eq.s32.totalorder %s113, 0
    %s116 = sadd.s32 %s115, 1
    %s117 = scalar_select %p114, %s115, %s116
    %p120 = pneg %p114
    %p121 = scmp.eq.s32.totalorder %s11, 1
    %p122 = por %p120, %p121
    %p123 = scmp.ne.s32.totalorder %s115, %s118
    %p124 = scmp.eq.s32.totalorder %s11, 0
    %p125 = por %p123, %p124
    %p126 = scmp.ne.s32.totalorder %s115, %s118
    %p127 = scmp.eq.s32.totalorder %s16, 1
    %p128 = por %p126, %p127
    %p129 = scmp.ne.s32.totalorder %s118, %s119
    %p130 = scmp.eq.s32.totalorder %s16, 0
    %p131 = por %p129, %p130
    %p132 = scmp.ne.s32.totalorder %s118, %s119
    %p133 = scmp.eq.s32.totalorder %s17, 1
    %p134 = por %p132, %p133
    %p136 = scmp.ne.s32.totalorder %s119, %s135
    %p137 = scmp.eq.s32.totalorder %s17, 0
    %p138 = por %p136, %p137
    %p139 = scmp.le.s32.totalorder 1, %s11
    %p140 = scmp.lt.s32.totalorder %s11, 3
    %p141 = pnand %p139, %p140
    %p142 = pneg %p141
    // Predicated region
    $region9: #{bottleneck_block.6} parent=5 // pred_check
      _
    $region10: #{bottleneck_block.6} parent=5 // pred_check_branch
      %144 = sbr.rel (%p141) target = $region12
    $region11: #{bottleneck_block.6} parent=5 // pred_region
      %s145 = ssub.s32 %s11, 1
      // Predicated region
      $region13: #{bottleneck_block.6} parent=11 // pred_check
        %p146 = pneg %p58
      $region14: #{bottleneck_block.6} parent=11 // pred_check_branch
        %148 = sbr.rel (%p146) target = $region16
      $region15: #{bottleneck_block.6} parent=11 // pred_region
        _
      $region16: #{bottleneck_block.6} parent=11 // pred_fallthru
        _
      // Predicated region
      $region17: #{bottleneck_block.6} parent=11 // pred_check
        %p149 = pneg %p79
      $region18: #{bottleneck_block.6} parent=11 // pred_check_branch
        %151 = sbr.rel (%p149) target = $region20
      $region19: #{bottleneck_block.6} parent=11 // pred_region
        _
      $region20: #{bottleneck_block.6} parent=11 // pred_fallthru
        _
    $region12: #{bottleneck_block.6} parent=5 // pred_fallthru
      _
    %p152 = scmp.lt.s32.totalorder %s11, 2
    // Predicated region
    $region21: #{bottleneck_block.6} parent=5 // pred_check
      %p153 = pneg %p152
    $region22: #{bottleneck_block.6} parent=5 // pred_check_branch
      %155 = sbr.rel (%p153) target = $region24
    $region23: #{bottleneck_block.6} parent=5 // pred_region
      // Predicated region
      $region25: #{bottleneck_block.6} parent=23 // pred_check
        %p156 = pneg %p31
      $region26: #{bottleneck_block.6} parent=23 // pred_check_branch
        %158 = sbr.rel (%p156) target = $region28
      $region27: #{bottleneck_block.6} parent=23 // pred_region
        %s159 = smul.u32 32, %s11
        %p160 = scmp.lt.s32.totalorder %s159, 63
        %s161 = scalar_select %p160, %s159, 63
        %s162 = smul.addr %s161, 8
        %s163 = scalar_lea.vmem %s0, %s162
        %s164 = smul.u32 32, %s11
      $region28: #{bottleneck_block.6} parent=23 // pred_fallthru
        _
    $region24: #{bottleneck_block.6} parent=5 // pred_fallthru
      _
    %p165 = scmp.le.s32.totalorder 1, %s11
    %p166 = scmp.lt.s32.totalorder %s11, 3
    %p167 = pnand %p165, %p166
    %p168 = pneg %p167
    // Predicated region
    $region29: #{bottleneck_block.6} parent=5 // pred_check
      _
    $region30: #{bottleneck_block.6} parent=5 // pred_check_branch
      %170 = sbr.rel (%p167) target = $region32
    $region31: #{bottleneck_block.6} parent=5 // pred_region
      %s171 = ssub.s32 %s11, 1
      %s172 = smul.u32 32, %s16
      %p173 = scmp.lt.s32.totalorder %s172, 63
      %s174 = scalar_select %p173, %s172, 63
      %s175 = smul.addr %s174, 8
      %s176 = scalar_lea.vmem %s0, %s175
      %p177 = pneg %p37
      %p178 = pneg %p34
      %p179 = pneg %p58
      %p180 = pneg %p55
      %p181 = pneg %p79
      %p182 = pneg %p76
      %p183 = pneg %p105
      %p184 = pneg %p102
      %s185 = smul.u32 32, %s16
      %p186 = scmp.lt.s32.totalorder %s185, 63
      %s187 = scalar_select %p186, %s185, 63
      %s188 = smul.addr %s187, 8
      %s189 = scalar_lea.vmem %s3, %s188
      %p190 = pneg %p131
      %p191 = pneg %p128
      %p192 = scmp.lt.s32.totalorder %s16, 1
      %s193 = scalar_select %p192, %s16, 1
      %s194 = smul.addr %s193, 2
      %s195 = scalar_lea.vmem %s4, %s194
      %s196 = smul.u32 32, %s16
      %p197 = scmp.lt.s32.totalorder %s196, 63
      %s198 = scalar_select %p197, %s196, 63
      %s199 = smul.addr %s198, 8
      %s200 = scalar_lea.vmem %s0, %s199
      %s201 = smul.u32 32, %s16
      %s202 = smul.u32 32, %s16
      %p203 = scmp.lt.s32.totalorder %s202, 63
      %s204 = scalar_select %p203, %s202, 63
      %s205 = smul.addr %s204, 8
      %s206 = scalar_lea.vmem %s3, %s205
      %s207 = smul.u32 32, %s16
      %p208 = scmp.lt.s32.totalorder %s16, 1
      %s209 = scalar_select %p208, %s16, 1
      %s210 = smul.addr %s209, 2
      %s211 = scalar_lea.vmem %s4, %s210
      %v213 = vld [vmem:[%s2] sm:$0x1]
      %v214 = vld [vmem:[%s2 + $0x1] sm:$0x1]
      %v215 = vld [vmem:[%s200] sm:$0xff]
      %v216 = vld [vmem:[%s200 + $0x8] sm:$0xff]
      %v217 = vld [vmem:[%s200 + $0x10] sm:$0xff]
      %v218 = vld [vmem:[%s200 + $0x18] sm:$0xff]
      %v219 = vld [vmem:[%s200 + $0x20] sm:$0xff]
      %v220 = vld [vmem:[%s200 + $0x28] sm:$0xff]
      %v221 = vld [vmem:[%s200 + $0x30] sm:$0xff]
      %v222 = vld [vmem:[%s200 + $0x38] sm:$0xff]
      %v223 = vld [vmem:[%s200 + $0x40] sm:$0xff]
      %v224 = vld [vmem:[%s200 + $0x48] sm:$0xff]
      %v225 = vld [vmem:[%s200 + $0x50] sm:$0xff]
      %v226 = vld [vmem:[%s200 + $0x58] sm:$0xff]
      %v227 = vld [vmem:[%s200 + $0x60] sm:$0xff]
      %v228 = vld [vmem:[%s200 + $0x68] sm:$0xff]
      %v229 = vld [vmem:[%s200 + $0x70] sm:$0xff]
      %v230 = vld [vmem:[%s200 + $0x78] sm:$0xff]
      %v231 = vld [vmem:[%s200 + $0x80] sm:$0xff]
      %v232 = vld [vmem:[%s200 + $0x88] sm:$0xff]
      %v233 = vld [vmem:[%s200 + $0x90] sm:$0xff]
      %v234 = vld [vmem:[%s200 + $0x98] sm:$0xff]
      %v235 = vld [vmem:[%s200 + $0xa0] sm:$0xff]
      %v236 = vld [vmem:[%s200 + $0xa8] sm:$0xff]
      %v237 = vld [vmem:[%s200 + $0xb0] sm:$0xff]
      %v238 = vld [vmem:[%s200 + $0xb8] sm:$0xff]
      %v239 = vld [vmem:[%s200 + $0xc0] sm:$0xff]
      %v240 = vld [vmem:[%s200 + $0xc8] sm:$0xff]
      %v241 = vld [vmem:[%s200 + $0xd0] sm:$0xff]
      %v242 = vld [vmem:[%s200 + $0xd8] sm:$0xff]
      %v243 = vld [vmem:[%s200 + $0xe0] sm:$0xff]
      %v244 = vld [vmem:[%s200 + $0xe8] sm:$0xff]
      %v245 = vld [vmem:[%s200 + $0xf0] sm:$0xff]
      %v246 = vld [vmem:[%s200 + $0xf8] sm:$0xff]
      %v247 = vperm.slane %v213, 0
      %v248 = vmul.f32 %v215, %v247
      %v249 = vmul.f32 %v216, %v247
      %v250 = vmul.f32 %v217, %v247
      %v251 = vmul.f32 %v218, %v247
      %v252 = vmul.f32 %v219, %v247
      %v253 = vmul.f32 %v220, %v247
      %v254 = vmul.f32 %v221, %v247
      %v255 = vmul.f32 %v222, %v247
      %v256 = vmul.f32 %v223, %v247
      %v257 = vmul.f32 %v224, %v247
      %v258 = vmul.f32 %v225, %v247
      %v259 = vmul.f32 %v226, %v247
      %v260 = vmul.f32 %v227, %v247
      %v261 = vmul.f32 %v228, %v247
      %v262 = vmul.f32 %v229, %v247
      %v263 = vmul.f32 %v230, %v247
      %v264 = vmul.f32 %v231, %v247
      %v265 = vmul.f32 %v232, %v247
      %v266 = vmul.f32 %v233, %v247
      %v267 = vmul.f32 %v234, %v247
      %v268 = vmul.f32 %v235, %v247
      %v269 = vmul.f32 %v236, %v247
      %v270 = vmul.f32 %v237, %v247
      %v271 = vmul.f32 %v238, %v247
      %v272 = vmul.f32 %v239, %v247
      %v273 = vmul.f32 %v240, %v247
      %v274 = vmul.f32 %v241, %v247
      %v275 = vmul.f32 %v242, %v247
      %v276 = vmul.f32 %v243, %v247
      %v277 = vmul.f32 %v244, %v247
      %v278 = vmul.f32 %v245, %v247
      %v279 = vmul.f32 %v246, %v247
      %v280 = vperm.slane %v214, 0
      %v281 = vadd.f32 %v248, %v280
      %v282 = vadd.f32 %v249, %v280
      %v283 = vadd.f32 %v250, %v280
      %v284 = vadd.f32 %v251, %v280
      %v285 = vadd.f32 %v252, %v280
      %v286 = vadd.f32 %v253, %v280
      %v287 = vadd.f32 %v254, %v280
      %v288 = vadd.f32 %v255, %v280
      %v289 = vadd.f32 %v256, %v280
      %v290 = vadd.f32 %v257, %v280
      %v291 = vadd.f32 %v258, %v280
      %v292 = vadd.f32 %v259, %v280
      %v293 = vadd.f32 %v260, %v280
      %v294 = vadd.f32 %v261, %v280
      %v295 = vadd.f32 %v262, %v280
      %v296 = vadd.f32 %v263, %v280
      %v297 = vadd.f32 %v264, %v280
      %v298 = vadd.f32 %v265, %v280
      %v299 = vadd.f32 %v266, %v280
      %v300 = vadd.f32 %v267, %v280
      %v301 = vadd.f32 %v268, %v280
      %v302 = vadd.f32 %v269, %v280
      %v303 = vadd.f32 %v270, %v280
      %v304 = vadd.f32 %v271, %v280
      %v305 = vadd.f32 %v272, %v280
      %v306 = vadd.f32 %v273, %v280
      %v307 = vadd.f32 %v274, %v280
      %v308 = vadd.f32 %v275, %v280
      %v309 = vadd.f32 %v276, %v280
      %v310 = vadd.f32 %v277, %v280
      %v311 = vadd.f32 %v278, %v280
      %v312 = vadd.f32 %v279, %v280
      %v313 = vmax.f32 %v281, 0.0
      %v314 = vmax.f32 %v282, 0.0
      %v315 = vmax.f32 %v283, 0.0
      %v316 = vmax.f32 %v284, 0.0
      %v317 = vmax.f32 %v285, 0.0
      %v318 = vmax.f32 %v286, 0.0
      %v319 = vmax.f32 %v287, 0.0
      %v320 = vmax.f32 %v288, 0.0
      %v321 = vmax.f32 %v289, 0.0
      %v322 = vmax.f32 %v290, 0.0
      %v323 = vmax.f32 %v291, 0.0
      %v324 = vmax.f32 %v292, 0.0
      %v325 = vmax.f32 %v293, 0.0
      %v326 = vmax.f32 %v294, 0.0
      %v327 = vmax.f32 %v295, 0.0
      %v328 = vmax.f32 %v296, 0.0
      %v329 = vmax.f32 %v297, 0.0
      %v330 = vmax.f32 %v298, 0.0
      %v331 = vmax.f32 %v299, 0.0
      %v332 = vmax.f32 %v300, 0.0
      %v333 = vmax.f32 %v301, 0.0
      %v334 = vmax.f32 %v302, 0.0
      %v335 = vmax.f32 %v303, 0.0
      %v336 = vmax.f32 %v304, 0.0
      %v337 = vmax.f32 %v305, 0.0
      %v338 = vmax.f32 %v306, 0.0
      %v339 = vmax.f32 %v307, 0.0
      %v340 = vmax.f32 %v308, 0.0
      %v341 = vmax.f32 %v309, 0.0
      %v342 = vmax.f32 %v310, 0.0
      %v343 = vmax.f32 %v311, 0.0
      %v344 = vmax.f32 %v312, 0.0
      %v345 = vpack.c.bf16 %v314, %v313
      %v346 = vpack.c.bf16 %v316, %v315
      %v347 = vpack.c.bf16 %v318, %v317
      %v348 = vpack.c.bf16 %v320, %v319
      %v349 = vpack.c.bf16 %v322, %v321
      %v350 = vpack.c.bf16 %v324, %v323
      %v351 = vpack.c.bf16 %v326, %v325
      %v352 = vpack.c.bf16 %v328, %v327
      %v353 = vpack.c.bf16 %v330, %v329
      %v354 = vpack.c.bf16 %v332, %v331
      %v355 = vpack.c.bf16 %v334, %v333
      %v356 = vpack.c.bf16 %v336, %v335
      %v357 = vpack.c.bf16 %v338, %v337
      %v358 = vpack.c.bf16 %v340, %v339
      %v359 = vpack.c.bf16 %v342, %v341
      %v360 = vpack.c.bf16 %v344, %v343
      %v361 = vld [vmem:[%s1] sm:$0xf]
      %vm362 = vcmask 64512
      %v364 = vsel %vm362, %v345, 0
      %v367 = vsel %vm362, %v346, 0
      %v370 = vsel %vm362, %v347, 0
      %v373 = vsel %vm362, %v348, 0
      %v376 = vsel %vm362, %v349, 0
      %v379 = vsel %vm362, %v350, 0
      %v382 = vsel %vm362, %v351, 0
      %v385 = vsel %vm362, %v352, 0
      %v388 = vsel %vm362, %v353, 0
      %v391 = vsel %vm362, %v354, 0
      %v394 = vsel %vm362, %v355, 0
      %v397 = vsel %vm362, %v356, 0
      %v400 = vsel %vm362, %v357, 0
      %v403 = vsel %vm362, %v358, 0
      %v406 = vsel %vm362, %v359, 0
      %v409 = vsel %vm362, %v360, 0
      %vm411 = vcmask 1043456
      %v413 = vsel %vm411, %v361, 0
      %415 = vmatpush.bf16.msra.mxu0 0
      %416 = vmatpush.bf16.msra.mxu0 0
      %417 = vmatpush.bf16.msra.mxu0 0
      %418 = vmatpush.bf16.msra.mxu0 0
      %419 = vmatpush.bf16.msra.mxu0 0
      %420 = vmatpush.bf16.msra.mxu0 0
      %421 = vmatpush.bf16.msra.mxu0 0
      %422 = vmatpush.bf16.msra.mxu0 %v413
      %423 = vmatmul.bf16.gmra.mxu0 %v364
      %v424 = vpop.f32.mrf.mxu0
      %v425 = vadd.f32 0.0, %v424
      %v426 = vpop.f32.mrf.mxu0
      %v427 = vadd.f32 0.0, %v426
      %428 = vmatmul.bf16.gmra.mxu0 %v367
      %v429 = vpop.f32.mrf.mxu0
      %v430 = vadd.f32 0.0, %v429
      %v431 = vpop.f32.mrf.mxu0
      %v432 = vadd.f32 0.0, %v431
      %433 = vmatmul.bf16.gmra.mxu0 %v370
      %v434 = vpop.f32.mrf.mxu0
      %v435 = vadd.f32 0.0, %v434
      %v436 = vpop.f32.mrf.mxu0
      %v437 = vadd.f32 0.0, %v436
      %438 = vmatmul.bf16.gmra.mxu0 %v373
      %v439 = vpop.f32.mrf.mxu0
      %v440 = vadd.f32 0.0, %v439
      %v441 = vpop.f32.mrf.mxu0
      %v442 = vadd.f32 0.0, %v441
      %443 = vmatmul.bf16.gmra.mxu0 %v376
      %v444 = vpop.f32.mrf.mxu0
      %v445 = vadd.f32 0.0, %v444
      %v446 = vpop.f32.mrf.mxu0
      %v447 = vadd.f32 0.0, %v446
      %448 = vmatmul.bf16.gmra.mxu0 %v379
      %v449 = vpop.f32.mrf.mxu0
      %v450 = vadd.f32 0.0, %v449
      %v451 = vpop.f32.mrf.mxu0
      %v452 = vadd.f32 0.0, %v451
      %453 = vmatmul.bf16.gmra.mxu0 %v382
      %v454 = vpop.f32.mrf.mxu0
      %v455 = vadd.f32 0.0, %v454
      %v456 = vpop.f32.mrf.mxu0
      %v457 = vadd.f32 0.0, %v456
      %458 = vmatmul.bf16.gmra.mxu0 %v385
      %v459 = vpop.f32.mrf.mxu0
      %v460 = vadd.f32 0.0, %v459
      %v461 = vpop.f32.mrf.mxu0
      %v462 = vadd.f32 0.0, %v461
      %463 = vmatmul.bf16.gmra.mxu0 %v388
      %v464 = vpop.f32.mrf.mxu0
      %v465 = vadd.f32 0.0, %v464
      %v466 = vpop.f32.mrf.mxu0
      %v467 = vadd.f32 0.0, %v466
      %468 = vmatmul.bf16.gmra.mxu0 %v391
      %v469 = vpop.f32.mrf.mxu0
      %v470 = vadd.f32 0.0, %v469
      %v471 = vpop.f32.mrf.mxu0
      %v472 = vadd.f32 0.0, %v471
      %473 = vmatmul.bf16.gmra.mxu0 %v394
      %v474 = vpop.f32.mrf.mxu0
      %v475 = vadd.f32 0.0, %v474
      %v476 = vpop.f32.mrf.mxu0
      %v477 = vadd.f32 0.0, %v476
      %478 = vmatmul.bf16.gmra.mxu0 %v397
      %v479 = vpop.f32.mrf.mxu0
      %v480 = vadd.f32 0.0, %v479
      %v481 = vpop.f32.mrf.mxu0
      %v482 = vadd.f32 0.0, %v481
      %483 = vmatmul.bf16.gmra.mxu0 %v400
      %v484 = vpop.f32.mrf.mxu0
      %v485 = vadd.f32 0.0, %v484
      %v486 = vpop.f32.mrf.mxu0
      %v487 = vadd.f32 0.0, %v486
      %488 = vmatmul.bf16.gmra.mxu0 %v403
      %v489 = vpop.f32.mrf.mxu0
      %v490 = vadd.f32 0.0, %v489
      %v491 = vpop.f32.mrf.mxu0
      %v492 = vadd.f32 0.0, %v491
      %493 = vmatmul.bf16.gmra.mxu0 %v406
      %v494 = vpop.f32.mrf.mxu0
      %v495 = vadd.f32 0.0, %v494
      %v496 = vpop.f32.mrf.mxu0
      %v497 = vadd.f32 0.0, %v496
      %498 = vmatmul.bf16.gmra.mxu0 %v409
      %v499 = vpop.f32.mrf.mxu0
      %v500 = vadd.f32 0.0, %v499
      %v501 = vpop.f32.mrf.mxu0
      %v502 = vadd.f32 0.0, %v501
      %503 = vdwg.mxu0
      %vm504 = vcmask 31744
      %505 = vst.msk [vmem:[%s206] sm:$0xff] %vm504, %v425
      %506 = vst.msk [vmem:[%s206 + $0x8] sm:$0xff] %vm504, %v427
      %507 = vst.msk [vmem:[%s206 + $0x10] sm:$0xff] %vm504, %v430
      %508 = vst.msk [vmem:[%s206 + $0x18] sm:$0xff] %vm504, %v432
      %509 = vst.msk [vmem:[%s206 + $0x20] sm:$0xff] %vm504, %v435
      %510 = vst.msk [vmem:[%s206 + $0x28] sm:$0xff] %vm504, %v437
      %511 = vst.msk [vmem:[%s206 + $0x30] sm:$0xff] %vm504, %v440
      %512 = vst.msk [vmem:[%s206 + $0x38] sm:$0xff] %vm504, %v442
      %513 = vst.msk [vmem:[%s206 + $0x40] sm:$0xff] %vm504, %v445
      %514 = vst.msk [vmem:[%s206 + $0x48] sm:$0xff] %vm504, %v447
      %515 = vst.msk [vmem:[%s206 + $0x50] sm:$0xff] %vm504, %v450
      %516 = vst.msk [vmem:[%s206 + $0x58] sm:$0xff] %vm504, %v452
      %517 = vst.msk [vmem:[%s206 + $0x60] sm:$0xff] %vm504, %v455
      %518 = vst.msk [vmem:[%s206 + $0x68] sm:$0xff] %vm504, %v457
      %519 = vst.msk [vmem:[%s206 + $0x70] sm:$0xff] %vm504, %v460
      %520 = vst.msk [vmem:[%s206 + $0x78] sm:$0xff] %vm504, %v462
      %521 = vst.msk [vmem:[%s206 + $0x80] sm:$0xff] %vm504, %v465
      %522 = vst.msk [vmem:[%s206 + $0x88] sm:$0xff] %vm504, %v467
      %523 = vst.msk [vmem:[%s206 + $0x90] sm:$0xff] %vm504, %v470
      %524 = vst.msk [vmem:[%s206 + $0x98] sm:$0xff] %vm504, %v472
      %525 = vst.msk [vmem:[%s206 + $0xa0] sm:$0xff] %vm504, %v475
      %526 = vst.msk [vmem:[%s206 + $0xa8] sm:$0xff] %vm504, %v477
      %527 = vst.msk [vmem:[%s206 + $0xb0] sm:$0xff] %vm504, %v480
      %528 = vst.msk [vmem:[%s206 + $0xb8] sm:$0xff] %vm504, %v482
      %529 = vst.msk [vmem:[%s206 + $0xc0] sm:$0xff] %vm504, %v485
      %530 = vst.msk [vmem:[%s206 + $0xc8] sm:$0xff] %vm504, %v487
      %531 = vst.msk [vmem:[%s206 + $0xd0] sm:$0xff] %vm504, %v490
      %532 = vst.msk [vmem:[%s206 + $0xd8] sm:$0xff] %vm504, %v492
      %533 = vst.msk [vmem:[%s206 + $0xe0] sm:$0xff] %vm504, %v495
      %534 = vst.msk [vmem:[%s206 + $0xe8] sm:$0xff] %vm504, %v497
      %535 = vst.msk [vmem:[%s206 + $0xf0] sm:$0xff] %vm504, %v500
      %536 = vst.msk [vmem:[%s206 + $0xf8] sm:$0xff] %vm504, %v502
      %v537 = vsel %vm504, %v425, 0.0
      %v538 = vsel %vm504, %v427, 0.0
      %v539 = vadd.f32 %v537, %v538
      %v540 = vsel %vm504, %v430, 0.0
      %v541 = vadd.f32 %v539, %v540
      %v542 = vsel %vm504, %v432, 0.0
      %v543 = vadd.f32 %v541, %v542
      %v544 = vsel %vm504, %v435, 0.0
      %v545 = vadd.f32 %v543, %v544
      %v546 = vsel %vm504, %v437, 0.0
      %v547 = vadd.f32 %v545, %v546
      %v548 = vsel %vm504, %v440, 0.0
      %v549 = vadd.f32 %v547, %v548
      %v550 = vsel %vm504, %v442, 0.0
      %v551 = vadd.f32 %v549, %v550
      %v552 = vsel %vm504, %v445, 0.0
      %v553 = vadd.f32 %v551, %v552
      %v554 = vsel %vm504, %v447, 0.0
      %v555 = vadd.f32 %v553, %v554
      %v556 = vsel %vm504, %v450, 0.0
      %v557 = vadd.f32 %v555, %v556
      %v558 = vsel %vm504, %v452, 0.0
      %v559 = vadd.f32 %v557, %v558
      %v560 = vsel %vm504, %v455, 0.0
      %v561 = vadd.f32 %v559, %v560
      %v562 = vsel %vm504, %v457, 0.0
      %v563 = vadd.f32 %v561, %v562
      %v564 = vsel %vm504, %v460, 0.0
      %v565 = vadd.f32 %v563, %v564
      %v566 = vsel %vm504, %v462, 0.0
      %v567 = vadd.f32 %v565, %v566
      %v568 = vsel %vm504, %v465, 0.0
      %v569 = vadd.f32 %v567, %v568
      %v570 = vsel %vm504, %v467, 0.0
      %v571 = vadd.f32 %v569, %v570
      %v572 = vsel %vm504, %v470, 0.0
      %v573 = vadd.f32 %v571, %v572
      %v574 = vsel %vm504, %v472, 0.0
      %v575 = vadd.f32 %v573, %v574
      %v576 = vsel %vm504, %v475, 0.0
      %v577 = vadd.f32 %v575, %v576
      %v578 = vsel %vm504, %v477, 0.0
      %v579 = vadd.f32 %v577, %v578
      %v580 = vsel %vm504, %v480, 0.0
      %v581 = vadd.f32 %v579, %v580
      %v582 = vsel %vm504, %v482, 0.0
      %v583 = vadd.f32 %v581, %v582
      %v584 = vsel %vm504, %v485, 0.0
      %v585 = vadd.f32 %v583, %v584
      %v586 = vsel %vm504, %v487, 0.0
      %v587 = vadd.f32 %v585, %v586
      %v588 = vsel %vm504, %v490, 0.0
      %v589 = vadd.f32 %v587, %v588
      %v590 = vsel %vm504, %v492, 0.0
      %v591 = vadd.f32 %v589, %v590
      %v592 = vsel %vm504, %v495, 0.0
      %v593 = vadd.f32 %v591, %v592
      %v594 = vsel %vm504, %v497, 0.0
      %v595 = vadd.f32 %v593, %v594
      %v596 = vsel %vm504, %v500, 0.0
      %v597 = vadd.f32 %v595, %v596
      %v598 = vsel %vm504, %v502, 0.0
      %v599 = vadd.f32 %v597, %v598
      %v600 = vrot.slane %v599, 4
      %v601 = vadd.f32 %v599, %v600
      %v602 = vrot.slane %v601, 2
      %v603 = vadd.f32 %v601, %v602
      %v604 = vrot.slane %v603, 1
      %v605 = vadd.f32 %v603, %v604
      %vm606 = vcmask 24576
      %607 = vst.msk [vmem:[%s211] sm:$0x1] %vm606, %v605
      %v608 = vmul.f32 %v425, %v425
      %v609 = vmul.f32 %v427, %v427
      %v610 = vmul.f32 %v430, %v430
      %v611 = vmul.f32 %v432, %v432
      %v612 = vmul.f32 %v435, %v435
      %v613 = vmul.f32 %v437, %v437
      %v614 = vmul.f32 %v440, %v440
      %v615 = vmul.f32 %v442, %v442
      %v616 = vmul.f32 %v445, %v445
      %v617 = vmul.f32 %v447, %v447
      %v618 = vmul.f32 %v450, %v450
      %v619 = vmul.f32 %v452, %v452
      %v620 = vmul.f32 %v455, %v455
      %v621 = vmul.f32 %v457, %v457
      %v622 = vmul.f32 %v460, %v460
      %v623 = vmul.f32 %v462, %v462
      %v624 = vmul.f32 %v465, %v465
      %v625 = vmul.f32 %v467, %v467
      %v626 = vmul.f32 %v470, %v470
      %v627 = vmul.f32 %v472, %v472
      %v628 = vmul.f32 %v475, %v475
      %v629 = vmul.f32 %v477, %v477
      %v630 = vmul.f32 %v480, %v480
      %v631 = vmul.f32 %v482, %v482
      %v632 = vmul.f32 %v485, %v485
      %v633 = vmul.f32 %v487, %v487
      %v634 = vmul.f32 %v490, %v490
      %v635 = vmul.f32 %v492, %v492
      %v636 = vmul.f32 %v495, %v495
      %v637 = vmul.f32 %v497, %v497
      %v638 = vmul.f32 %v500, %v500
      %v639 = vmul.f32 %v502, %v502
      %v640 = vsel %vm504, %v608, 0.0
      %v641 = vsel %vm504, %v609, 0.0
      %v642 = vadd.f32 %v640, %v641
      %v643 = vsel %vm504, %v610, 0.0
      %v644 = vadd.f32 %v642, %v643
      %v645 = vsel %vm504, %v611, 0.0
      %v646 = vadd.f32 %v644, %v645
      %v647 = vsel %vm504, %v612, 0.0
      %v648 = vadd.f32 %v646, %v647
      %v649 = vsel %vm504, %v613, 0.0
      %v650 = vadd.f32 %v648, %v649
      %v651 = vsel %vm504, %v614, 0.0
      %v652 = vadd.f32 %v650, %v651
      %v653 = vsel %vm504, %v615, 0.0
      %v654 = vadd.f32 %v652, %v653
      %v655 = vsel %vm504, %v616, 0.0
      %v656 = vadd.f32 %v654, %v655
      %v657 = vsel %vm504, %v617, 0.0
      %v658 = vadd.f32 %v656, %v657
      %v659 = vsel %vm504, %v618, 0.0
      %v660 = vadd.f32 %v658, %v659
      %v661 = vsel %vm504, %v619, 0.0
      %v662 = vadd.f32 %v660, %v661
      %v663 = vsel %vm504, %v620, 0.0
      %v664 = vadd.f32 %v662, %v663
      %v665 = vsel %vm504, %v621, 0.0
      %v666 = vadd.f32 %v664, %v665
      %v667 = vsel %vm504, %v622, 0.0
      %v668 = vadd.f32 %v666, %v667
      %v669 = vsel %vm504, %v623, 0.0
      %v670 = vadd.f32 %v668, %v669
      %v671 = vsel %vm504, %v624, 0.0
      %v672 = vadd.f32 %v670, %v671
      %v673 = vsel %vm504, %v625, 0.0
      %v674 = vadd.f32 %v672, %v673
      %v675 = vsel %vm504, %v626, 0.0
      %v676 = vadd.f32 %v674, %v675
      %v677 = vsel %vm504, %v627, 0.0
      %v678 = vadd.f32 %v676, %v677
      %v679 = vsel %vm504, %v628, 0.0
      %v680 = vadd.f32 %v678, %v679
      %v681 = vsel %vm504, %v629, 0.0
      %v682 = vadd.f32 %v680, %v681
      %v683 = vsel %vm504, %v630, 0.0
      %v684 = vadd.f32 %v682, %v683
      %v685 = vsel %vm504, %v631, 0.0
      %v686 = vadd.f32 %v684, %v685
      %v687 = vsel %vm504, %v632, 0.0
      %v688 = vadd.f32 %v686, %v687
      %v689 = vsel %vm504, %v633, 0.0
      %v690 = vadd.f32 %v688, %v689
      %v691 = vsel %vm504, %v634, 0.0
      %v692 = vadd.f32 %v690, %v691
      %v693 = vsel %vm504, %v635, 0.0
      %v694 = vadd.f32 %v692, %v693
      %v695 = vsel %vm504, %v636, 0.0
      %v696 = vadd.f32 %v694, %v695
      %v697 = vsel %vm504, %v637, 0.0
      %v698 = vadd.f32 %v696, %v697
      %v699 = vsel %vm504, %v638, 0.0
      %v700 = vadd.f32 %v698, %v699
      %v701 = vsel %vm504, %v639, 0.0
      %v702 = vadd.f32 %v700, %v701
      %v703 = vrot.slane %v702, 4
      %v704 = vadd.f32 %v702, %v703
      %v705 = vrot.slane %v704, 2
      %v706 = vadd.f32 %v704, %v705
      %v707 = vrot.slane %v706, 1
      %v708 = vadd.f32 %v706, %v707
      %709 = vst.msk [vmem:[%s211 + $0x1] sm:$0x1] %vm606, %v708
      %s710 = smul.u32 32, %s16
      %p711 = scmp.lt.s32.totalorder %s710, 63
      %s712 = scalar_select %p711, %s710, 63
      %s713 = smul.addr %s712, 8
      %s714 = scalar_lea.vmem %s3, %s713
      %p715 = scmp.lt.s32.totalorder %s16, 1
      %s716 = scalar_select %p715, %s16, 1
      %s717 = smul.addr %s716, 2
      %s718 = scalar_lea.vmem %s4, %s717
      // Predicated region
      $region33: #{bottleneck_block.6} parent=31 // pred_check
        %p719 = pneg %p102
      $region34: #{bottleneck_block.6} parent=31 // pred_check_branch
        %721 = sbr.rel (%p719) target = $region36
      $region35: #{bottleneck_block.6} parent=31 // pred_region
        %s722 = smul.u32 32, %s16
      $region36: #{bottleneck_block.6} parent=31 // pred_fallthru
        _
      // Predicated region
      $region37: #{bottleneck_block.6} parent=31 // pred_check
        %p723 = pneg %p128
      $region38: #{bottleneck_block.6} parent=31 // pred_check_branch
        %725 = sbr.rel (%p723) target = $region40
      $region39: #{bottleneck_block.6} parent=31 // pred_region
        _
      $region40: #{bottleneck_block.6} parent=31 // pred_fallthru
        _
    $region32: #{bottleneck_block.6} parent=5 // pred_fallthru
      _
    %p726 = scmp.le.s32.totalorder 2, %s11
    // Predicated region
    $region41: #{bottleneck_block.6} parent=5 // pred_check
      %p727 = pneg %p726
    $region42: #{bottleneck_block.6} parent=5 // pred_check_branch
      %729 = sbr.rel (%p727) target = $region44
    $region43: #{bottleneck_block.6} parent=5 // pred_region
      %s730 = ssub.s32 %s11, 2
      // Predicated region
      $region45: #{bottleneck_block.6} parent=43 // pred_check
        %p731 = pneg %p108
      $region46: #{bottleneck_block.6} parent=43 // pred_check_branch
        %733 = sbr.rel (%p731) target = $region48
      $region47: #{bottleneck_block.6} parent=43 // pred_region
        %s734 = smul.u32 32, %s17
        %p735 = scmp.lt.s32.totalorder %s734, 63
        %s736 = scalar_select %p735, %s734, 63
        %s737 = smul.addr %s736, 8
        %s738 = scalar_lea.vmem %s3, %s737
      $region48: #{bottleneck_block.6} parent=43 // pred_fallthru
        _
      // Predicated region
      $region49: #{bottleneck_block.6} parent=43 // pred_check
        %p739 = pneg %p134
      $region50: #{bottleneck_block.6} parent=43 // pred_check_branch
        %741 = sbr.rel (%p739) target = $region52
      $region51: #{bottleneck_block.6} parent=43 // pred_region
        %p742 = scmp.lt.s32.totalorder %s17, 1
        %s743 = scalar_select %p742, %s17, 1
        %s744 = smul.addr %s743, 2
        %s745 = scalar_lea.vmem %s4, %s744
      $region52: #{bottleneck_block.6} parent=43 // pred_fallthru
        _
    $region44: #{bottleneck_block.6} parent=5 // pred_fallthru
      _
  $region6: #{bottleneck_block.6} parent=0 // loop_footer
    %s15 = sadd.s32 1, %s11
  $region7: #{bottleneck_block.6} parent=0 // loop_footer_branch
    %10 = sbr.rel target = $region3
  $region8: #{bottleneck_block.6} parent=0 // loop_exit
    _

// kernel: bottleneck_block.7
$region0: #{bottleneck_block.7}
  #allocation0 [shape = 'u32[]', space=smem, size = 0x4, offset = 0x4, fixed_abs, tag = 'smem constant byte address 0x4 - core index']
  #allocation1 [shape = 'u32[72,128]{1,0:T(1,128)}', space=vmem, size = 0x9000, scoped, tag = 'internal scratch']
  %s0 = inlined_call_operand.vmem [shape: f32[512,4], index: 0, kind: input, shape index: {}]
  %s1 = inlined_call_operand.vmem [shape: f32[512,4], index: 1, kind: input, shape index: {}]
  %s2 = inlined_call_operand.vmem [shape: f32[2,4], index: 2, kind: input, shape index: {}]
  %s3 = inlined_call_operand.vmem [shape: f32[512,4], index: 3, kind: output, shape index: {}]
  %s4 = sld [smem:[#allocation0]]
  $region45: #{bottleneck_block.7} parent=0
    _
  %s6 = ssub.s32 1, %s4
  %s7 = scalar_select 0, %s6, %s4
  loop: start=0, step=1, limit=4
  $region2: #{bottleneck_block.7} parent=0 // loop_pre_header
    _
  $region3: #{bottleneck_block.7} parent=0 // loop_header
    %s9 = sphi 0, %s13
    %p10 = scmp.ge.s32.totalorder %s9, 4
    %s19 = sphi 0, %s21
    %s22 = sphi 0, %s19
    %s23 = sphi 0, %s22
    %s39 = sphi 0, %s23
    %s45 = sphi 0, %s47
    %s48 = sphi 0, %s45
    %s49 = sphi 0, %s48
    %s65 = sphi 0, %s49
    %s69 = sphi 0, %s69
    %s71 = sphi 0, %s69
    %s72 = sphi 0, %s71
    %s86 = sphi 0, %s72
    %s92 = sphi 0, %s94
    %s95 = sphi 0, %s92
    %s96 = sphi 0, %s95
    %s112 = sphi 0, %s96
  $region4: #{bottleneck_block.7} parent=0 // loop_header_branch
    %12 = sbr.rel (%p10) target = $region8
  $region5: #{bottleneck_block.7} parent=0 // loop_body
    %s14 = ssub.s32 %s9, 1
    %s15 = ssub.s32 %s9, 2
    %s16 = sadd.s32 %s9, 1
    %s17 = ssub.s32 %s9, %s16
    %p18 = scmp.eq.s32.totalorder %s17, 0
    %s20 = sadd.s32 %s19, 1
    %s21 = scalar_select %p18, %s19, %s20
    %p24 = pneg %p18
    %p25 = scmp.eq.s32.totalorder %s9, 1
    %p26 = por %p24, %p25
    %p27 = scmp.ne.s32.totalorder %s19, %s22
    %p28 = scmp.eq.s32.totalorder %s9, 0
    %p29 = por %p27, %p28
    %p30 = scmp.ne.s32.totalorder %s19, %s22
    %p31 = scmp.eq.s32.totalorder %s14, 1
    %p32 = por %p30, %p31
    %p33 = scmp.ne.s32.totalorder %s22, %s23
    %p34 = scmp.eq.s32.totalorder %s14, 0
    %p35 = por %p33, %p34
    %p36 = scmp.ne.s32.totalorder %s22, %s23
    %p37 = scmp.eq.s32.totalorder %s15, 1
    %p38 = por %p36, %p37
    %p40 = scmp.ne.s32.totalorder %s23, %s39
    %p41 = scmp.eq.s32.totalorder %s15, 0
    %p42 = por %p40, %p41
    %s43 = ssub.s32 %s9, %s16
    %p44 = scmp.eq.s32.totalorder %s43, 0
    %s46 = sadd.s32 %s45, 1
    %s47 = scalar_select %p44, %s45, %s46
    %p50 = pneg %p44
    %p51 = scmp.eq.s32.totalorder %s9, 1
    %p52 = por %p50, %p51
    %p53 = scmp.ne.s32.totalorder %s45, %s48
    %p54 = scmp.eq.s32.totalorder %s9, 0
    %p55 = por %p53, %p54
    %p56 = scmp.ne.s32.totalorder %s45, %s48
    %p57 = scmp.eq.s32.totalorder %s14, 1
    %p58 = por %p56, %p57
    %p59 = scmp.ne.s32.totalorder %s48, %s49
    %p60 = scmp.eq.s32.totalorder %s14, 0
    %p61 = por %p59, %p60
    %p62 = scmp.ne.s32.totalorder %s48, %s49
    %p63 = scmp.eq.s32.totalorder %s15, 1
    %p64 = por %p62, %p63
    %p66 = scmp.ne.s32.totalorder %s49, %s65
    %p67 = scmp.eq.s32.totalorder %s15, 0
    %p68 = por %p66, %p67
    %s70 = sadd.s32 %s69, 1
    %p73 = scmp.eq.s32.totalorder %s9, 1
    %p74 = scmp.ne.s32.totalorder %s69, %s71
    %p75 = scmp.eq.s32.totalorder %s9, 0
    %p76 = por %p74, %p75
    %p77 = scmp.ne.s32.totalorder %s69, %s71
    %p78 = scmp.eq.s32.totalorder %s14, 1
    %p79 = por %p77, %p78
    %p80 = scmp.ne.s32.totalorder %s71, %s72
    %p81 = scmp.eq.s32.totalorder %s14, 0
    %p82 = por %p80, %p81
    %p83 = scmp.ne.s32.totalorder %s71, %s72
    %p84 = scmp.eq.s32.totalorder %s15, 1
    %p85 = por %p83, %p84
    %p87 = scmp.ne.s32.totalorder %s72, %s86
    %p88 = scmp.eq.s32.totalorder %s15, 0
    %p89 = por %p87, %p88
    %s90 = ssub.s32 %s9, %s16
    %p91 = scmp.eq.s32.totalorder %s90, 0
    %s93 = sadd.s32 %s92, 1
    %s94 = scalar_select %p91, %s92, %s93
    %p97 = pneg %p91
    %p98 = scmp.eq.s32.totalorder %s9, 1
    %p99 = por %p97, %p98
    %p100 = scmp.ne.s32.totalorder %s92, %s95
    %p101 = scmp.eq.s32.totalorder %s9, 0
    %p102 = por %p100, %p101
    %p103 = scmp.ne.s32.totalorder %s92, %s95
    %p104 = scmp.eq.s32.totalorder %s14, 1
    %p105 = por %p103, %p104
    %p106 = scmp.ne.s32.totalorder %s95, %s96
    %p107 = scmp.eq.s32.totalorder %s14, 0
    %p108 = por %p106, %p107
    %p109 = scmp.ne.s32.totalorder %s95, %s96
    %p110 = scmp.eq.s32.totalorder %s15, 1
    %p111 = por %p109, %p110
    %p113 = scmp.ne.s32.totalorder %s96, %s112
    %p114 = scmp.eq.s32.totalorder %s15, 0
    %p115 = por %p113, %p114
    %p116 = scmp.le.s32.totalorder 1, %s9
    %p117 = scmp.lt.s32.totalorder %s9, 3
    %p118 = pnand %p116, %p117
    %p119 = pneg %p118
    // Predicated region
    $region9: #{bottleneck_block.7} parent=5 // pred_check
      _
    $region10: #{bottleneck_block.7} parent=5 // pred_check_branch
      %121 = sbr.rel (%p118) target = $region12
    $region11: #{bottleneck_block.7} parent=5 // pred_region
      %s122 = ssub.s32 %s9, 1
      // Predicated region
      $region13: #{bottleneck_block.7} parent=11 // pred_check
        %p123 = pneg %p82
      $region14: #{bottleneck_block.7} parent=11 // pred_check_branch
        %125 = sbr.rel (%p123) target = $region16
      $region15: #{bottleneck_block.7} parent=11 // pred_region
        _
      $region16: #{bottleneck_block.7} parent=11 // pred_fallthru
        _
    $region12: #{bottleneck_block.7} parent=5 // pred_fallthru
      _
    %p126 = scmp.lt.s32.totalorder %s9, 2
    // Predicated region
    $region17: #{bottleneck_block.7} parent=5 // pred_check
      %p127 = pneg %p126
    $region18: #{bottleneck_block.7} parent=5 // pred_check_branch
      %129 = sbr.rel (%p127) target = $region20
    $region19: #{bottleneck_block.7} parent=5 // pred_region
      // Predicated region
      $region21: #{bottleneck_block.7} parent=19 // pred_check
        %p130 = pneg %p29
      $region22: #{bottleneck_block.7} parent=19 // pred_check_branch
        %132 = sbr.rel (%p130) target = $region24
      $region23: #{bottleneck_block.7} parent=19 // pred_region
        %s133 = smul.u32 32, %s9
        %p134 = scmp.lt.s32.totalorder %s133, 63
        %s135 = scalar_select %p134, %s133, 63
        %s136 = smul.addr %s135, 8
        %s137 = scalar_lea.vmem %s0, %s136
        %s138 = smul.u32 32, %s9
      $region24: #{bottleneck_block.7} parent=19 // pred_fallthru
        _
      // Predicated region
      $region25: #{bottleneck_block.7} parent=19 // pred_check
        %p139 = pneg %p55
      $region26: #{bottleneck_block.7} parent=19 // pred_check_branch
        %141 = sbr.rel (%p139) target = $region28
      $region27: #{bottleneck_block.7} parent=19 // pred_region
        %s142 = smul.u32 32, %s9
        %p143 = scmp.lt.s32.totalorder %s142, 63
        %s144 = scalar_select %p143, %s142, 63
        %s145 = smul.addr %s144, 8
        %s146 = scalar_lea.vmem %s1, %s145
        %s147 = smul.u32 32, %s9
      $region28: #{bottleneck_block.7} parent=19 // pred_fallthru
        _
    $region20: #{bottleneck_block.7} parent=5 // pred_fallthru
      _
    %p148 = scmp.le.s32.totalorder 1, %s9
    %p149 = scmp.lt.s32.totalorder %s9, 3
    %p150 = pnand %p148, %p149
    %p151 = pneg %p150
    // Predicated region
    $region29: #{bottleneck_block.7} parent=5 // pred_check
      _
    $region30: #{bottleneck_block.7} parent=5 // pred_check_branch
      %153 = sbr.rel (%p150) target = $region32
    $region31: #{bottleneck_block.7} parent=5 // pred_region
      %s154 = ssub.s32 %s9, 1
      %s155 = smul.u32 32, %s14
      %p156 = scmp.lt.s32.totalorder %s155, 63
      %s157 = scalar_select %p156, %s155, 63
      %s158 = smul.addr %s157, 8
      %s159 = scalar_lea.vmem %s0, %s158
      %p160 = pneg %p35
      %p161 = pneg %p32
      %s162 = smul.u32 32, %s14
      %p163 = scmp.lt.s32.totalorder %s162, 63
      %s164 = scalar_select %p163, %s162, 63
      %s165 = smul.addr %s164, 8
      %s166 = scalar_lea.vmem %s1, %s165
      %p167 = pneg %p61
      %p168 = pneg %p58
      %p169 = pneg %p82
      %p170 = pneg %p79
      %p171 = pneg %p108
      %p172 = pneg %p105
      %s173 = smul.u32 32, %s14
      %p174 = scmp.lt.s32.totalorder %s173, 63
      %s175 = scalar_select %p174, %s173, 63
      %s176 = smul.addr %s175, 8
      %s177 = scalar_lea.vmem %s3, %s176
      %s178 = smul.u32 32, %s14
      %p179 = scmp.lt.s32.totalorder %s178, 63
      %s180 = scalar_select %p179, %s178, 63
      %s181 = smul.addr %s180, 8
      %s182 = scalar_lea.vmem %s0, %s181
      %s183 = smul.u32 32, %s14
      %s184 = smul.u32 32, %s14
      %p185 = scmp.lt.s32.totalorder %s184, 63
      %s186 = scalar_select %p185, %s184, 63
      %s187 = smul.addr %s186, 8
      %s188 = scalar_lea.vmem %s1, %s187
      %s189 = smul.u32 32, %s14
      %s190 = smul.u32 32, %s14
      %p191 = scmp.lt.s32.totalorder %s190, 63
      %s192 = scalar_select %p191, %s190, 63
      %s193 = smul.addr %s192, 8
      %s194 = scalar_lea.vmem %s3, %s193
      %s195 = smul.u32 32, %s14
      %v196 = vld [vmem:[%s2] sm:$0x1]
      %v197 = vld [vmem:[%s2 + $0x1] sm:$0x1]
      %v198 = vld [vmem:[%s182] sm:$0xff]
      %v199 = vld [vmem:[%s182 + $0x8] sm:$0xff]
      %v200 = vld [vmem:[%s182 + $0x10] sm:$0xff]
      %v201 = vld [vmem:[%s182 + $0x18] sm:$0xff]
      %v202 = vld [vmem:[%s182 + $0x20] sm:$0xff]
      %v203 = vld [vmem:[%s182 + $0x28] sm:$0xff]
      %v204 = vld [vmem:[%s182 + $0x30] sm:$0xff]
      %v205 = vld [vmem:[%s182 + $0x38] sm:$0xff]
      %v206 = vld [vmem:[%s182 + $0x40] sm:$0xff]
      %v207 = vld [vmem:[%s182 + $0x48] sm:$0xff]
      %v208 = vld [vmem:[%s182 + $0x50] sm:$0xff]
      %v209 = vld [vmem:[%s182 + $0x58] sm:$0xff]
      %v210 = vld [vmem:[%s182 + $0x60] sm:$0xff]
      %v211 = vld [vmem:[%s182 + $0x68] sm:$0xff]
      %v212 = vld [vmem:[%s182 + $0x70] sm:$0xff]
      %v213 = vld [vmem:[%s182 + $0x78] sm:$0xff]
      %v214 = vld [vmem:[%s182 + $0x80] sm:$0xff]
      %v215 = vld [vmem:[%s182 + $0x88] sm:$0xff]
      %v216 = vld [vmem:[%s182 + $0x90] sm:$0xff]
      %v217 = vld [vmem:[%s182 + $0x98] sm:$0xff]
      %v218 = vld [vmem:[%s182 + $0xa0] sm:$0xff]
      %v219 = vld [vmem:[%s182 + $0xa8] sm:$0xff]
      %v220 = vld [vmem:[%s182 + $0xb0] sm:$0xff]
      %v221 = vld [vmem:[%s182 + $0xb8] sm:$0xff]
      %v222 = vld [vmem:[%s182 + $0xc0] sm:$0xff]
      %v223 = vld [vmem:[%s182 + $0xc8] sm:$0xff]
      %v224 = vld [vmem:[%s182 + $0xd0] sm:$0xff]
      %v225 = vld [vmem:[%s182 + $0xd8] sm:$0xff]
      %v226 = vld [vmem:[%s182 + $0xe0] sm:$0xff]
      %v227 = vld [vmem:[%s182 + $0xe8] sm:$0xff]
      %v228 = vld [vmem:[%s182 + $0xf0] sm:$0xff]
      %v229 = vld [vmem:[%s182 + $0xf8] sm:$0xff]
      %v230 = vperm.slane %v196, 0
      %v231 = vmul.f32 %v198, %v230
      %v232 = vmul.f32 %v199, %v230
      %v233 = vmul.f32 %v200, %v230
      %v234 = vmul.f32 %v201, %v230
      %v235 = vmul.f32 %v202, %v230
      %v236 = vmul.f32 %v203, %v230
      %v237 = vmul.f32 %v204, %v230
      %v238 = vmul.f32 %v205, %v230
      %v239 = vmul.f32 %v206, %v230
      %v240 = vmul.f32 %v207, %v230
      %v241 = vmul.f32 %v208, %v230
      %v242 = vmul.f32 %v209, %v230
      %v243 = vmul.f32 %v210, %v230
      %v244 = vmul.f32 %v211, %v230
      %v245 = vmul.f32 %v212, %v230
      %v246 = vmul.f32 %v213, %v230
      %v247 = vmul.f32 %v214, %v230
      %v248 = vmul.f32 %v215, %v230
      %v249 = vmul.f32 %v216, %v230
      %v250 = vmul.f32 %v217, %v230
      %v251 = vmul.f32 %v218, %v230
      %v252 = vmul.f32 %v219, %v230
      %v253 = vmul.f32 %v220, %v230
      %v254 = vmul.f32 %v221, %v230
      %v255 = vmul.f32 %v222, %v230
      %v256 = vmul.f32 %v223, %v230
      %v257 = vmul.f32 %v224, %v230
      %v258 = vmul.f32 %v225, %v230
      %v259 = vmul.f32 %v226, %v230
      %v260 = vmul.f32 %v227, %v230
      %v261 = vmul.f32 %v228, %v230
      %v262 = vmul.f32 %v229, %v230
      %v263 = vperm.slane %v197, 0
      %v264 = vadd.f32 %v231, %v263
      %v265 = vadd.f32 %v232, %v263
      %v266 = vadd.f32 %v233, %v263
      %v267 = vadd.f32 %v234, %v263
      %v268 = vadd.f32 %v235, %v263
      %v269 = vadd.f32 %v236, %v263
      %v270 = vadd.f32 %v237, %v263
      %v271 = vadd.f32 %v238, %v263
      %v272 = vadd.f32 %v239, %v263
      %v273 = vadd.f32 %v240, %v263
      %v274 = vadd.f32 %v241, %v263
      %v275 = vadd.f32 %v242, %v263
      %v276 = vadd.f32 %v243, %v263
      %v277 = vadd.f32 %v244, %v263
      %v278 = vadd.f32 %v245, %v263
      %v279 = vadd.f32 %v246, %v263
      %v280 = vadd.f32 %v247, %v263
      %v281 = vadd.f32 %v248, %v263
      %v282 = vadd.f32 %v249, %v263
      %v283 = vadd.f32 %v250, %v263
      %v284 = vadd.f32 %v251, %v263
      %v285 = vadd.f32 %v252, %v263
      %v286 = vadd.f32 %v253, %v263
      %v287 = vadd.f32 %v254, %v263
      %v288 = vadd.f32 %v255, %v263
      %v289 = vadd.f32 %v256, %v263
      %v290 = vadd.f32 %v257, %v263
      %v291 = vadd.f32 %v258, %v263
      %v292 = vadd.f32 %v259, %v263
      %v293 = vadd.f32 %v260, %v263
      %v294 = vadd.f32 %v261, %v263
      %v295 = vadd.f32 %v262, %v263
      %v296 = vld [vmem:[%s188] sm:$0xff]
      %v297 = vld [vmem:[%s188 + $0x8] sm:$0xff]
      %v298 = vld [vmem:[%s188 + $0x10] sm:$0xff]
      %v299 = vld [vmem:[%s188 + $0x18] sm:$0xff]
      %v300 = vld [vmem:[%s188 + $0x20] sm:$0xff]
      %v301 = vld [vmem:[%s188 + $0x28] sm:$0xff]
      %v302 = vld [vmem:[%s188 + $0x30] sm:$0xff]
      %v303 = vld [vmem:[%s188 + $0x38] sm:$0xff]
      %v304 = vld [vmem:[%s188 + $0x40] sm:$0xff]
      %v305 = vld [vmem:[%s188 + $0x48] sm:$0xff]
      %v306 = vld [vmem:[%s188 + $0x50] sm:$0xff]
      %v307 = vld [vmem:[%s188 + $0x58] sm:$0xff]
      %v308 = vld [vmem:[%s188 + $0x60] sm:$0xff]
      %v309 = vld [vmem:[%s188 + $0x68] sm:$0xff]
      %v310 = vld [vmem:[%s188 + $0x70] sm:$0xff]
      %v311 = vld [vmem:[%s188 + $0x78] sm:$0xff]
      %v312 = vld [vmem:[%s188 + $0x80] sm:$0xff]
      %v313 = vld [vmem:[%s188 + $0x88] sm:$0xff]
      %v314 = vld [vmem:[%s188 + $0x90] sm:$0xff]
      %v315 = vld [vmem:[%s188 + $0x98] sm:$0xff]
      %v316 = vld [vmem:[%s188 + $0xa0] sm:$0xff]
      %v317 = vld [vmem:[%s188 + $0xa8] sm:$0xff]
      %v318 = vld [vmem:[%s188 + $0xb0] sm:$0xff]
      %v319 = vld [vmem:[%s188 + $0xb8] sm:$0xff]
      %v320 = vld [vmem:[%s188 + $0xc0] sm:$0xff]
      %v321 = vld [vmem:[%s188 + $0xc8] sm:$0xff]
      %v322 = vld [vmem:[%s188 + $0xd0] sm:$0xff]
      %v323 = vld [vmem:[%s188 + $0xd8] sm:$0xff]
      %v324 = vld [vmem:[%s188 + $0xe0] sm:$0xff]
      %v325 = vld [vmem:[%s188 + $0xe8] sm:$0xff]
      %v326 = vld [vmem:[%s188 + $0xf0] sm:$0xff]
      %v327 = vld [vmem:[%s188 + $0xf8] sm:$0xff]
      %v328 = vadd.f32 %v264, %v296
      %v329 = vadd.f32 %v265, %v297
      %v330 = vadd.f32 %v266, %v298
      %v331 = vadd.f32 %v267, %v299
      %v332 = vadd.f32 %v268, %v300
      %v333 = vadd.f32 %v269, %v301
      %v334 = vadd.f32 %v270, %v302
      %v335 = vadd.f32 %v271, %v303
      %v336 = vadd.f32 %v272, %v304
      %v337 = vadd.f32 %v273, %v305
      %v338 = vadd.f32 %v274, %v306
      %v339 = vadd.f32 %v275, %v307
      %v340 = vadd.f32 %v276, %v308
      %v341 = vadd.f32 %v277, %v309
      %v342 = vadd.f32 %v278, %v310
      %v343 = vadd.f32 %v279, %v311
      %v344 = vadd.f32 %v280, %v312
      %v345 = vadd.f32 %v281, %v313
      %v346 = vadd.f32 %v282, %v314
      %v347 = vadd.f32 %v283, %v315
      %v348 = vadd.f32 %v284, %v316
      %v349 = vadd.f32 %v285, %v317
      %v350 = vadd.f32 %v286, %v318
      %v351 = vadd.f32 %v287, %v319
      %v352 = vadd.f32 %v288, %v320
      %v353 = vadd.f32 %v289, %v321
      %v354 = vadd.f32 %v290, %v322
      %v355 = vadd.f32 %v291, %v323
      %v356 = vadd.f32 %v292, %v324
      %v357 = vadd.f32 %v293, %v325
      %v358 = vadd.f32 %v294, %v326
      %v359 = vadd.f32 %v295, %v327
      %v360 = vmax.f32 %v328, 0.0
      %v361 = vmax.f32 %v329, 0.0
      %v362 = vmax.f32 %v330, 0.0
      %v363 = vmax.f32 %v331, 0.0
      %v364 = vmax.f32 %v332, 0.0
      %v365 = vmax.f32 %v333, 0.0
      %v366 = vmax.f32 %v334, 0.0
      %v367 = vmax.f32 %v335, 0.0
      %v368 = vmax.f32 %v336, 0.0
      %v369 = vmax.f32 %v337, 0.0
      %v370 = vmax.f32 %v338, 0.0
      %v371 = vmax.f32 %v339, 0.0
      %v372 = vmax.f32 %v340, 0.0
      %v373 = vmax.f32 %v341, 0.0
      %v374 = vmax.f32 %v342, 0.0
      %v375 = vmax.f32 %v343, 0.0
      %v376 = vmax.f32 %v344, 0.0
      %v377 = vmax.f32 %v345, 0.0
      %v378 = vmax.f32 %v346, 0.0
      %v379 = vmax.f32 %v347, 0.0
      %v380 = vmax.f32 %v348, 0.0
      %v381 = vmax.f32 %v349, 0.0
      %v382 = vmax.f32 %v350, 0.0
      %v383 = vmax.f32 %v351, 0.0
      %v384 = vmax.f32 %v352, 0.0
      %v385 = vmax.f32 %v353, 0.0
      %v386 = vmax.f32 %v354, 0.0
      %v387 = vmax.f32 %v355, 0.0
      %v388 = vmax.f32 %v356, 0.0
      %v389 = vmax.f32 %v357, 0.0
      %v390 = vmax.f32 %v358, 0.0
      %v391 = vmax.f32 %v359, 0.0
      %vm392 = vcmask 31744
      %393 = vst.msk [vmem:[%s194] sm:$0xff] %vm392, %v360
      %394 = vst.msk [vmem:[%s194 + $0x8] sm:$0xff] %vm392, %v361
      %395 = vst.msk [vmem:[%s194 + $0x10] sm:$0xff] %vm392, %v362
      %396 = vst.msk [vmem:[%s194 + $0x18] sm:$0xff] %vm392, %v363
      %397 = vst.msk [vmem:[%s194 + $0x20] sm:$0xff] %vm392, %v364
      %398 = vst.msk [vmem:[%s194 + $0x28] sm:$0xff] %vm392, %v365
      %399 = vst.msk [vmem:[%s194 + $0x30] sm:$0xff] %vm392, %v366
      %400 = vst.msk [vmem:[%s194 + $0x38] sm:$0xff] %vm392, %v367
      %401 = vst.msk [vmem:[%s194 + $0x40] sm:$0xff] %vm392, %v368
      %402 = vst.msk [vmem:[%s194 + $0x48] sm:$0xff] %vm392, %v369
      %403 = vst.msk [vmem:[%s194 + $0x50] sm:$0xff] %vm392, %v370
      %404 = vst.msk [vmem:[%s194 + $0x58] sm:$0xff] %vm392, %v371
      %405 = vst.msk [vmem:[%s194 + $0x60] sm:$0xff] %vm392, %v372
      %406 = vst.msk [vmem:[%s194 + $0x68] sm:$0xff] %vm392, %v373
      %407 = vst.msk [vmem:[%s194 + $0x70] sm:$0xff] %vm392, %v374
      %408 = vst.msk [vmem:[%s194 + $0x78] sm:$0xff] %vm392, %v375
      %409 = vst.msk [vmem:[%s194 + $0x80] sm:$0xff] %vm392, %v376
      %410 = vst.msk [vmem:[%s194 + $0x88] sm:$0xff] %vm392, %v377
      %411 = vst.msk [vmem:[%s194 + $0x90] sm:$0xff] %vm392, %v378
      %412 = vst.msk [vmem:[%s194 + $0x98] sm:$0xff] %vm392, %v379
      %413 = vst.msk [vmem:[%s194 + $0xa0] sm:$0xff] %vm392, %v380
      %414 = vst.msk [vmem:[%s194 + $0xa8] sm:$0xff] %vm392, %v381
      %415 = vst.msk [vmem:[%s194 + $0xb0] sm:$0xff] %vm392, %v382
      %416 = vst.msk [vmem:[%s194 + $0xb8] sm:$0xff] %vm392, %v383
      %417 = vst.msk [vmem:[%s194 + $0xc0] sm:$0xff] %vm392, %v384
      %418 = vst.msk [vmem:[%s194 + $0xc8] sm:$0xff] %vm392, %v385
      %419 = vst.msk [vmem:[%s194 + $0xd0] sm:$0xff] %vm392, %v386
      %420 = vst.msk [vmem:[%s194 + $0xd8] sm:$0xff] %vm392, %v387
      %421 = vst.msk [vmem:[%s194 + $0xe0] sm:$0xff] %vm392, %v388
      %422 = vst.msk [vmem:[%s194 + $0xe8] sm:$0xff] %vm392, %v389
      %423 = vst.msk [vmem:[%s194 + $0xf0] sm:$0xff] %vm392, %v390
      %424 = vst.msk [vmem:[%s194 + $0xf8] sm:$0xff] %vm392, %v391
      %s425 = smul.u32 32, %s14
      %p426 = scmp.lt.s32.totalorder %s425, 63
      %s427 = scalar_select %p426, %s425, 63
      %s428 = smul.addr %s427, 8
      %s429 = scalar_lea.vmem %s3, %s428
      // Predicated region
      $region33: #{bottleneck_block.7} parent=31 // pred_check
        %p430 = pneg %p105
      $region34: #{bottleneck_block.7} parent=31 // pred_check_branch
        %432 = sbr.rel (%p430) target = $region36
      $region35: #{bottleneck_block.7} parent=31 // pred_region
        %s433 = smul.u32 32, %s14
      $region36: #{bottleneck_block.7} parent=31 // pred_fallthru
        _
    $region32: #{bottleneck_block.7} parent=5 // pred_fallthru
      _
    %p434 = scmp.le.s32.totalorder 2, %s9
    // Predicated region
    $region37: #{bottleneck_block.7} parent=5 // pred_check
      %p435 = pneg %p434
    $region38: #{bottleneck_block.7} parent=5 // pred_check_branch
      %437 = sbr.rel (%p435) target = $region40
    $region39: #{bottleneck_block.7} parent=5 // pred_region
      %s438 = ssub.s32 %s9, 2
      // Predicated region
      $region41: #{bottleneck_block.7} parent=39 // pred_check
        %p439 = pneg %p111
      $region42: #{bottleneck_block.7} parent=39 // pred_check_branch
        %441 = sbr.rel (%p439) target = $region44
      $region43: #{bottleneck_block.7} parent=39 // pred_region
        %s442 = smul.u32 32, %s15
        %p443 = scmp.lt.s32.totalorder %s442, 63
        %s444 = scalar_select %p443, %s442, 63
        %s445 = smul.addr %s444, 8
        %s446 = scalar_lea.vmem %s3, %s445
      $region44: #{bottleneck_block.7} parent=39 // pred_fallthru
        _
    $region40: #{bottleneck_block.7} parent=5 // pred_fallthru
      _
  $region6: #{bottleneck_block.7} parent=0 // loop_footer
    %s13 = sadd.s32 1, %s9
  $region7: #{bottleneck_block.7} parent=0 // loop_footer_branch
    %8 = sbr.rel target = $region3
  $region8: #{bottleneck_block.7} parent=0 // loop_exit
    _

// kernel: bottleneck_block.5
$region0: #{bottleneck_block.5}
  #allocation0 [shape = 'u32[]', space=smem, size = 0x4, offset = 0x4, fixed_abs, tag = 'smem constant byte address 0x4 - core index']
  #allocation1 [shape = 'u32[72,128]{1,0:T(1,128)}', space=vmem, size = 0x9000, scoped, tag = 'internal scratch']
  %s0 = inlined_call_operand.vmem [shape: f32[512,8], index: 0, kind: input, shape index: {}]
  %s1 = inlined_call_operand.vmem [shape: bf16[9,8,8], index: 1, kind: input, shape index: {}]
  %s2 = inlined_call_operand.vmem [shape: f32[2,8], index: 2, kind: input, shape index: {}]
  %s3 = inlined_call_operand.vmem [shape: f32[256,9], index: 3, kind: input, shape index: {}]
  %s4 = inlined_call_operand.vmem [shape: f32[512,8], index: 4, kind: output, shape index: {0}]
  %s5 = inlined_call_operand.vmem [shape: f32[2,2,8], index: 5, kind: output, shape index: {1}]
  %6 = xla_tuple %s4, %s5
  %s7 = sld [smem:[#allocation0]]
  $region57: #{bottleneck_block.5} parent=0
    _
  %s9 = ssub.s32 1, %s7
  %s10 = scalar_select 0, %s9, %s7
  loop: start=0, step=1, limit=4
  $region2: #{bottleneck_block.5} parent=0 // loop_pre_header
    _
  $region3: #{bottleneck_block.5} parent=0 // loop_header
    %s12 = sphi 0, %s16
    %p13 = scmp.ge.s32.totalorder %s12, 4
    %s22 = sphi 0, %s24
    %s25 = sphi 0, %s22
    %s26 = sphi 0, %s25
    %s42 = sphi 0, %s26
    %s46 = sphi 0, %s46
    %s48 = sphi 0, %s46
    %s49 = sphi 0, %s48
    %s63 = sphi 0, %s49
    %s67 = sphi 0, %s67
    %s69 = sphi 0, %s67
    %s70 = sphi 0, %s69
    %s84 = sphi 0, %s70
    %s88 = sphi 0, %s88
    %s90 = sphi 0, %s88
    %s91 = sphi 0, %s90
    %s105 = sphi 0, %s91
    %s111 = sphi 0, %s113
    %s114 = sphi 0, %s111
    %s115 = sphi 0, %s114
    %s131 = sphi 0, %s115
    %s137 = sphi 0, %s139
    %s140 = sphi 0, %s137
    %s141 = sphi 0, %s140
    %s157 = sphi 0, %s141
  $region4: #{bottleneck_block.5} parent=0 // loop_header_branch
    %15 = sbr.rel (%p13) target = $region8
  $region5: #{bottleneck_block.5} parent=0 // loop_body
    %s17 = ssub.s32 %s12, 1
    %s18 = ssub.s32 %s12, 2
    %s19 = sadd.s32 %s12, 1
    %s20 = ssub.s32 %s12, %s19
    %p21 = scmp.eq.s32.totalorder %s20, 0
    %s23 = sadd.s32 %s22, 1
    %s24 = scalar_select %p21, %s22, %s23
    %p27 = pneg %p21
    %p28 = scmp.eq.s32.totalorder %s12, 1
    %p29 = por %p27, %p28
    %p30 = scmp.ne.s32.totalorder %s22, %s25
    %p31 = scmp.eq.s32.totalorder %s12, 0
    %p32 = por %p30, %p31
    %p33 = scmp.ne.s32.totalorder %s22, %s25
    %p34 = scmp.eq.s32.totalorder %s17, 1
    %p35 = por %p33, %p34
    %p36 = scmp.ne.s32.totalorder %s25, %s26
    %p37 = scmp.eq.s32.totalorder %s17, 0
    %p38 = por %p36, %p37
    %p39 = scmp.ne.s32.totalorder %s25, %s26
    %p40 = scmp.eq.s32.totalorder %s18, 1
    %p41 = por %p39, %p40
    %p43 = scmp.ne.s32.totalorder %s26, %s42
    %p44 = scmp.eq.s32.totalorder %s18, 0
    %p45 = por %p43, %p44
    %s47 = sadd.s32 %s46, 1
    %p50 = scmp.eq.s32.totalorder %s12, 1
    %p51 = scmp.ne.s32.totalorder %s46, %s48
    %p52 = scmp.eq.s32.totalorder %s12, 0
    %p53 = por %p51, %p52
    %p54 = scmp.ne.s32.totalorder %s46, %s48
    %p55 = scmp.eq.s32.totalorder %s17, 1
    %p56 = por %p54, %p55
    %p57 = scmp.ne.s32.totalorder %s48, %s49
    %p58 = scmp.eq.s32.totalorder %s17, 0
    %p59 = por %p57, %p58
    %p60 = scmp.ne.s32.totalorder %s48, %s49
    %p61 = scmp.eq.s32.totalorder %s18, 1
    %p62 = por %p60, %p61
    %p64 = scmp.ne.s32.totalorder %s49, %s63
    %p65 = scmp.eq.s32.totalorder %s18, 0
    %p66 = por %p64, %p65
    %s68 = sadd.s32 %s67, 1
    %p71 = scmp.eq.s32.totalorder %s12, 1
    %p72 = scmp.ne.s32.totalorder %s67, %s69
    %p73 = scmp.eq.s32.totalorder %s12, 0
    %p74 = por %p72, %p73
    %p75 = scmp.ne.s32.totalorder %s67, %s69
    %p76 = scmp.eq.s32.totalorder %s17, 1
    %p77 = por %p75, %p76
    %p78 = scmp.ne.s32.totalorder %s69, %s70
    %p79 = scmp.eq.s32.totalorder %s17, 0
    %p80 = por %p78, %p79
    %p81 = scmp.ne.s32.totalorder %s69, %s70
    %p82 = scmp.eq.s32.totalorder %s18, 1
    %p83 = por %p81, %p82
    %p85 = scmp.ne.s32.totalorder %s70, %s84
    %p86 = scmp.eq.s32.totalorder %s18, 0
    %p87 = por %p85, %p86
    %s89 = sadd.s32 %s88, 1
    %p92 = scmp.eq.s32.totalorder %s12, 1
    %p93 = scmp.ne.s32.totalorder %s88, %s90
    %p94 = scmp.eq.s32.totalorder %s12, 0
    %p95 = por %p93, %p94
    %p96 = scmp.ne.s32.totalorder %s88, %s90
    %p97 = scmp.eq.s32.totalorder %s17, 1
    %p98 = por %p96, %p97
    %p99 = scmp.ne.s32.totalorder %s90, %s91
    %p100 = scmp.eq.s32.totalorder %s17, 0
    %p101 = por %p99, %p100
    %p102 = scmp.ne.s32.totalorder %s90, %s91
    %p103 = scmp.eq.s32.totalorder %s18, 1
    %p104 = por %p102, %p103
    %p106 = scmp.ne.s32.totalorder %s91, %s105
    %p107 = scmp.eq.s32.totalorder %s18, 0
    %p108 = por %p106, %p107
    %s109 = ssub.s32 %s12, %s19
    %p110 = scmp.eq.s32.totalorder %s109, 0
    %s112 = sadd.s32 %s111, 1
    %s113 = scalar_select %p110, %s111, %s112
    %p116 = pneg %p110
    %p117 = scmp.eq.s32.totalorder %s12, 1
    %p118 = por %p116, %p117
    %p119 = scmp.ne.s32.totalorder %s111, %s114
    %p120 = scmp.eq.s32.totalorder %s12, 0
    %p121 = por %p119, %p120
    %p122 = scmp.ne.s32.totalorder %s111, %s114
    %p123 = scmp.eq.s32.totalorder %s17, 1
    %p124 = por %p122, %p123
    %p125 = scmp.ne.s32.totalorder %s114, %s115
    %p126 = scmp.eq.s32.totalorder %s17, 0
    %p127 = por %p125, %p126
    %p128 = scmp.ne.s32.totalorder %s114, %s115
    %p129 = scmp.eq.s32.totalorder %s18, 1
    %p130 = por %p128, %p129
    %p132 = scmp.ne.s32.totalorder %s115, %s131
    %p133 = scmp.eq.s32.totalorder %s18, 0
    %p134 = por %p132, %p133
    %s135 = ssub.s32 %s12, %s19
    %p136 = scmp.eq.s32.totalorder %s135, 0
    %s138 = sadd.s32 %s137, 1
    %s139 = scalar_select %p136, %s137, %s138
    %p142 = pneg %p136
    %p143 = scmp.eq.s32.totalorder %s12, 1
    %p144 = por %p142, %p143
    %p145 = scmp.ne.s32.totalorder %s137, %s140
    %p146 = scmp.eq.s32.totalorder %s12, 0
    %p147 = por %p145, %p146
    %p148 = scmp.ne.s32.totalorder %s137, %s140
    %p149 = scmp.eq.s32.totalorder %s17, 1
    %p150 = por %p148, %p149
    %p151 = scmp.ne.s32.totalorder %s140, %s141
    %p152 = scmp.eq.s32.totalorder %s17, 0
    %p153 = por %p151, %p152
    %p154 = scmp.ne.s32.totalorder %s140, %s141
    %p155 = scmp.eq.s32.totalorder %s18, 1
    %p156 = por %p154, %p155
    %p158 = scmp.ne.s32.totalorder %s141, %s157
    %p159 = scmp.eq.s32.totalorder %s18, 0
    %p160 = por %p158, %p159
    %p161 = scmp.le.s32.totalorder 1, %s12
    %p162 = scmp.lt.s32.totalorder %s12, 3
    %p163 = pnand %p161, %p162
    %p164 = pneg %p163
    // Predicated region
    $region9: #{bottleneck_block.5} parent=5 // pred_check
      _
    $region10: #{bottleneck_block.5} parent=5 // pred_check_branch
      %166 = sbr.rel (%p163) target = $region12
    $region11: #{bottleneck_block.5} parent=5 // pred_region
      %s167 = ssub.s32 %s12, 1
      // Predicated region
      $region13: #{bottleneck_block.5} parent=11 // pred_check
        %p168 = pneg %p59
      $region14: #{bottleneck_block.5} parent=11 // pred_check_branch
        %170 = sbr.rel (%p168) target = $region16
      $region15: #{bottleneck_block.5} parent=11 // pred_region
        _
      $region16: #{bottleneck_block.5} parent=11 // pred_fallthru
        _
      // Predicated region
      $region17: #{bottleneck_block.5} parent=11 // pred_check
        %p171 = pneg %p80
      $region18: #{bottleneck_block.5} parent=11 // pred_check_branch
        %173 = sbr.rel (%p171) target = $region20
      $region19: #{bottleneck_block.5} parent=11 // pred_region
        _
      $region20: #{bottleneck_block.5} parent=11 // pred_fallthru
        _
      // Predicated region
      $region21: #{bottleneck_block.5} parent=11 // pred_check
        %p174 = pneg %p101
      $region22: #{bottleneck_block.5} parent=11 // pred_check_branch
        %176 = sbr.rel (%p174) target = $region24
      $region23: #{bottleneck_block.5} parent=11 // pred_region
        _
      $region24: #{bottleneck_block.5} parent=11 // pred_fallthru
        _
    $region12: #{bottleneck_block.5} parent=5 // pred_fallthru
      _
    %p177 = scmp.lt.s32.totalorder %s12, 2
    // Predicated region
    $region25: #{bottleneck_block.5} parent=5 // pred_check
      %p178 = pneg %p177
    $region26: #{bottleneck_block.5} parent=5 // pred_check_branch
      %180 = sbr.rel (%p178) target = $region28
    $region27: #{bottleneck_block.5} parent=5 // pred_region
      // Predicated region
      $region29: #{bottleneck_block.5} parent=27 // pred_check
        %p181 = pneg %p32
      $region30: #{bottleneck_block.5} parent=27 // pred_check_branch
        %183 = sbr.rel (%p181) target = $region32
      $region31: #{bottleneck_block.5} parent=27 // pred_region
        %s184 = smul.u32 32, %s12
        %p185 = scmp.lt.s32.totalorder %s184, 63
        %s186 = scalar_select %p185, %s184, 63
        %s187 = smul.addr %s186, 8
        %s188 = scalar_lea.vmem %s0, %s187
        %s189 = smul.u32 32, %s12
      $region32: #{bottleneck_block.5} parent=27 // pred_fallthru
        _
    $region28: #{bottleneck_block.5} parent=5 // pred_fallthru
      _
    %p190 = scmp.le.s32.totalorder 1, %s12
    %p191 = scmp.lt.s32.totalorder %s12, 3
    %p192 = pnand %p190, %p191
    %p193 = pneg %p192
    // Predicated region
    $region33: #{bottleneck_block.5} parent=5 // pred_check
      _
    $region34: #{bottleneck_block.5} parent=5 // pred_check_branch
      %195 = sbr.rel (%p192) target = $region36
    $region35: #{bottleneck_block.5} parent=5 // pred_region
      %s196 = ssub.s32 %s12, 1
      %s197 = smul.u32 32, %s17
      %p198 = scmp.lt.s32.totalorder %s197, 63
      %s199 = scalar_select %p198, %s197, 63
      %s200 = smul.addr %s199, 8
      %s201 = scalar_lea.vmem %s0, %s200
      %p202 = pneg %p38
      %p203 = pneg %p35
      %p204 = pneg %p59
      %p205 = pneg %p56
      %p206 = pneg %p80
      %p207 = pneg %p77
      %p208 = pneg %p101
      %p209 = pneg %p98
      %p210 = pneg %p127
      %p211 = pneg %p124
      %s212 = smul.u32 32, %s17
      %p213 = scmp.lt.s32.totalorder %s212, 63
      %s214 = scalar_select %p213, %s212, 63
      %s215 = smul.addr %s214, 8
      %s216 = scalar_lea.vmem %s4, %s215
      %p217 = pneg %p153
      %p218 = pneg %p150
      %p219 = scmp.lt.s32.totalorder %s17, 1
      %s220 = scalar_select %p219, %s17, 1
      %s221 = smul.addr %s220, 2
      %s222 = scalar_lea.vmem %s5, %s221
      %s223 = smul.u32 32, %s17
      %p224 = scmp.lt.s32.totalorder %s223, 63
      %s225 = scalar_select %p224, %s223, 63
      %s226 = smul.addr %s225, 8
      %s227 = scalar_lea.vmem %s0, %s226
      %s228 = smul.u32 32, %s17
      %s229 = smul.u32 32, %s17
      %p230 = scmp.lt.s32.totalorder %s229, 63
      %s231 = scalar_select %p230, %s229, 63
      %s232 = smul.addr %s231, 8
      %s233 = scalar_lea.vmem %s4, %s232
      %s234 = smul.u32 32, %s17
      %p235 = scmp.lt.s32.totalorder %s17, 1
      %s236 = scalar_select %p235, %s17, 1
      %s237 = smul.addr %s236, 2
      %s238 = scalar_lea.vmem %s5, %s237
      %v240 = vld [vmem:[%s2] sm:$0x1]
      %v241 = vld [vmem:[%s2 + $0x1] sm:$0x1]
      %v242 = vld [vmem:[%s227] sm:$0xff]
      %v243 = vld [vmem:[%s227 + $0x8] sm:$0xff]
      %v244 = vld [vmem:[%s227 + $0x10] sm:$0xff]
      %v245 = vld [vmem:[%s227 + $0x18] sm:$0xff]
      %v246 = vld [vmem:[%s227 + $0x20] sm:$0xff]
      %v247 = vld [vmem:[%s227 + $0x28] sm:$0xff]
      %v248 = vld [vmem:[%s227 + $0x30] sm:$0xff]
      %v249 = vld [vmem:[%s227 + $0x38] sm:$0xff]
      %v250 = vld [vmem:[%s227 + $0x40] sm:$0xff]
      %v251 = vld [vmem:[%s227 + $0x48] sm:$0xff]
      %v252 = vld [vmem:[%s227 + $0x50] sm:$0xff]
      %v253 = vld [vmem:[%s227 + $0x58] sm:$0xff]
      %v254 = vld [vmem:[%s227 + $0x60] sm:$0xff]
      %v255 = vld [vmem:[%s227 + $0x68] sm:$0xff]
      %v256 = vld [vmem:[%s227 + $0x70] sm:$0xff]
      %v257 = vld [vmem:[%s227 + $0x78] sm:$0xff]
      %v258 = vld [vmem:[%s227 + $0x80] sm:$0xff]
      %v259 = vld [vmem:[%s227 + $0x88] sm:$0xff]
      %v260 = vld [vmem:[%s227 + $0x90] sm:$0xff]
      %v261 = vld [vmem:[%s227 + $0x98] sm:$0xff]
      %v262 = vld [vmem:[%s227 + $0xa0] sm:$0xff]
      %v263 = vld [vmem:[%s227 + $0xa8] sm:$0xff]
      %v264 = vld [vmem:[%s227 + $0xb0] sm:$0xff]
      %v265 = vld [vmem:[%s227 + $0xb8] sm:$0xff]
      %v266 = vld [vmem:[%s227 + $0xc0] sm:$0xff]
      %v267 = vld [vmem:[%s227 + $0xc8] sm:$0xff]
      %v268 = vld [vmem:[%s227 + $0xd0] sm:$0xff]
      %v269 = vld [vmem:[%s227 + $0xd8] sm:$0xff]
      %v270 = vld [vmem:[%s227 + $0xe0] sm:$0xff]
      %v271 = vld [vmem:[%s227 + $0xe8] sm:$0xff]
      %v272 = vld [vmem:[%s227 + $0xf0] sm:$0xff]
      %v273 = vld [vmem:[%s227 + $0xf8] sm:$0xff]
      %v274 = vperm.slane %v240, 0
      %v275 = vmul.f32 %v242, %v274
      %v276 = vmul.f32 %v243, %v274
      %v277 = vmul.f32 %v244, %v274
      %v278 = vmul.f32 %v245, %v274
      %v279 = vmul.f32 %v246, %v274
      %v280 = vmul.f32 %v247, %v274
      %v281 = vmul.f32 %v248, %v274
      %v282 = vmul.f32 %v249, %v274
      %v283 = vmul.f32 %v250, %v274
      %v284 = vmul.f32 %v251, %v274
      %v285 = vmul.f32 %v252, %v274
      %v286 = vmul.f32 %v253, %v274
      %v287 = vmul.f32 %v254, %v274
      %v288 = vmul.f32 %v255, %v274
      %v289 = vmul.f32 %v256, %v274
      %v290 = vmul.f32 %v257, %v274
      %v291 = vmul.f32 %v258, %v274
      %v292 = vmul.f32 %v259, %v274
      %v293 = vmul.f32 %v260, %v274
      %v294 = vmul.f32 %v261, %v274
      %v295 = vmul.f32 %v262, %v274
      %v296 = vmul.f32 %v263, %v274
      %v297 = vmul.f32 %v264, %v274
      %v298 = vmul.f32 %v265, %v274
      %v299 = vmul.f32 %v266, %v274
      %v300 = vmul.f32 %v267, %v274
      %v301 = vmul.f32 %v268, %v274
      %v302 = vmul.f32 %v269, %v274
      %v303 = vmul.f32 %v270, %v274
      %v304 = vmul.f32 %v271, %v274
      %v305 = vmul.f32 %v272, %v274
      %v306 = vmul.f32 %v273, %v274
      %v307 = vperm.slane %v241, 0
      %v308 = vadd.f32 %v275, %v307
      %v309 = vadd.f32 %v276, %v307
      %v310 = vadd.f32 %v277, %v307
      %v311 = vadd.f32 %v278, %v307
      %v312 = vadd.f32 %v279, %v307
      %v313 = vadd.f32 %v280, %v307
      %v314 = vadd.f32 %v281, %v307
      %v315 = vadd.f32 %v282, %v307
      %v316 = vadd.f32 %v283, %v307
      %v317 = vadd.f32 %v284, %v307
      %v318 = vadd.f32 %v285, %v307
      %v319 = vadd.f32 %v286, %v307
      %v320 = vadd.f32 %v287, %v307
      %v321 = vadd.f32 %v288, %v307
      %v322 = vadd.f32 %v289, %v307
      %v323 = vadd.f32 %v290, %v307
      %v324 = vadd.f32 %v291, %v307
      %v325 = vadd.f32 %v292, %v307
      %v326 = vadd.f32 %v293, %v307
      %v327 = vadd.f32 %v294, %v307
      %v328 = vadd.f32 %v295, %v307
      %v329 = vadd.f32 %v296, %v307
      %v330 = vadd.f32 %v297, %v307
      %v331 = vadd.f32 %v298, %v307
      %v332 = vadd.f32 %v299, %v307
      %v333 = vadd.f32 %v300, %v307
      %v334 = vadd.f32 %v301, %v307
      %v335 = vadd.f32 %v302, %v307
      %v336 = vadd.f32 %v303, %v307
      %v337 = vadd.f32 %v304, %v307
      %v338 = vadd.f32 %v305, %v307
      %v339 = vadd.f32 %v306, %v307
      %v340 = vmax.f32 %v308, 0.0
      %v341 = vmax.f32 %v309, 0.0
      %v342 = vmax.f32 %v310, 0.0
      %v343 = vmax.f32 %v311, 0.0
      %v344 = vmax.f32 %v312, 0.0
      %v345 = vmax.f32 %v313, 0.0
      %v346 = vmax.f32 %v314, 0.0
      %v347 = vmax.f32 %v315, 0.0
      %v348 = vmax.f32 %v316, 0.0
      %v349 = vmax.f32 %v317, 0.0
      %v350 = vmax.f32 %v318, 0.0
      %v351 = vmax.f32 %v319, 0.0
      %v352 = vmax.f32 %v320, 0.0
      %v353 = vmax.f32 %v321, 0.0
      %v354 = vmax.f32 %v322, 0.0
      %v355 = vmax.f32 %v323, 0.0
      %v356 = vmax.f32 %v324, 0.0
      %v357 = vmax.f32 %v325, 0.0
      %v358 = vmax.f32 %v326, 0.0
      %v359 = vmax.f32 %v327, 0.0
      %v360 = vmax.f32 %v328, 0.0
      %v361 = vmax.f32 %v329, 0.0
      %v362 = vmax.f32 %v330, 0.0
      %v363 = vmax.f32 %v331, 0.0
      %v364 = vmax.f32 %v332, 0.0
      %v365 = vmax.f32 %v333, 0.0
      %v366 = vmax.f32 %v334, 0.0
      %v367 = vmax.f32 %v335, 0.0
      %v368 = vmax.f32 %v336, 0.0
      %v369 = vmax.f32 %v337, 0.0
      %v370 = vmax.f32 %v338, 0.0
      %v371 = vmax.f32 %v339, 0.0
      %v372 = vld [vmem:[%s3] sm:$0xff]
      %v373 = vld [vmem:[%s3 + $0x8] sm:$0xff]
      %v374 = vld [vmem:[%s3 + $0x10] sm:$0xff]
      %v375 = vld [vmem:[%s3 + $0x18] sm:$0xff]
      %v376 = vld [vmem:[%s3 + $0x20] sm:$0xff]
      %v377 = vld [vmem:[%s3 + $0x28] sm:$0xff]
      %v378 = vld [vmem:[%s3 + $0x30] sm:$0xff]
      %v379 = vld [vmem:[%s3 + $0x38] sm:$0xff]
      %v380 = vld [vmem:[%s3 + $0x40] sm:$0xff]
      %v381 = vld [vmem:[%s3 + $0x48] sm:$0xff]
      %v382 = vld [vmem:[%s3 + $0x50] sm:$0xff]
      %v383 = vld [vmem:[%s3 + $0x58] sm:$0xff]
      %v384 = vld [vmem:[%s3 + $0x60] sm:$0xff]
      %v385 = vld [vmem:[%s3 + $0x68] sm:$0xff]
      %v386 = vld [vmem:[%s3 + $0x70] sm:$0xff]
      %v387 = vld [vmem:[%s3 + $0x78] sm:$0xff]
      %v388 = vld [vmem:[%s3 + $0x80] sm:$0xff]
      %v389 = vld [vmem:[%s3 + $0x88] sm:$0xff]
      %v390 = vld [vmem:[%s3 + $0x90] sm:$0xff]
      %v391 = vld [vmem:[%s3 + $0x98] sm:$0xff]
      %v392 = vld [vmem:[%s3 + $0xa0] sm:$0xff]
      %v393 = vld [vmem:[%s3 + $0xa8] sm:$0xff]
      %v394 = vld [vmem:[%s3 + $0xb0] sm:$0xff]
      %v395 = vld [vmem:[%s3 + $0xb8] sm:$0xff]
      %v396 = vld [vmem:[%s3 + $0xc0] sm:$0xff]
      %v397 = vld [vmem:[%s3 + $0xc8] sm:$0xff]
      %v398 = vld [vmem:[%s3 + $0xd0] sm:$0xff]
      %v399 = vld [vmem:[%s3 + $0xd8] sm:$0xff]
      %v400 = vld [vmem:[%s3 + $0xe0] sm:$0xff]
      %v401 = vld [vmem:[%s3 + $0xe8] sm:$0xff]
      %v402 = vld [vmem:[%s3 + $0xf0] sm:$0xff]
      %v403 = vld [vmem:[%s3 + $0xf8] sm:$0xff]
      %v404 = vrot.slane %v340, 7
      %v405 = vrot.slane %v341, 7
      %v406 = vrot.slane %v342, 7
      %v407 = vrot.slane %v343, 7
      %v408 = vrot.slane %v344, 7
      %v409 = vrot.slane %v345, 7
      %v410 = vrot.slane %v346, 7
      %v411 = vrot.slane %v347, 7
      %v412 = vrot.slane %v348, 7
      %v413 = vrot.slane %v349, 7
      %v414 = vrot.slane %v350, 7
      %v415 = vrot.slane %v351, 7
      %v416 = vrot.slane %v352, 7
      %v417 = vrot.slane %v353, 7
      %v418 = vrot.slane %v354, 7
      %v419 = vrot.slane %v355, 7
      %v420 = vrot.slane %v356, 7
      %v421 = vrot.slane %v357, 7
      %v422 = vrot.slane %v358, 7
      %v423 = vrot.slane %v359, 7
      %v424 = vrot.slane %v360, 7
      %v425 = vrot.slane %v361, 7
      %v426 = vrot.slane %v362, 7
      %v427 = vrot.slane %v363, 7
      %v428 = vrot.slane %v364, 7
      %v429 = vrot.slane %v365, 7
      %v430 = vrot.slane %v366, 7
      %v431 = vrot.slane %v367, 7
      %v432 = vrot.slane %v368, 7
      %v433 = vrot.slane %v369, 7
      %v434 = vrot.slane %v370, 7
      %v435 = vrot.slane %v371, 7
      %v436 = vlaneseq
      %v437 = vshrl.u32 %v436, 7
      %vm438 = vcmp.lt.s32.totalorder %v437, 1
      %v439 = vsel %vm438, %v434, %v435
      %v440 = vsel %vm438, %v433, %v434
      %v441 = vsel %vm438, %v432, %v433
      %v442 = vsel %vm438, %v431, %v432
      %v443 = vsel %vm438, %v430, %v431
      %v444 = vsel %vm438, %v429, %v430
      %v445 = vsel %vm438, %v428, %v429
      %v446 = vsel %vm438, %v427, %v428
      %v447 = vsel %vm438, %v426, %v427
      %v448 = vsel %vm438, %v425, %v426
      %v449 = vsel %vm438, %v424, %v425
      %v450 = vsel %vm438, %v423, %v424
      %v451 = vsel %vm438, %v422, %v423
      %v452 = vsel %vm438, %v421, %v422
      %v453 = vsel %vm438, %v420, %v421
      %v454 = vsel %vm438, %v419, %v420
      %v455 = vsel %vm438, %v418, %v419
      %v456 = vsel %vm438, %v417, %v418
      %v457 = vsel %vm438, %v416, %v417
      %v458 = vsel %vm438, %v415, %v416
      %v459 = vsel %vm438, %v414, %v415
      %v460 = vsel %vm438, %v413, %v414
      %v461 = vsel %vm438, %v412, %v413
      %v462 = vsel %vm438, %v411, %v412
      %v463 = vsel %vm438, %v410, %v411
      %v464 = vsel %vm438, %v409, %v410
      %v465 = vsel %vm438, %v408, %v409
      %v466 = vsel %vm438, %v407, %v408
      %v467 = vsel %vm438, %v406, %v407
      %v468 = vsel %vm438, %v405, %v406
      %v469 = vsel %vm438, %v404, %v405
      %v470 = vsel %vm438, %v435, %v404
      %v471 = vpack.c.bf16 %v439, %v440
      %v472 = vpack.c.bf16 %v469, %v470
      %v473 = vpack.c.bf16 %v467, %v468
      %v474 = vpack.c.bf16 %v465, %v466
      %v475 = vpack.c.bf16 %v463, %v464
      %v476 = vpack.c.bf16 %v461, %v462
      %v477 = vpack.c.bf16 %v459, %v460
      %v478 = vpack.c.bf16 %v457, %v458
      %v479 = vpack.c.bf16 %v455, %v456
      %v480 = vpack.c.bf16 %v453, %v454
      %v481 = vpack.c.bf16 %v451, %v452
      %v482 = vpack.c.bf16 %v449, %v450
      %v483 = vpack.c.bf16 %v447, %v448
      %v484 = vpack.c.bf16 %v445, %v446
      %v485 = vpack.c.bf16 %v443, %v444
      %v486 = vpack.c.bf16 %v441, %v442
      %v487 = vld [vmem:[%s1] sm:$0xf]
      %vm488 = vcmask 64512
      %v490 = vsel %vm488, %v471, 0
      %v493 = vsel %vm488, %v472, 0
      %v496 = vsel %vm488, %v473, 0
      %v499 = vsel %vm488, %v474, 0
      %v502 = vsel %vm488, %v475, 0
      %v505 = vsel %vm488, %v476, 0
      %v508 = vsel %vm488, %v477, 0
      %v511 = vsel %vm488, %v478, 0
      %v514 = vsel %vm488, %v479, 0
      %v517 = vsel %vm488, %v480, 0
      %v520 = vsel %vm488, %v481, 0
      %v523 = vsel %vm488, %v482, 0
      %v526 = vsel %vm488, %v483, 0
      %v529 = vsel %vm488, %v484, 0
      %v532 = vsel %vm488, %v485, 0
      %v535 = vsel %vm488, %v486, 0
      %vm537 = vcmask 1043456
      %v539 = vsel %vm537, %v487, 0
      %541 = vmatpush.bf16.msra.mxu0 0
      %542 = vmatpush.bf16.msra.mxu0 0
      %543 = vmatpush.bf16.msra.mxu0 0
      %544 = vmatpush.bf16.msra.mxu0 0
      %545 = vmatpush.bf16.msra.mxu0 0
      %546 = vmatpush.bf16.msra.mxu0 0
      %547 = vmatpush.bf16.msra.mxu0 0
      %548 = vmatpush.bf16.msra.mxu0 %v539
      %549 = vmatmul.bf16.gmra.mxu0 %v490
      %v550 = vpop.f32.mrf.mxu0
      %v551 = vadd.f32 0.0, %v550
      %v552 = vpop.f32.mrf.mxu0
      %v553 = vadd.f32 0.0, %v552
      %554 = vmatmul.bf16.gmra.mxu0 %v493
      %v555 = vpop.f32.mrf.mxu0
      %v556 = vadd.f32 0.0, %v555
      %v557 = vpop.f32.mrf.mxu0
      %v558 = vadd.f32 0.0, %v557
      %559 = vmatmul.bf16.gmra.mxu0 %v496
      %v560 = vpop.f32.mrf.mxu0
      %v561 = vadd.f32 0.0, %v560
      %v562 = vpop.f32.mrf.mxu0
      %v563 = vadd.f32 0.0, %v562
      %564 = vmatmul.bf16.gmra.mxu0 %v499
      %v565 = vpop.f32.mrf.mxu0
      %v566 = vadd.f32 0.0, %v565
      %v567 = vpop.f32.mrf.mxu0
      %v568 = vadd.f32 0.0, %v567
      %569 = vmatmul.bf16.gmra.mxu0 %v502
      %v570 = vpop.f32.mrf.mxu0
      %v571 = vadd.f32 0.0, %v570
      %v572 = vpop.f32.mrf.mxu0
      %v573 = vadd.f32 0.0, %v572
      %574 = vmatmul.bf16.gmra.mxu0 %v505
      %v575 = vpop.f32.mrf.mxu0
      %v576 = vadd.f32 0.0, %v575
      %v577 = vpop.f32.mrf.mxu0
      %v578 = vadd.f32 0.0, %v577
      %579 = vmatmul.bf16.gmra.mxu0 %v508
      %v580 = vpop.f32.mrf.mxu0
      %v581 = vadd.f32 0.0, %v580
      %v582 = vpop.f32.mrf.mxu0
      %v583 = vadd.f32 0.0, %v582
      %584 = vmatmul.bf16.gmra.mxu0 %v511
      %v585 = vpop.f32.mrf.mxu0
      %v586 = vadd.f32 0.0, %v585
      %v587 = vpop.f32.mrf.mxu0
      %v588 = vadd.f32 0.0, %v587
      %589 = vmatmul.bf16.gmra.mxu0 %v514
      %v590 = vpop.f32.mrf.mxu0
      %v591 = vadd.f32 0.0, %v590
      %v592 = vpop.f32.mrf.mxu0
      %v593 = vadd.f32 0.0, %v592
      %594 = vmatmul.bf16.gmra.mxu0 %v517
      %v595 = vpop.f32.mrf.mxu0
      %v596 = vadd.f32 0.0, %v595
      %v597 = vpop.f32.mrf.mxu0
      %v598 = vadd.f32 0.0, %v597
      %599 = vmatmul.bf16.gmra.mxu0 %v520
      %v600 = vpop.f32.mrf.mxu0
      %v601 = vadd.f32 0.0, %v600
      %v602 = vpop.f32.mrf.mxu0
      %v603 = vadd.f32 0.0, %v602
      %604 = vmatmul.bf16.gmra.mxu0 %v523
      %v605 = vpop.f32.mrf.mxu0
      %v606 = vadd.f32 0.0, %v605
      %v607 = vpop.f32.mrf.mxu0
      %v608 = vadd.f32 0.0, %v607
      %609 = vmatmul.bf16.gmra.mxu0 %v526
      %v610 = vpop.f32.mrf.mxu0
      %v611 = vadd.f32 0.0, %v610
      %v612 = vpop.f32.mrf.mxu0
      %v613 = vadd.f32 0.0, %v612
      %614 = vmatmul.bf16.gmra.mxu0 %v529
      %v615 = vpop.f32.mrf.mxu0
      %v616 = vadd.f32 0.0, %v615
      %v617 = vpop.f32.mrf.mxu0
      %v618 = vadd.f32 0.0, %v617
      %619 = vmatmul.bf16.gmra.mxu0 %v532
      %v620 = vpop.f32.mrf.mxu0
      %v621 = vadd.f32 0.0, %v620
      %v622 = vpop.f32.mrf.mxu0
      %v623 = vadd.f32 0.0, %v622
      %624 = vmatmul.bf16.gmra.mxu0 %v535
      %v625 = vpop.f32.mrf.mxu0
      %v626 = vadd.f32 0.0, %v625
      %v627 = vpop.f32.mrf.mxu0
      %v628 = vadd.f32 0.0, %v627
      %629 = vdwg.mxu0
      %631 = vset.pattern.permute.xlu0 0
      %632 = vperm.xlu0 %631, %v372
      %v633 = vpop.permute.xlu0 %632
      %636 = vset.pattern.permute.xlu0 0
      %637 = vperm.xlu0 %636, %v373
      %v638 = vpop.permute.xlu0 %637
      %641 = vset.pattern.permute.xlu0 0
      %642 = vperm.xlu0 %641, %v374
      %v643 = vpop.permute.xlu0 %642
      %646 = vset.pattern.permute.xlu0 0
      %647 = vperm.xlu0 %646, %v375
      %v648 = vpop.permute.xlu0 %647
      %651 = vset.pattern.permute.xlu0 0
      %652 = vperm.xlu0 %651, %v376
      %v653 = vpop.permute.xlu0 %652
      %656 = vset.pattern.permute.xlu0 0
      %657 = vperm.xlu0 %656, %v377
      %v658 = vpop.permute.xlu0 %657
      %661 = vset.pattern.permute.xlu0 0
      %662 = vperm.xlu0 %661, %v378
      %v663 = vpop.permute.xlu0 %662
      %666 = vset.pattern.permute.xlu0 0
      %667 = vperm.xlu0 %666, %v379
      %v668 = vpop.permute.xlu0 %667
      %671 = vset.pattern.permute.xlu0 0
      %672 = vperm.xlu0 %671, %v380
      %v673 = vpop.permute.xlu0 %672
      %676 = vset.pattern.permute.xlu0 0
      %677 = vperm.xlu0 %676, %v381
      %v678 = vpop.permute.xlu0 %677
      %681 = vset.pattern.permute.xlu0 0
      %682 = vperm.xlu0 %681, %v382
      %v683 = vpop.permute.xlu0 %682
      %686 = vset.pattern.permute.xlu0 0
      %687 = vperm.xlu0 %686, %v383
      %v688 = vpop.permute.xlu0 %687
      %691 = vset.pattern.permute.xlu0 0
      %692 = vperm.xlu0 %691, %v384
      %v693 = vpop.permute.xlu0 %692
      %696 = vset.pattern.permute.xlu0 0
      %697 = vperm.xlu0 %696, %v385
      %v698 = vpop.permute.xlu0 %697
      %701 = vset.pattern.permute.xlu0 0
      %702 = vperm.xlu0 %701, %v386
      %v703 = vpop.permute.xlu0 %702
      %706 = vset.pattern.permute.xlu0 0
      %707 = vperm.xlu0 %706, %v387
      %v708 = vpop.permute.xlu0 %707
      %711 = vset.pattern.permute.xlu0 0
      %712 = vperm.xlu0 %711, %v388
      %v713 = vpop.permute.xlu0 %712
      %716 = vset.pattern.permute.xlu0 0
      %717 = vperm.xlu0 %716, %v389
      %v718 = vpop.permute.xlu0 %717
      %721 = vset.pattern.permute.xlu0 0
      %722 = vperm.xlu0 %721, %v390
      %v723 = vpop.permute.xlu0 %722
      %726 = vset.pattern.permute.xlu0 0
      %727 = vperm.xlu0 %726, %v391
      %v728 = vpop.permute.xlu0 %727
      %731 = vset.pattern.permute.xlu0 0
      %732 = vperm.xlu0 %731, %v392
      %v733 = vpop.permute.xlu0 %732
      %736 = vset.pattern.permute.xlu0 0
      %737 = vperm.xlu0 %736, %v393
      %v738 = vpop.permute.xlu0 %737
      %741 = vset.pattern.permute.xlu0 0
      %742 = vperm.xlu0 %741, %v394
      %v743 = vpop.permute.xlu0 %742
      %746 = vset.pattern.permute.xlu0 0
      %747 = vperm.xlu0 %746, %v395
      %v748 = vpop.permute.xlu0 %747
      %751 = vset.pattern.permute.xlu0 0
      %752 = vperm.xlu0 %751, %v396
      %v753 = vpop.permute.xlu0 %752
      %756 = vset.pattern.permute.xlu0 0
      %757 = vperm.xlu0 %756, %v397
      %v758 = vpop.permute.xlu0 %757
      %761 = vset.pattern.permute.xlu0 0
      %762 = vperm.xlu0 %761, %v398
      %v763 = vpop.permute.xlu0 %762
      %766 = vset.pattern.permute.xlu0 0
      %767 = vperm.xlu0 %766, %v399
      %v768 = vpop.permute.xlu0 %767
      %771 = vset.pattern.permute.xlu0 0
      %772 = vperm.xlu0 %771, %v400
      %v773 = vpop.permute.xlu0 %772
      %776 = vset.pattern.permute.xlu0 0
      %777 = vperm.xlu0 %776, %v401
      %v778 = vpop.permute.xlu0 %777
      %781 = vset.pattern.permute.xlu0 0
      %782 = vperm.xlu0 %781, %v402
      %v783 = vpop.permute.xlu0 %782
      %786 = vset.pattern.permute.xlu0 0
      %787 = vperm.xlu0 %786, %v403
      %v788 = vpop.permute.xlu0 %787
      %v790 = vmul.f32 %v551, %v633
      %v791 = vmul.f32 %v553, %v638
      %v792 = vmul.f32 %v556, %v643
      %v793 = vmul.f32 %v558, %v648
      %v794 = vmul.f32 %v561, %v653
      %v795 = vmul.f32 %v563, %v658
      %v796 = vmul.f32 %v566, %v663
      %v797 = vmul.f32 %v568, %v668
      %v798 = vmul.f32 %v571, %v673
      %v799 = vmul.f32 %v573, %v678
      %v800 = vmul.f32 %v576, %v683
      %v801 = vmul.f32 %v578, %v688
      %v802 = vmul.f32 %v581, %v693
      %v803 = vmul.f32 %v583, %v698
      %v804 = vmul.f32 %v586, %v703
      %v805 = vmul.f32 %v588, %v708
      %v806 = vmul.f32 %v591, %v713
      %v807 = vmul.f32 %v593, %v718
      %v808 = vmul.f32 %v596, %v723
      %v809 = vmul.f32 %v598, %v728
      %v810 = vmul.f32 %v601, %v733
      %v811 = vmul.f32 %v603, %v738
      %v812 = vmul.f32 %v606, %v743
      %v813 = vmul.f32 %v608, %v748
      %v814 = vmul.f32 %v611, %v753
      %v815 = vmul.f32 %v613, %v758
      %v816 = vmul.f32 %v616, %v763
      %v817 = vmul.f32 %v618, %v768
      %v818 = vmul.f32 %v621, %v773
      %v819 = vmul.f32 %v623, %v778
      %v820 = vmul.f32 %v626, %v783
      %v821 = vmul.f32 %v628, %v788
      %v822 = vadd.f32 %v790, 0.0
      %v823 = vadd.f32 %v791, 0.0
      %v824 = vadd.f32 %v792, 0.0
      %v825 = vadd.f32 %v793, 0.0
      %v826 = vadd.f32 %v794, 0.0
      %v827 = vadd.f32 %v795, 0.0
      %v828 = vadd.f32 %v796, 0.0
      %v829 = vadd.f32 %v797, 0.0
      %v830 = vadd.f32 %v798, 0.0
      %v831 = vadd.f32 %v799, 0.0
      %v832 = vadd.f32 %v800, 0.0
      %v833 = vadd.f32 %v801, 0.0
      %v834 = vadd.f32 %v802, 0.0
      %v835 = vadd.f32 %v803, 0.0
      %v836 = vadd.f32 %v804, 0.0
      %v837 = vadd.f32 %v805, 0.0
      %v838 = vadd.f32 %v806, 0.0
      %v839 = vadd.f32 %v807, 0.0
      %v840 = vadd.f32 %v808, 0.0
      %v841 = vadd.f32 %v809, 0.0
      %v842 = vadd.f32 %v810, 0.0
      %v843 = vadd.f32 %v811, 0.0
      %v844 = vadd.f32 %v812, 0.0
      %v845 = vadd.f32 %v813, 0.0
      %v846 = vadd.f32 %v814, 0.0
      %v847 = vadd.f32 %v815, 0.0
      %v848 = vadd.f32 %v816, 0.0
      %v849 = vadd.f32 %v817, 0.0
      %v850 = vadd.f32 %v818, 0.0
      %v851 = vadd.f32 %v819, 0.0
      %v852 = vadd.f32 %v820, 0.0
      %v853 = vadd.f32 %v821, 0.0
      %v854 = vpack.c.bf16 %v371, %v370
      %v855 = vpack.c.bf16 %v341, %v340
      %v856 = vpack.c.bf16 %v343, %v342
      %v857 = vpack.c.bf16 %v345, %v344
      %v858 = vpack.c.bf16 %v347, %v346
      %v859 = vpack.c.bf16 %v349, %v348
      %v860 = vpack.c.bf16 %v351, %v350
      %v861 = vpack.c.bf16 %v353, %v352
      %v862 = vpack.c.bf16 %v355, %v354
      %v863 = vpack.c.bf16 %v357, %v356
      %v864 = vpack.c.bf16 %v359, %v358
      %v865 = vpack.c.bf16 %v361, %v360
      %v866 = vpack.c.bf16 %v363, %v362
      %v867 = vpack.c.bf16 %v365, %v364
      %v868 = vpack.c.bf16 %v367, %v366
      %v869 = vpack.c.bf16 %v369, %v368
      %s870 = scalar_lea.vmem %s1, 4
      %v871 = vld [vmem:[%s870] sm:$0xf]
      %v873 = vsel %vm488, %v854, 0
      %v876 = vsel %vm488, %v855, 0
      %v879 = vsel %vm488, %v856, 0
      %v882 = vsel %vm488, %v857, 0
      %v885 = vsel %vm488, %v858, 0
      %v888 = vsel %vm488, %v859, 0
      %v891 = vsel %vm488, %v860, 0
      %v894 = vsel %vm488, %v861, 0
      %v897 = vsel %vm488, %v862, 0
      %v900 = vsel %vm488, %v863, 0
      %v903 = vsel %vm488, %v864, 0
      %v906 = vsel %vm488, %v865, 0
      %v909 = vsel %vm488, %v866, 0
      %v912 = vsel %vm488, %v867, 0
      %v915 = vsel %vm488, %v868, 0
      %v918 = vsel %vm488, %v869, 0
      %v921 = vsel %vm537, %v871, 0
      %923 = vmatpush.bf16.msra.mxu0 0
      %924 = vmatpush.bf16.msra.mxu0 0
      %925 = vmatpush.bf16.msra.mxu0 0
      %926 = vmatpush.bf16.msra.mxu0 0
      %927 = vmatpush.bf16.msra.mxu0 0
      %928 = vmatpush.bf16.msra.mxu0 0
      %929 = vmatpush.bf16.msra.mxu0 0
      %930 = vmatpush.bf16.msra.mxu0 %v921
      %931 = vmatmul.bf16.gmra.mxu0 %v873
      %v932 = vpop.f32.mrf.mxu0
      %v933 = vadd.f32 0.0, %v932
      %v934 = vpop.f32.mrf.mxu0
      %v935 = vadd.f32 0.0, %v934
      %936 = vmatmul.bf16.gmra.mxu0 %v876
      %v937 = vpop.f32.mrf.mxu0
      %v938 = vadd.f32 0.0, %v937
      %v939 = vpop.f32.mrf.mxu0
      %v940 = vadd.f32 0.0, %v939
      %941 = vmatmul.bf16.gmra.mxu0 %v879
      %v942 = vpop.f32.mrf.mxu0
      %v943 = vadd.f32 0.0, %v942
      %v944 = vpop.f32.mrf.mxu0
      %v945 = vadd.f32 0.0, %v944
      %946 = vmatmul.bf16.gmra.mxu0 %v882
      %v947 = vpop.f32.mrf.mxu0
      %v948 = vadd.f32 0.0, %v947
      %v949 = vpop.f32.mrf.mxu0
      %v950 = vadd.f32 0.0, %v949
      %951 = vmatmul.bf16.gmra.mxu0 %v885
      %v952 = vpop.f32.mrf.mxu0
      %v953 = vadd.f32 0.0, %v952
      %v954 = vpop.f32.mrf.mxu0
      %v955 = vadd.f32 0.0, %v954
      %956 = vmatmul.bf16.gmra.mxu0 %v888
      %v957 = vpop.f32.mrf.mxu0
      %v958 = vadd.f32 0.0, %v957
      %v959 = vpop.f32.mrf.mxu0
      %v960 = vadd.f32 0.0, %v959
      %961 = vmatmul.bf16.gmra.mxu0 %v891
      %v962 = vpop.f32.mrf.mxu0
      %v963 = vadd.f32 0.0, %v962
      %v964 = vpop.f32.mrf.mxu0
      %v965 = vadd.f32 0.0, %v964
      %966 = vmatmul.bf16.gmra.mxu0 %v894
      %v967 = vpop.f32.mrf.mxu0
      %v968 = vadd.f32 0.0, %v967
      %v969 = vpop.f32.mrf.mxu0
      %v970 = vadd.f32 0.0, %v969
      %971 = vmatmul.bf16.gmra.mxu0 %v897
      %v972 = vpop.f32.mrf.mxu0
      %v973 = vadd.f32 0.0, %v972
      %v974 = vpop.f32.mrf.mxu0
      %v975 = vadd.f32 0.0, %v974
      %976 = vmatmul.bf16.gmra.mxu0 %v900
      %v977 = vpop.f32.mrf.mxu0
      %v978 = vadd.f32 0.0, %v977
      %v979 = vpop.f32.mrf.mxu0
      %v980 = vadd.f32 0.0, %v979
      %981 = vmatmul.bf16.gmra.mxu0 %v903
      %v982 = vpop.f32.mrf.mxu0
      %v983 = vadd.f32 0.0, %v982
      %v984 = vpop.f32.mrf.mxu0
      %v985 = vadd.f32 0.0, %v984
      %986 = vmatmul.bf16.gmra.mxu0 %v906
      %v987 = vpop.f32.mrf.mxu0
      %v988 = vadd.f32 0.0, %v987
      %v989 = vpop.f32.mrf.mxu0
      %v990 = vadd.f32 0.0, %v989
      %991 = vmatmul.bf16.gmra.mxu0 %v909
      %v992 = vpop.f32.mrf.mxu0
      %v993 = vadd.f32 0.0, %v992
      %v994 = vpop.f32.mrf.mxu0
      %v995 = vadd.f32 0.0, %v994
      %996 = vmatmul.bf16.gmra.mxu0 %v912
      %v997 = vpop.f32.mrf.mxu0
      %v998 = vadd.f32 0.0, %v997
      %v999 = vpop.f32.mrf.mxu0
      %v1000 = vadd.f32 0.0, %v999
      %1001 = vmatmul.bf16.gmra.mxu0 %v915
      %v1002 = vpop.f32.mrf.mxu0
      %v1003 = vadd.f32 0.0, %v1002
      %v1004 = vpop.f32.mrf.mxu0
      %v1005 = vadd.f32 0.0, %v1004
      %1006 = vmatmul.bf16.gmra.mxu0 %v918
      %v1007 = vpop.f32.mrf.mxu0
      %v1008 = vadd.f32 0.0, %v1007
      %v1009 = vpop.f32.mrf.mxu0
      %v1010 = vadd.f32 0.0, %v1009
      %1011 = vdwg.mxu0
      %1012 = vset.pattern.permute.xlu0 1
      %1013 = vperm.xlu0 %1012, %v372
      %v1014 = vpop.permute.xlu0 %1013
      %1016 = vset.pattern.permute.xlu0 1
      %1017 = vperm.xlu0 %1016, %v373
      %v1018 = vpop.permute.xlu0 %1017
      %1020 = vset.pattern.permute.xlu0 1
      %1021 = vperm.xlu0 %1020, %v374
      %v1022 = vpop.permute.xlu0 %1021
      %1024 = vset.pattern.permute.xlu0 1
      %1025 = vperm.xlu0 %1024, %v375
      %v1026 = vpop.permute.xlu0 %1025
      %1028 = vset.pattern.permute.xlu0 1
      %1029 = vperm.xlu0 %1028, %v376
      %v1030 = vpop.permute.xlu0 %1029
      %1032 = vset.pattern.permute.xlu0 1
      %1033 = vperm.xlu0 %1032, %v377
      %v1034 = vpop.permute.xlu0 %1033
      %1036 = vset.pattern.permute.xlu0 1
      %1037 = vperm.xlu0 %1036, %v378
      %v1038 = vpop.permute.xlu0 %1037
      %1040 = vset.pattern.permute.xlu0 1
      %1041 = vperm.xlu0 %1040, %v379
      %v1042 = vpop.permute.xlu0 %1041
      %1044 = vset.pattern.permute.xlu0 1
      %1045 = vperm.xlu0 %1044, %v380
      %v1046 = vpop.permute.xlu0 %1045
      %1048 = vset.pattern.permute.xlu0 1
      %1049 = vperm.xlu0 %1048, %v381
      %v1050 = vpop.permute.xlu0 %1049
      %1052 = vset.pattern.permute.xlu0 1
      %1053 = vperm.xlu0 %1052, %v382
      %v1054 = vpop.permute.xlu0 %1053
      %1056 = vset.pattern.permute.xlu0 1
      %1057 = vperm.xlu0 %1056, %v383
      %v1058 = vpop.permute.xlu0 %1057
      %1060 = vset.pattern.permute.xlu0 1
      %1061 = vperm.xlu0 %1060, %v384
      %v1062 = vpop.permute.xlu0 %1061
      %1064 = vset.pattern.permute.xlu0 1
      %1065 = vperm.xlu0 %1064, %v385
      %v1066 = vpop.permute.xlu0 %1065
      %1068 = vset.pattern.permute.xlu0 1
      %1069 = vperm.xlu0 %1068, %v386
      %v1070 = vpop.permute.xlu0 %1069
      %1072 = vset.pattern.permute.xlu0 1
      %1073 = vperm.xlu0 %1072, %v387
      %v1074 = vpop.permute.xlu0 %1073
      %1076 = vset.pattern.permute.xlu0 1
      %1077 = vperm.xlu0 %1076, %v388
      %v1078 = vpop.permute.xlu0 %1077
      %1080 = vset.pattern.permute.xlu0 1
      %1081 = vperm.xlu0 %1080, %v389
      %v1082 = vpop.permute.xlu0 %1081
      %1084 = vset.pattern.permute.xlu0 1
      %1085 = vperm.xlu0 %1084, %v390
      %v1086 = vpop.permute.xlu0 %1085
      %1088 = vset.pattern.permute.xlu0 1
      %1089 = vperm.xlu0 %1088, %v391
      %v1090 = vpop.permute.xlu0 %1089
      %1092 = vset.pattern.permute.xlu0 1
      %1093 = vperm.xlu0 %1092, %v392
      %v1094 = vpop.permute.xlu0 %1093
      %1096 = vset.pattern.permute.xlu0 1
      %1097 = vperm.xlu0 %1096, %v393
      %v1098 = vpop.permute.xlu0 %1097
      %1100 = vset.pattern.permute.xlu0 1
      %1101 = vperm.xlu0 %1100, %v394
      %v1102 = vpop.permute.xlu0 %1101
      %1104 = vset.pattern.permute.xlu0 1
      %1105 = vperm.xlu0 %1104, %v395
      %v1106 = vpop.permute.xlu0 %1105
      %1108 = vset.pattern.permute.xlu0 1
      %1109 = vperm.xlu0 %1108, %v396
      %v1110 = vpop.permute.xlu0 %1109
      %1112 = vset.pattern.permute.xlu0 1
      %1113 = vperm.xlu0 %1112, %v397
      %v1114 = vpop.permute.xlu0 %1113
      %1116 = vset.pattern.permute.xlu0 1
      %1117 = vperm.xlu0 %1116, %v398
      %v1118 = vpop.permute.xlu0 %1117
      %1120 = vset.pattern.permute.xlu0 1
      %1121 = vperm.xlu0 %1120, %v399
      %v1122 = vpop.permute.xlu0 %1121
      %1124 = vset.pattern.permute.xlu0 1
      %1125 = vperm.xlu0 %1124, %v400
      %v1126 = vpop.permute.xlu0 %1125
      %1128 = vset.pattern.permute.xlu0 1
      %1129 = vperm.xlu0 %1128, %v401
      %v1130 = vpop.permute.xlu0 %1129
      %1132 = vset.pattern.permute.xlu0 1
      %1133 = vperm.xlu0 %1132, %v402
      %v1134 = vpop.permute.xlu0 %1133
      %1136 = vset.pattern.permute.xlu0 1
      %1137 = vperm.xlu0 %1136, %v403
      %v1138 = vpop.permute.xlu0 %1137
      %v1140 = vmul.f32 %v933, %v1014
      %v1141 = vmul.f32 %v935, %v1018
      %v1142 = vmul.f32 %v938, %v1022
      %v1143 = vmul.f32 %v940, %v1026
      %v1144 = vmul.f32 %v943, %v1030
      %v1145 = vmul.f32 %v945, %v1034
      %v1146 = vmul.f32 %v948, %v1038
      %v1147 = vmul.f32 %v950, %v1042
      %v1148 = vmul.f32 %v953, %v1046
      %v1149 = vmul.f32 %v955, %v1050
      %v1150 = vmul.f32 %v958, %v1054
      %v1151 = vmul.f32 %v960, %v1058
      %v1152 = vmul.f32 %v963, %v1062
      %v1153 = vmul.f32 %v965, %v1066
      %v1154 = vmul.f32 %v968, %v1070
      %v1155 = vmul.f32 %v970, %v1074
      %v1156 = vmul.f32 %v973, %v1078
      %v1157 = vmul.f32 %v975, %v1082
      %v1158 = vmul.f32 %v978, %v1086
      %v1159 = vmul.f32 %v980, %v1090
      %v1160 = vmul.f32 %v983, %v1094
      %v1161 = vmul.f32 %v985, %v1098
      %v1162 = vmul.f32 %v988, %v1102
      %v1163 = vmul.f32 %v990, %v1106
      %v1164 = vmul.f32 %v993, %v1110
      %v1165 = vmul.f32 %v995, %v1114
      %v1166 = vmul.f32 %v998, %v1118
      %v1167 = vmul.f32 %v1000, %v1122
      %v1168 = vmul.f32 %v1003, %v1126
      %v1169 = vmul.f32 %v1005, %v1130
      %v1170 = vmul.f32 %v1008, %v1134
      %v1171 = vmul.f32 %v1010, %v1138
      %v1172 = vadd.f32 %v822, %v1140
      %v1173 = vadd.f32 %v823, %v1141
      %v1174 = vadd.f32 %v824, %v1142
      %v1175 = vadd.f32 %v825, %v1143
      %v1176 = vadd.f32 %v826, %v1144
      %v1177 = vadd.f32 %v827, %v1145
      %v1178 = vadd.f32 %v828, %v1146
      %v1179 = vadd.f32 %v829, %v1147
      %v1180 = vadd.f32 %v830, %v1148
      %v1181 = vadd.f32 %v831, %v1149
      %v1182 = vadd.f32 %v832, %v1150
      %v1183 = vadd.f32 %v833, %v1151
      %v1184 = vadd.f32 %v834, %v1152
      %v1185 = vadd.f32 %v835, %v1153
      %v1186 = vadd.f32 %v836, %v1154
      %v1187 = vadd.f32 %v837, %v1155
      %v1188 = vadd.f32 %v838, %v1156
      %v1189 = vadd.f32 %v839, %v1157
      %v1190 = vadd.f32 %v840, %v1158
      %v1191 = vadd.f32 %v841, %v1159
      %v1192 = vadd.f32 %v842, %v1160
      %v1193 = vadd.f32 %v843, %v1161
      %v1194 = vadd.f32 %v844, %v1162
      %v1195 = vadd.f32 %v845, %v1163
      %v1196 = vadd.f32 %v846, %v1164
      %v1197 = vadd.f32 %v847, %v1165
      %v1198 = vadd.f32 %v848, %v1166
      %v1199 = vadd.f32 %v849, %v1167
      %v1200 = vadd.f32 %v850, %v1168
      %v1201 = vadd.f32 %v851, %v1169
      %v1202 = vadd.f32 %v852, %v1170
      %v1203 = vadd.f32 %v853, %v1171
      %v1204 = vrot.slane %v340, 1
      %v1205 = vrot.slane %v341, 1
      %v1206 = vrot.slane %v342, 1
      %v1207 = vrot.slane %v343, 1
      %v1208 = vrot.slane %v344, 1
      %v1209 = vrot.slane %v345, 1
      %v1210 = vrot.slane %v346, 1
      %v1211 = vrot.slane %v347, 1
      %v1212 = vrot.slane %v348, 1
      %v1213 = vrot.slane %v349, 1
      %v1214 = vrot.slane %v350, 1
      %v1215 = vrot.slane %v351, 1
      %v1216 = vrot.slane %v352, 1
      %v1217 = vrot.slane %v353, 1
      %v1218 = vrot.slane %v354, 1
      %v1219 = vrot.slane %v355, 1
      %v1220 = vrot.slane %v356, 1
      %v1221 = vrot.slane %v357, 1
      %v1222 = vrot.slane %v358, 1
      %v1223 = vrot.slane %v359, 1
      %v1224 = vrot.slane %v360, 1
      %v1225 = vrot.slane %v361, 1
      %v1226 = vrot.slane %v362, 1
      %v1227 = vrot.slane %v363, 1
      %v1228 = vrot.slane %v364, 1
      %v1229 = vrot.slane %v365, 1
      %v1230 = vrot.slane %v366, 1
      %v1231 = vrot.slane %v367, 1
      %v1232 = vrot.slane %v368, 1
      %v1233 = vrot.slane %v369, 1
      %v1234 = vrot.slane %v370, 1
      %v1235 = vrot.slane %v371, 1
      %vm1236 = vcmp.lt.s32.totalorder %v437, 7
      %v1237 = vsel %vm1236, %v1234, %v1235
      %v1238 = vsel %vm1236, %v1233, %v1234
      %v1239 = vsel %vm1236, %v1232, %v1233
      %v1240 = vsel %vm1236, %v1231, %v1232
      %v1241 = vsel %vm1236, %v1230, %v1231
      %v1242 = vsel %vm1236, %v1229, %v1230
      %v1243 = vsel %vm1236, %v1228, %v1229
      %v1244 = vsel %vm1236, %v1227, %v1228
      %v1245 = vsel %vm1236, %v1226, %v1227
      %v1246 = vsel %vm1236, %v1225, %v1226
      %v1247 = vsel %vm1236, %v1224, %v1225
      %v1248 = vsel %vm1236, %v1223, %v1224
      %v1249 = vsel %vm1236, %v1222, %v1223
      %v1250 = vsel %vm1236, %v1221, %v1222
      %v1251 = vsel %vm1236, %v1220, %v1221
      %v1252 = vsel %vm1236, %v1219, %v1220
      %v1253 = vsel %vm1236, %v1218, %v1219
      %v1254 = vsel %vm1236, %v1217, %v1218
      %v1255 = vsel %vm1236, %v1216, %v1217
      %v1256 = vsel %vm1236, %v1215, %v1216
      %v1257 = vsel %vm1236, %v1214, %v1215
      %v1258 = vsel %vm1236, %v1213, %v1214
      %v1259 = vsel %vm1236, %v1212, %v1213
      %v1260 = vsel %vm1236, %v1211, %v1212
      %v1261 = vsel %vm1236, %v1210, %v1211
      %v1262 = vsel %vm1236, %v1209, %v1210
      %v1263 = vsel %vm1236, %v1208, %v1209
      %v1264 = vsel %vm1236, %v1207, %v1208
      %v1265 = vsel %vm1236, %v1206, %v1207
      %v1266 = vsel %vm1236, %v1205, %v1206
      %v1267 = vsel %vm1236, %v1204, %v1205
      %v1268 = vsel %vm1236, %v1235, %v1204
      %v1269 = vpack.c.bf16 %v1268, %v1237
      %v1270 = vpack.c.bf16 %v1266, %v1267
      %v1271 = vpack.c.bf16 %v1264, %v1265
      %v1272 = vpack.c.bf16 %v1262, %v1263
      %v1273 = vpack.c.bf16 %v1260, %v1261
      %v1274 = vpack.c.bf16 %v1258, %v1259
      %v1275 = vpack.c.bf16 %v1256, %v1257
      %v1276 = vpack.c.bf16 %v1254, %v1255
      %v1277 = vpack.c.bf16 %v1252, %v1253
      %v1278 = vpack.c.bf16 %v1250, %v1251
      %v1279 = vpack.c.bf16 %v1248, %v1249
      %v1280 = vpack.c.bf16 %v1246, %v1247
      %v1281 = vpack.c.bf16 %v1244, %v1245
      %v1282 = vpack.c.bf16 %v1242, %v1243
      %v1283 = vpack.c.bf16 %v1240, %v1241
      %v1284 = vpack.c.bf16 %v1238, %v1239
      %s1285 = scalar_lea.vmem %s1, 8
      %v1286 = vld [vmem:[%s1285] sm:$0xf]
      %v1288 = vsel %vm488, %v1269, 0
      %v1291 = vsel %vm488, %v1270, 0
      %v1294 = vsel %vm488, %v1271, 0
      %v1297 = vsel %vm488, %v1272, 0
      %v1300 = vsel %vm488, %v1273, 0
      %v1303 = vsel %vm488, %v1274, 0
      %v1306 = vsel %vm488, %v1275, 0
      %v1309 = vsel %vm488, %v1276, 0
      %v1312 = vsel %vm488, %v1277, 0
      %v1315 = vsel %vm488, %v1278, 0
      %v1318 = vsel %vm488, %v1279, 0
      %v1321 = vsel %vm488, %v1280, 0
      %v1324 = vsel %vm488, %v1281, 0
      %v1327 = vsel %vm488, %v1282, 0
      %v1330 = vsel %vm488, %v1283, 0
      %v1333 = vsel %vm488, %v1284, 0
      %v1336 = vsel %vm537, %v1286, 0
      %1338 = vmatpush.bf16.msra.mxu0 0
      %1339 = vmatpush.bf16.msra.mxu0 0
      %1340 = vmatpush.bf16.msra.mxu0 0
      %1341 = vmatpush.bf16.msra.mxu0 0
      %1342 = vmatpush.bf16.msra.mxu0 0
      %1343 = vmatpush.bf16.msra.mxu0 0
      %1344 = vmatpush.bf16.msra.mxu0 0
      %1345 = vmatpush.bf16.msra.mxu0 %v1336
      %1346 = vmatmul.bf16.gmra.mxu0 %v1288
      %v1347 = vpop.f32.mrf.mxu0
      %v1348 = vadd.f32 0.0, %v1347
      %v1349 = vpop.f32.mrf.mxu0
      %v1350 = vadd.f32 0.0, %v1349
      %1351 = vmatmul.bf16.gmra.mxu0 %v1291
      %v1352 = vpop.f32.mrf.mxu0
      %v1353 = vadd.f32 0.0, %v1352
      %v1354 = vpop.f32.mrf.mxu0
      %v1355 = vadd.f32 0.0, %v1354
      %1356 = vmatmul.bf16.gmra.mxu0 %v1294
      %v1357 = vpop.f32.mrf.mxu0
      %v1358 = vadd.f32 0.0, %v1357
      %v1359 = vpop.f32.mrf.mxu0
      %v1360 = vadd.f32 0.0, %v1359
      %1361 = vmatmul.bf16.gmra.mxu0 %v1297
      %v1362 = vpop.f32.mrf.mxu0
      %v1363 = vadd.f32 0.0, %v1362
      %v1364 = vpop.f32.mrf.mxu0
      %v1365 = vadd.f32 0.0, %v1364
      %1366 = vmatmul.bf16.gmra.mxu0 %v1300
      %v1367 = vpop.f32.mrf.mxu0
      %v1368 = vadd.f32 0.0, %v1367
      %v1369 = vpop.f32.mrf.mxu0
      %v1370 = vadd.f32 0.0, %v1369
      %1371 = vmatmul.bf16.gmra.mxu0 %v1303
      %v1372 = vpop.f32.mrf.mxu0
      %v1373 = vadd.f32 0.0, %v1372
      %v1374 = vpop.f32.mrf.mxu0
      %v1375 = vadd.f32 0.0, %v1374
      %1376 = vmatmul.bf16.gmra.mxu0 %v1306
      %v1377 = vpop.f32.mrf.mxu0
      %v1378 = vadd.f32 0.0, %v1377
      %v1379 = vpop.f32.mrf.mxu0
      %v1380 = vadd.f32 0.0, %v1379
      %1381 = vmatmul.bf16.gmra.mxu0 %v1309
      %v1382 = vpop.f32.mrf.mxu0
      %v1383 = vadd.f32 0.0, %v1382
      %v1384 = vpop.f32.mrf.mxu0
      %v1385 = vadd.f32 0.0, %v1384
      %1386 = vmatmul.bf16.gmra.mxu0 %v1312
      %v1387 = vpop.f32.mrf.mxu0
      %v1388 = vadd.f32 0.0, %v1387
      %v1389 = vpop.f32.mrf.mxu0
      %v1390 = vadd.f32 0.0, %v1389
      %1391 = vmatmul.bf16.gmra.mxu0 %v1315
      %v1392 = vpop.f32.mrf.mxu0
      %v1393 = vadd.f32 0.0, %v1392
      %v1394 = vpop.f32.mrf.mxu0
      %v1395 = vadd.f32 0.0, %v1394
      %1396 = vmatmul.bf16.gmra.mxu0 %v1318
      %v1397 = vpop.f32.mrf.mxu0
      %v1398 = vadd.f32 0.0, %v1397
      %v1399 = vpop.f32.mrf.mxu0
      %v1400 = vadd.f32 0.0, %v1399
      %1401 = vmatmul.bf16.gmra.mxu0 %v1321
      %v1402 = vpop.f32.mrf.mxu0
      %v1403 = vadd.f32 0.0, %v1402
      %v1404 = vpop.f32.mrf.mxu0
      %v1405 = vadd.f32 0.0, %v1404
      %1406 = vmatmul.bf16.gmra.mxu0 %v1324
      %v1407 = vpop.f32.mrf.mxu0
      %v1408 = vadd.f32 0.0, %v1407
      %v1409 = vpop.f32.mrf.mxu0
      %v1410 = vadd.f32 0.0, %v1409
      %1411 = vmatmul.bf16.gmra.mxu0 %v1327
      %v1412 = vpop.f32.mrf.mxu0
      %v1413 = vadd.f32 0.0, %v1412
      %v1414 = vpop.f32.mrf.mxu0
      %v1415 = vadd.f32 0.0, %v1414
      %1416 = vmatmul.bf16.gmra.mxu0 %v1330
      %v1417 = vpop.f32.mrf.mxu0
      %v1418 = vadd.f32 0.0, %v1417
      %v1419 = vpop.f32.mrf.mxu0
      %v1420 = vadd.f32 0.0, %v1419
      %1421 = vmatmul.bf16.gmra.mxu0 %v1333
      %v1422 = vpop.f32.mrf.mxu0
      %v1423 = vadd.f32 0.0, %v1422
      %v1424 = vpop.f32.mrf.mxu0
      %v1425 = vadd.f32 0.0, %v1424
      %1426 = vdwg.mxu0
      %1427 = vset.pattern.permute.xlu0 2
      %1428 = vperm.xlu0 %1427, %v372
      %v1429 = vpop.permute.xlu0 %1428
      %1431 = vset.pattern.permute.xlu0 2
      %1432 = vperm.xlu0 %1431, %v373
      %v1433 = vpop.permute.xlu0 %1432
      %1435 = vset.pattern.permute.xlu0 2
      %1436 = vperm.xlu0 %1435, %v374
      %v1437 = vpop.permute.xlu0 %1436
      %1439 = vset.pattern.permute.xlu0 2
      %1440 = vperm.xlu0 %1439, %v375
      %v1441 = vpop.permute.xlu0 %1440
      %1443 = vset.pattern.permute.xlu0 2
      %1444 = vperm.xlu0 %1443, %v376
      %v1445 = vpop.permute.xlu0 %1444
      %1447 = vset.pattern.permute.xlu0 2
      %1448 = vperm.xlu0 %1447, %v377
      %v1449 = vpop.permute.xlu0 %1448
      %1451 = vset.pattern.permute.xlu0 2
      %1452 = vperm.xlu0 %1451, %v378
      %v1453 = vpop.permute.xlu0 %1452
      %1455 = vset.pattern.permute.xlu0 2
      %1456 = vperm.xlu0 %1455, %v379
      %v1457 = vpop.permute.xlu0 %1456
      %1459 = vset.pattern.permute.xlu0 2
      %1460 = vperm.xlu0 %1459, %v380
      %v1461 = vpop.permute.xlu0 %1460
      %1463 = vset.pattern.permute.xlu0 2
      %1464 = vperm.xlu0 %1463, %v381
      %v1465 = vpop.permute.xlu0 %1464
      %1467 = vset.pattern.permute.xlu0 2
      %1468 = vperm.xlu0 %1467, %v382
      %v1469 = vpop.permute.xlu0 %1468
      %1471 = vset.pattern.permute.xlu0 2
      %1472 = vperm.xlu0 %1471, %v383
      %v1473 = vpop.permute.xlu0 %1472
      %1475 = vset.pattern.permute.xlu0 2
      %1476 = vperm.xlu0 %1475, %v384
      %v1477 = vpop.permute.xlu0 %1476
      %1479 = vset.pattern.permute.xlu0 2
      %1480 = vperm.xlu0 %1479, %v385
      %v1481 = vpop.permute.xlu0 %1480
      %1483 = vset.pattern.permute.xlu0 2
      %1484 = vperm.xlu0 %1483, %v386
      %v1485 = vpop.permute.xlu0 %1484
      %1487 = vset.pattern.permute.xlu0 2
      %1488 = vperm.xlu0 %1487, %v387
      %v1489 = vpop.permute.xlu0 %1488
      %1491 = vset.pattern.permute.xlu0 2
      %1492 = vperm.xlu0 %1491, %v388
      %v1493 = vpop.permute.xlu0 %1492
      %1495 = vset.pattern.permute.xlu0 2
      %1496 = vperm.xlu0 %1495, %v389
      %v1497 = vpop.permute.xlu0 %1496
      %1499 = vset.pattern.permute.xlu0 2
      %1500 = vperm.xlu0 %1499, %v390
      %v1501 = vpop.permute.xlu0 %1500
      %1503 = vset.pattern.permute.xlu0 2
      %1504 = vperm.xlu0 %1503, %v391
      %v1505 = vpop.permute.xlu0 %1504
      %1507 = vset.pattern.permute.xlu0 2
      %1508 = vperm.xlu0 %1507, %v392
      %v1509 = vpop.permute.xlu0 %1508
      %1511 = vset.pattern.permute.xlu0 2
      %1512 = vperm.xlu0 %1511, %v393
      %v1513 = vpop.permute.xlu0 %1512
      %1515 = vset.pattern.permute.xlu0 2
      %1516 = vperm.xlu0 %1515, %v394
      %v1517 = vpop.permute.xlu0 %1516
      %1519 = vset.pattern.permute.xlu0 2
      %1520 = vperm.xlu0 %1519, %v395
      %v1521 = vpop.permute.xlu0 %1520
      %1523 = vset.pattern.permute.xlu0 2
      %1524 = vperm.xlu0 %1523, %v396
      %v1525 = vpop.permute.xlu0 %1524
      %1527 = vset.pattern.permute.xlu0 2
      %1528 = vperm.xlu0 %1527, %v397
      %v1529 = vpop.permute.xlu0 %1528
      %1531 = vset.pattern.permute.xlu0 2
      %1532 = vperm.xlu0 %1531, %v398
      %v1533 = vpop.permute.xlu0 %1532
      %1535 = vset.pattern.permute.xlu0 2
      %1536 = vperm.xlu0 %1535, %v399
      %v1537 = vpop.permute.xlu0 %1536
      %1539 = vset.pattern.permute.xlu0 2
      %1540 = vperm.xlu0 %1539, %v400
      %v1541 = vpop.permute.xlu0 %1540
      %1543 = vset.pattern.permute.xlu0 2
      %1544 = vperm.xlu0 %1543, %v401
      %v1545 = vpop.permute.xlu0 %1544
      %1547 = vset.pattern.permute.xlu0 2
      %1548 = vperm.xlu0 %1547, %v402
      %v1549 = vpop.permute.xlu0 %1548
      %1551 = vset.pattern.permute.xlu0 2
      %1552 = vperm.xlu0 %1551, %v403
      %v1553 = vpop.permute.xlu0 %1552
      %v1555 = vmul.f32 %v1348, %v1429
      %v1556 = vmul.f32 %v1350, %v1433
      %v1557 = vmul.f32 %v1353, %v1437
      %v1558 = vmul.f32 %v1355, %v1441
      %v1559 = vmul.f32 %v1358, %v1445
      %v1560 = vmul.f32 %v1360, %v1449
      %v1561 = vmul.f32 %v1363, %v1453
      %v1562 = vmul.f32 %v1365, %v1457
      %v1563 = vmul.f32 %v1368, %v1461
      %v1564 = vmul.f32 %v1370, %v1465
      %v1565 = vmul.f32 %v1373, %v1469
      %v1566 = vmul.f32 %v1375, %v1473
      %v1567 = vmul.f32 %v1378, %v1477
      %v1568 = vmul.f32 %v1380, %v1481
      %v1569 = vmul.f32 %v1383, %v1485
      %v1570 = vmul.f32 %v1385, %v1489
      %v1571 = vmul.f32 %v1388, %v1493
      %v1572 = vmul.f32 %v1390, %v1497
      %v1573 = vmul.f32 %v1393, %v1501
      %v1574 = vmul.f32 %v1395, %v1505
      %v1575 = vmul.f32 %v1398, %v1509
      %v1576 = vmul.f32 %v1400, %v1513
      %v1577 = vmul.f32 %v1403, %v1517
      %v1578 = vmul.f32 %v1405, %v1521
      %v1579 = vmul.f32 %v1408, %v1525
      %v1580 = vmul.f32 %v1410, %v1529
      %v1581 = vmul.f32 %v1413, %v1533
      %v1582 = vmul.f32 %v1415, %v1537
      %v1583 = vmul.f32 %v1418, %v1541
      %v1584 = vmul.f32 %v1420, %v1545
      %v1585 = vmul.f32 %v1423, %v1549
      %v1586 = vmul.f32 %v1425, %v1553
      %v1587 = vadd.f32 %v1172, %v1555
      %v1588 = vadd.f32 %v1173, %v1556
      %v1589 = vadd.f32 %v1174, %v1557
      %v1590 = vadd.f32 %v1175, %v1558
      %v1591 = vadd.f32 %v1176, %v1559
      %v1592 = vadd.f32 %v1177, %v1560
      %v1593 = vadd.f32 %v1178, %v1561
      %v1594 = vadd.f32 %v1179, %v1562
      %v1595 = vadd.f32 %v1180, %v1563
      %v1596 = vadd.f32 %v1181, %v1564
      %v1597 = vadd.f32 %v1182, %v1565
      %v1598 = vadd.f32 %v1183, %v1566
      %v1599 = vadd.f32 %v1184, %v1567
      %v1600 = vadd.f32 %v1185, %v1568
      %v1601 = vadd.f32 %v1186, %v1569
      %v1602 = vadd.f32 %v1187, %v1570
      %v1603 = vadd.f32 %v1188, %v1571
      %v1604 = vadd.f32 %v1189, %v1572
      %v1605 = vadd.f32 %v1190, %v1573
      %v1606 = vadd.f32 %v1191, %v1574
      %v1607 = vadd.f32 %v1192, %v1575
      %v1608 = vadd.f32 %v1193, %v1576
      %v1609 = vadd.f32 %v1194, %v1577
      %v1610 = vadd.f32 %v1195, %v1578
      %v1611 = vadd.f32 %v1196, %v1579
      %v1612 = vadd.f32 %v1197, %v1580
      %v1613 = vadd.f32 %v1198, %v1581
      %v1614 = vadd.f32 %v1199, %v1582
      %v1615 = vadd.f32 %v1200, %v1583
      %v1616 = vadd.f32 %v1201, %v1584
      %v1617 = vadd.f32 %v1202, %v1585
      %v1618 = vadd.f32 %v1203, %v1586
      %s1619 = scalar_lea.vmem %s1, 12
      %v1620 = vld [vmem:[%s1619] sm:$0xf]
      %v1622 = vsel %vm537, %v1620, 0
      %1624 = vmatpush.bf16.msra.mxu0 0
      %1625 = vmatpush.bf16.msra.mxu0 0
      %1626 = vmatpush.bf16.msra.mxu0 0
      %1627 = vmatpush.bf16.msra.mxu0 0
      %1628 = vmatpush.bf16.msra.mxu0 0
      %1629 = vmatpush.bf16.msra.mxu0 0
      %1630 = vmatpush.bf16.msra.mxu0 0
      %1631 = vmatpush.bf16.msra.mxu0 %v1622
      %1632 = vmatmul.bf16.gmra.mxu0 %v493
      %v1633 = vpop.f32.mrf.mxu0
      %v1634 = vadd.f32 0.0, %v1633
      %v1635 = vpop.f32.mrf.mxu0
      %v1636 = vadd.f32 0.0, %v1635
      %1637 = vmatmul.bf16.gmra.mxu0 %v496
      %v1638 = vpop.f32.mrf.mxu0
      %v1639 = vadd.f32 0.0, %v1638
      %v1640 = vpop.f32.mrf.mxu0
      %v1641 = vadd.f32 0.0, %v1640
      %1642 = vmatmul.bf16.gmra.mxu0 %v499
      %v1643 = vpop.f32.mrf.mxu0
      %v1644 = vadd.f32 0.0, %v1643
      %v1645 = vpop.f32.mrf.mxu0
      %v1646 = vadd.f32 0.0, %v1645
      %1647 = vmatmul.bf16.gmra.mxu0 %v502
      %v1648 = vpop.f32.mrf.mxu0
      %v1649 = vadd.f32 0.0, %v1648
      %v1650 = vpop.f32.mrf.mxu0
      %v1651 = vadd.f32 0.0, %v1650
      %1652 = vmatmul.bf16.gmra.mxu0 %v505
      %v1653 = vpop.f32.mrf.mxu0
      %v1654 = vadd.f32 0.0, %v1653
      %v1655 = vpop.f32.mrf.mxu0
      %v1656 = vadd.f32 0.0, %v1655
      %1657 = vmatmul.bf16.gmra.mxu0 %v508
      %v1658 = vpop.f32.mrf.mxu0
      %v1659 = vadd.f32 0.0, %v1658
      %v1660 = vpop.f32.mrf.mxu0
      %v1661 = vadd.f32 0.0, %v1660
      %1662 = vmatmul.bf16.gmra.mxu0 %v511
      %v1663 = vpop.f32.mrf.mxu0
      %v1664 = vadd.f32 0.0, %v1663
      %v1665 = vpop.f32.mrf.mxu0
      %v1666 = vadd.f32 0.0, %v1665
      %1667 = vmatmul.bf16.gmra.mxu0 %v514
      %v1668 = vpop.f32.mrf.mxu0
      %v1669 = vadd.f32 0.0, %v1668
      %v1670 = vpop.f32.mrf.mxu0
      %v1671 = vadd.f32 0.0, %v1670
      %1672 = vmatmul.bf16.gmra.mxu0 %v517
      %v1673 = vpop.f32.mrf.mxu0
      %v1674 = vadd.f32 0.0, %v1673
      %v1675 = vpop.f32.mrf.mxu0
      %v1676 = vadd.f32 0.0, %v1675
      %1677 = vmatmul.bf16.gmra.mxu0 %v520
      %v1678 = vpop.f32.mrf.mxu0
      %v1679 = vadd.f32 0.0, %v1678
      %v1680 = vpop.f32.mrf.mxu0
      %v1681 = vadd.f32 0.0, %v1680
      %1682 = vmatmul.bf16.gmra.mxu0 %v523
      %v1683 = vpop.f32.mrf.mxu0
      %v1684 = vadd.f32 0.0, %v1683
      %v1685 = vpop.f32.mrf.mxu0
      %v1686 = vadd.f32 0.0, %v1685
      %1687 = vmatmul.bf16.gmra.mxu0 %v526
      %v1688 = vpop.f32.mrf.mxu0
      %v1689 = vadd.f32 0.0, %v1688
      %v1690 = vpop.f32.mrf.mxu0
      %v1691 = vadd.f32 0.0, %v1690
      %1692 = vmatmul.bf16.gmra.mxu0 %v529
      %v1693 = vpop.f32.mrf.mxu0
      %v1694 = vadd.f32 0.0, %v1693
      %v1695 = vpop.f32.mrf.mxu0
      %v1696 = vadd.f32 0.0, %v1695
      %1697 = vmatmul.bf16.gmra.mxu0 %v532
      %v1698 = vpop.f32.mrf.mxu0
      %v1699 = vadd.f32 0.0, %v1698
      %v1700 = vpop.f32.mrf.mxu0
      %v1701 = vadd.f32 0.0, %v1700
      %1702 = vmatmul.bf16.gmra.mxu0 %v535
      %v1703 = vpop.f32.mrf.mxu0
      %v1704 = vadd.f32 0.0, %v1703
      %v1705 = vpop.f32.mrf.mxu0
      %v1706 = vadd.f32 0.0, %v1705
      %1707 = vmatmul.bf16.gmra.mxu0 %v490
      %v1708 = vpop.f32.mrf.mxu0
      %v1709 = vadd.f32 0.0, %v1708
      %v1710 = vpop.f32.mrf.mxu0
      %v1711 = vadd.f32 0.0, %v1710
      %1712 = vdwg.mxu0
      %1713 = vset.pattern.permute.xlu0 3
      %1714 = vperm.xlu0 %1713, %v372
      %v1715 = vpop.permute.xlu0 %1714
      %1717 = vset.pattern.permute.xlu0 3
      %1718 = vperm.xlu0 %1717, %v373
      %v1719 = vpop.permute.xlu0 %1718
      %1721 = vset.pattern.permute.xlu0 3
      %1722 = vperm.xlu0 %1721, %v374
      %v1723 = vpop.permute.xlu0 %1722
      %1725 = vset.pattern.permute.xlu0 3
      %1726 = vperm.xlu0 %1725, %v375
      %v1727 = vpop.permute.xlu0 %1726
      %1729 = vset.pattern.permute.xlu0 3
      %1730 = vperm.xlu0 %1729, %v376
      %v1731 = vpop.permute.xlu0 %1730
      %1733 = vset.pattern.permute.xlu0 3
      %1734 = vperm.xlu0 %1733, %v377
      %v1735 = vpop.permute.xlu0 %1734
      %1737 = vset.pattern.permute.xlu0 3
      %1738 = vperm.xlu0 %1737, %v378
      %v1739 = vpop.permute.xlu0 %1738
      %1741 = vset.pattern.permute.xlu0 3
      %1742 = vperm.xlu0 %1741, %v379
      %v1743 = vpop.permute.xlu0 %1742
      %1745 = vset.pattern.permute.xlu0 3
      %1746 = vperm.xlu0 %1745, %v380
      %v1747 = vpop.permute.xlu0 %1746
      %1749 = vset.pattern.permute.xlu0 3
      %1750 = vperm.xlu0 %1749, %v381
      %v1751 = vpop.permute.xlu0 %1750
      %1753 = vset.pattern.permute.xlu0 3
      %1754 = vperm.xlu0 %1753, %v382
      %v1755 = vpop.permute.xlu0 %1754
      %1757 = vset.pattern.permute.xlu0 3
      %1758 = vperm.xlu0 %1757, %v383
      %v1759 = vpop.permute.xlu0 %1758
      %1761 = vset.pattern.permute.xlu0 3
      %1762 = vperm.xlu0 %1761, %v384
      %v1763 = vpop.permute.xlu0 %1762
      %1765 = vset.pattern.permute.xlu0 3
      %1766 = vperm.xlu0 %1765, %v385
      %v1767 = vpop.permute.xlu0 %1766
      %1769 = vset.pattern.permute.xlu0 3
      %1770 = vperm.xlu0 %1769, %v386
      %v1771 = vpop.permute.xlu0 %1770
      %1773 = vset.pattern.permute.xlu0 3
      %1774 = vperm.xlu0 %1773, %v387
      %v1775 = vpop.permute.xlu0 %1774
      %1777 = vset.pattern.permute.xlu0 3
      %1778 = vperm.xlu0 %1777, %v388
      %v1779 = vpop.permute.xlu0 %1778
      %1781 = vset.pattern.permute.xlu0 3
      %1782 = vperm.xlu0 %1781, %v389
      %v1783 = vpop.permute.xlu0 %1782
      %1785 = vset.pattern.permute.xlu0 3
      %1786 = vperm.xlu0 %1785, %v390
      %v1787 = vpop.permute.xlu0 %1786
      %1789 = vset.pattern.permute.xlu0 3
      %1790 = vperm.xlu0 %1789, %v391
      %v1791 = vpop.permute.xlu0 %1790
      %1793 = vset.pattern.permute.xlu0 3
      %1794 = vperm.xlu0 %1793, %v392
      %v1795 = vpop.permute.xlu0 %1794
      %1797 = vset.pattern.permute.xlu0 3
      %1798 = vperm.xlu0 %1797, %v393
      %v1799 = vpop.permute.xlu0 %1798
      %1801 = vset.pattern.permute.xlu0 3
      %1802 = vperm.xlu0 %1801, %v394
      %v1803 = vpop.permute.xlu0 %1802
      %1805 = vset.pattern.permute.xlu0 3
      %1806 = vperm.xlu0 %1805, %v395
      %v1807 = vpop.permute.xlu0 %1806
      %1809 = vset.pattern.permute.xlu0 3
      %1810 = vperm.xlu0 %1809, %v396
      %v1811 = vpop.permute.xlu0 %1810
      %1813 = vset.pattern.permute.xlu0 3
      %1814 = vperm.xlu0 %1813, %v397
      %v1815 = vpop.permute.xlu0 %1814
      %1817 = vset.pattern.permute.xlu0 3
      %1818 = vperm.xlu0 %1817, %v398
      %v1819 = vpop.permute.xlu0 %1818
      %1821 = vset.pattern.permute.xlu0 3
      %1822 = vperm.xlu0 %1821, %v399
      %v1823 = vpop.permute.xlu0 %1822
      %1825 = vset.pattern.permute.xlu0 3
      %1826 = vperm.xlu0 %1825, %v400
      %v1827 = vpop.permute.xlu0 %1826
      %1829 = vset.pattern.permute.xlu0 3
      %1830 = vperm.xlu0 %1829, %v401
      %v1831 = vpop.permute.xlu0 %1830
      %1833 = vset.pattern.permute.xlu0 3
      %1834 = vperm.xlu0 %1833, %v402
      %v1835 = vpop.permute.xlu0 %1834
      %1837 = vset.pattern.permute.xlu0 3
      %1838 = vperm.xlu0 %1837, %v403
      %v1839 = vpop.permute.xlu0 %1838
      %v1841 = vmul.f32 %v1634, %v1715
      %v1842 = vmul.f32 %v1636, %v1719
      %v1843 = vmul.f32 %v1639, %v1723
      %v1844 = vmul.f32 %v1641, %v1727
      %v1845 = vmul.f32 %v1644, %v1731
      %v1846 = vmul.f32 %v1646, %v1735
      %v1847 = vmul.f32 %v1649, %v1739
      %v1848 = vmul.f32 %v1651, %v1743
      %v1849 = vmul.f32 %v1654, %v1747
      %v1850 = vmul.f32 %v1656, %v1751
      %v1851 = vmul.f32 %v1659, %v1755
      %v1852 = vmul.f32 %v1661, %v1759
      %v1853 = vmul.f32 %v1664, %v1763
      %v1854 = vmul.f32 %v1666, %v1767
      %v1855 = vmul.f32 %v1669, %v1771
      %v1856 = vmul.f32 %v1671, %v1775
      %v1857 = vmul.f32 %v1674, %v1779
      %v1858 = vmul.f32 %v1676, %v1783
      %v1859 = vmul.f32 %v1679, %v1787
      %v1860 = vmul.f32 %v1681, %v1791
      %v1861 = vmul.f32 %v1684, %v1795
      %v1862 = vmul.f32 %v1686, %v1799
      %v1863 = vmul.f32 %v1689, %v1803
      %v1864 = vmul.f32 %v1691, %v1807
      %v1865 = vmul.f32 %v1694, %v1811
      %v1866 = vmul.f32 %v1696, %v1815
      %v1867 = vmul.f32 %v1699, %v1819
      %v1868 = vmul.f32 %v1701, %v1823
      %v1869 = vmul.f32 %v1704, %v1827
      %v1870 = vmul.f32 %v1706, %v1831
      %v1871 = vmul.f32 %v1709, %v1835
      %v1872 = vmul.f32 %v1711, %v1839
      %v1873 = vadd.f32 %v1587, %v1841
      %v1874 = vadd.f32 %v1588, %v1842
      %v1875 = vadd.f32 %v1589, %v1843
      %v1876 = vadd.f32 %v1590, %v1844
      %v1877 = vadd.f32 %v1591, %v1845
      %v1878 = vadd.f32 %v1592, %v1846
      %v1879 = vadd.f32 %v1593, %v1847
      %v1880 = vadd.f32 %v1594, %v1848
      %v1881 = vadd.f32 %v1595, %v1849
      %v1882 = vadd.f32 %v1596, %v1850
      %v1883 = vadd.f32 %v1597, %v1851
      %v1884 = vadd.f32 %v1598, %v1852
      %v1885 = vadd.f32 %v1599, %v1853
      %v1886 = vadd.f32 %v1600, %v1854
      %v1887 = vadd.f32 %v1601, %v1855
      %v1888 = vadd.f32 %v1602, %v1856
      %v1889 = vadd.f32 %v1603, %v1857
      %v1890 = vadd.f32 %v1604, %v1858
      %v1891 = vadd.f32 %v1605, %v1859
      %v1892 = vadd.f32 %v1606, %v1860
      %v1893 = vadd.f32 %v1607, %v1861
      %v1894 = vadd.f32 %v1608, %v1862
      %v1895 = vadd.f32 %v1609, %v1863
      %v1896 = vadd.f32 %v1610, %v1864
      %v1897 = vadd.f32 %v1611, %v1865
      %v1898 = vadd.f32 %v1612, %v1866
      %v1899 = vadd.f32 %v1613, %v1867
      %v1900 = vadd.f32 %v1614, %v1868
      %v1901 = vadd.f32 %v1615, %v1869
      %v1902 = vadd.f32 %v1616, %v1870
      %v1903 = vadd.f32 %v1617, %v1871
      %v1904 = vadd.f32 %v1618, %v1872
      %s1905 = scalar_lea.vmem %s1, 16
      %v1906 = vld [vmem:[%s1905] sm:$0xf]
      %v1908 = vsel %vm537, %v1906, 0
      %1910 = vmatpush.bf16.msra.mxu0 0
      %1911 = vmatpush.bf16.msra.mxu0 0
      %1912 = vmatpush.bf16.msra.mxu0 0
      %1913 = vmatpush.bf16.msra.mxu0 0
      %1914 = vmatpush.bf16.msra.mxu0 0
      %1915 = vmatpush.bf16.msra.mxu0 0
      %1916 = vmatpush.bf16.msra.mxu0 0
      %1917 = vmatpush.bf16.msra.mxu0 %v1908
      %1918 = vmatmul.bf16.gmra.mxu0 %v876
      %v1919 = vpop.f32.mrf.mxu0
      %v1920 = vadd.f32 0.0, %v1919
      %v1921 = vpop.f32.mrf.mxu0
      %v1922 = vadd.f32 0.0, %v1921
      %1923 = vmatmul.bf16.gmra.mxu0 %v879
      %v1924 = vpop.f32.mrf.mxu0
      %v1925 = vadd.f32 0.0, %v1924
      %v1926 = vpop.f32.mrf.mxu0
      %v1927 = vadd.f32 0.0, %v1926
      %1928 = vmatmul.bf16.gmra.mxu0 %v882
      %v1929 = vpop.f32.mrf.mxu0
      %v1930 = vadd.f32 0.0, %v1929
      %v1931 = vpop.f32.mrf.mxu0
      %v1932 = vadd.f32 0.0, %v1931
      %1933 = vmatmul.bf16.gmra.mxu0 %v885
      %v1934 = vpop.f32.mrf.mxu0
      %v1935 = vadd.f32 0.0, %v1934
      %v1936 = vpop.f32.mrf.mxu0
      %v1937 = vadd.f32 0.0, %v1936
      %1938 = vmatmul.bf16.gmra.mxu0 %v888
      %v1939 = vpop.f32.mrf.mxu0
      %v1940 = vadd.f32 0.0, %v1939
      %v1941 = vpop.f32.mrf.mxu0
      %v1942 = vadd.f32 0.0, %v1941
      %1943 = vmatmul.bf16.gmra.mxu0 %v891
      %v1944 = vpop.f32.mrf.mxu0
      %v1945 = vadd.f32 0.0, %v1944
      %v1946 = vpop.f32.mrf.mxu0
      %v1947 = vadd.f32 0.0, %v1946
      %1948 = vmatmul.bf16.gmra.mxu0 %v894
      %v1949 = vpop.f32.mrf.mxu0
      %v1950 = vadd.f32 0.0, %v1949
      %v1951 = vpop.f32.mrf.mxu0
      %v1952 = vadd.f32 0.0, %v1951
      %1953 = vmatmul.bf16.gmra.mxu0 %v897
      %v1954 = vpop.f32.mrf.mxu0
      %v1955 = vadd.f32 0.0, %v1954
      %v1956 = vpop.f32.mrf.mxu0
      %v1957 = vadd.f32 0.0, %v1956
      %1958 = vmatmul.bf16.gmra.mxu0 %v900
      %v1959 = vpop.f32.mrf.mxu0
      %v1960 = vadd.f32 0.0, %v1959
      %v1961 = vpop.f32.mrf.mxu0
      %v1962 = vadd.f32 0.0, %v1961
      %1963 = vmatmul.bf16.gmra.mxu0 %v903
      %v1964 = vpop.f32.mrf.mxu0
      %v1965 = vadd.f32 0.0, %v1964
      %v1966 = vpop.f32.mrf.mxu0
      %v1967 = vadd.f32 0.0, %v1966
      %1968 = vmatmul.bf16.gmra.mxu0 %v906
      %v1969 = vpop.f32.mrf.mxu0
      %v1970 = vadd.f32 0.0, %v1969
      %v1971 = vpop.f32.mrf.mxu0
      %v1972 = vadd.f32 0.0, %v1971
      %1973 = vmatmul.bf16.gmra.mxu0 %v909
      %v1974 = vpop.f32.mrf.mxu0
      %v1975 = vadd.f32 0.0, %v1974
      %v1976 = vpop.f32.mrf.mxu0
      %v1977 = vadd.f32 0.0, %v1976
      %1978 = vmatmul.bf16.gmra.mxu0 %v912
      %v1979 = vpop.f32.mrf.mxu0
      %v1980 = vadd.f32 0.0, %v1979
      %v1981 = vpop.f32.mrf.mxu0
      %v1982 = vadd.f32 0.0, %v1981
      %1983 = vmatmul.bf16.gmra.mxu0 %v915
      %v1984 = vpop.f32.mrf.mxu0
      %v1985 = vadd.f32 0.0, %v1984
      %v1986 = vpop.f32.mrf.mxu0
      %v1987 = vadd.f32 0.0, %v1986
      %1988 = vmatmul.bf16.gmra.mxu0 %v918
      %v1989 = vpop.f32.mrf.mxu0
      %v1990 = vadd.f32 0.0, %v1989
      %v1991 = vpop.f32.mrf.mxu0
      %v1992 = vadd.f32 0.0, %v1991
      %1993 = vmatmul.bf16.gmra.mxu0 %v873
      %v1994 = vpop.f32.mrf.mxu0
      %v1995 = vadd.f32 0.0, %v1994
      %v1996 = vpop.f32.mrf.mxu0
      %v1997 = vadd.f32 0.0, %v1996
      %1998 = vdwg.mxu0
      %v1999 = vadd.f32 %v1873, %v1920
      %v2000 = vadd.f32 %v1874, %v1922
      %v2001 = vadd.f32 %v1875, %v1925
      %v2002 = vadd.f32 %v1876, %v1927
      %v2003 = vadd.f32 %v1877, %v1930
      %v2004 = vadd.f32 %v1878, %v1932
      %v2005 = vadd.f32 %v1879, %v1935
      %v2006 = vadd.f32 %v1880, %v1937
      %v2007 = vadd.f32 %v1881, %v1940
      %v2008 = vadd.f32 %v1882, %v1942
      %v2009 = vadd.f32 %v1883, %v1945
      %v2010 = vadd.f32 %v1884, %v1947
      %v2011 = vadd.f32 %v1885, %v1950
      %v2012 = vadd.f32 %v1886, %v1952
      %v2013 = vadd.f32 %v1887, %v1955
      %v2014 = vadd.f32 %v1888, %v1957
      %v2015 = vadd.f32 %v1889, %v1960
      %v2016 = vadd.f32 %v1890, %v1962
      %v2017 = vadd.f32 %v1891, %v1965
      %v2018 = vadd.f32 %v1892, %v1967
      %v2019 = vadd.f32 %v1893, %v1970
      %v2020 = vadd.f32 %v1894, %v1972
      %v2021 = vadd.f32 %v1895, %v1975
      %v2022 = vadd.f32 %v1896, %v1977
      %v2023 = vadd.f32 %v1897, %v1980
      %v2024 = vadd.f32 %v1898, %v1982
      %v2025 = vadd.f32 %v1899, %v1985
      %v2026 = vadd.f32 %v1900, %v1987
      %v2027 = vadd.f32 %v1901, %v1990
      %v2028 = vadd.f32 %v1902, %v1992
      %v2029 = vadd.f32 %v1903, %v1995
      %v2030 = vadd.f32 %v1904, %v1997
      %s2031 = scalar_lea.vmem %s1, 20
      %v2032 = vld [vmem:[%s2031] sm:$0xf]
      %v2034 = vsel %vm537, %v2032, 0
      %2036 = vmatpush.bf16.msra.mxu0 0
      %2037 = vmatpush.bf16.msra.mxu0 0
      %2038 = vmatpush.bf16.msra.mxu0 0
      %2039 = vmatpush.bf16.msra.mxu0 0
      %2040 = vmatpush.bf16.msra.mxu0 0
      %2041 = vmatpush.bf16.msra.mxu0 0
      %2042 = vmatpush.bf16.msra.mxu0 0
      %2043 = vmatpush.bf16.msra.mxu0 %v2034
      %2044 = vmatmul.bf16.gmra.mxu0 %v1291
      %v2045 = vpop.f32.mrf.mxu0
      %v2046 = vadd.f32 0.0, %v2045
      %v2047 = vpop.f32.mrf.mxu0
      %v2048 = vadd.f32 0.0, %v2047
      %2049 = vmatmul.bf16.gmra.mxu0 %v1294
      %v2050 = vpop.f32.mrf.mxu0
      %v2051 = vadd.f32 0.0, %v2050
      %v2052 = vpop.f32.mrf.mxu0
      %v2053 = vadd.f32 0.0, %v2052
      %2054 = vmatmul.bf16.gmra.mxu0 %v1297
      %v2055 = vpop.f32.mrf.mxu0
      %v2056 = vadd.f32 0.0, %v2055
      %v2057 = vpop.f32.mrf.mxu0
      %v2058 = vadd.f32 0.0, %v2057
      %2059 = vmatmul.bf16.gmra.mxu0 %v1300
      %v2060 = vpop.f32.mrf.mxu0
      %v2061 = vadd.f32 0.0, %v2060
      %v2062 = vpop.f32.mrf.mxu0
      %v2063 = vadd.f32 0.0, %v2062
      %2064 = vmatmul.bf16.gmra.mxu0 %v1303
      %v2065 = vpop.f32.mrf.mxu0
      %v2066 = vadd.f32 0.0, %v2065
      %v2067 = vpop.f32.mrf.mxu0
      %v2068 = vadd.f32 0.0, %v2067
      %2069 = vmatmul.bf16.gmra.mxu0 %v1306
      %v2070 = vpop.f32.mrf.mxu0
      %v2071 = vadd.f32 0.0, %v2070
      %v2072 = vpop.f32.mrf.mxu0
      %v2073 = vadd.f32 0.0, %v2072
      %2074 = vmatmul.bf16.gmra.mxu0 %v1309
      %v2075 = vpop.f32.mrf.mxu0
      %v2076 = vadd.f32 0.0, %v2075
      %v2077 = vpop.f32.mrf.mxu0
      %v2078 = vadd.f32 0.0, %v2077
      %2079 = vmatmul.bf16.gmra.mxu0 %v1312
      %v2080 = vpop.f32.mrf.mxu0
      %v2081 = vadd.f32 0.0, %v2080
      %v2082 = vpop.f32.mrf.mxu0
      %v2083 = vadd.f32 0.0, %v2082
      %2084 = vmatmul.bf16.gmra.mxu0 %v1315
      %v2085 = vpop.f32.mrf.mxu0
      %v2086 = vadd.f32 0.0, %v2085
      %v2087 = vpop.f32.mrf.mxu0
      %v2088 = vadd.f32 0.0, %v2087
      %2089 = vmatmul.bf16.gmra.mxu0 %v1318
      %v2090 = vpop.f32.mrf.mxu0
      %v2091 = vadd.f32 0.0, %v2090
      %v2092 = vpop.f32.mrf.mxu0
      %v2093 = vadd.f32 0.0, %v2092
      %2094 = vmatmul.bf16.gmra.mxu0 %v1321
      %v2095 = vpop.f32.mrf.mxu0
      %v2096 = vadd.f32 0.0, %v2095
      %v2097 = vpop.f32.mrf.mxu0
      %v2098 = vadd.f32 0.0, %v2097
      %2099 = vmatmul.bf16.gmra.mxu0 %v1324
      %v2100 = vpop.f32.mrf.mxu0
      %v2101 = vadd.f32 0.0, %v2100
      %v2102 = vpop.f32.mrf.mxu0
      %v2103 = vadd.f32 0.0, %v2102
      %2104 = vmatmul.bf16.gmra.mxu0 %v1327
      %v2105 = vpop.f32.mrf.mxu0
      %v2106 = vadd.f32 0.0, %v2105
      %v2107 = vpop.f32.mrf.mxu0
      %v2108 = vadd.f32 0.0, %v2107
      %2109 = vmatmul.bf16.gmra.mxu0 %v1330
      %v2110 = vpop.f32.mrf.mxu0
      %v2111 = vadd.f32 0.0, %v2110
      %v2112 = vpop.f32.mrf.mxu0
      %v2113 = vadd.f32 0.0, %v2112
      %2114 = vmatmul.bf16.gmra.mxu0 %v1333
      %v2115 = vpop.f32.mrf.mxu0
      %v2116 = vadd.f32 0.0, %v2115
      %v2117 = vpop.f32.mrf.mxu0
      %v2118 = vadd.f32 0.0, %v2117
      %2119 = vmatmul.bf16.gmra.mxu0 %v1288
      %v2120 = vpop.f32.mrf.mxu0
      %v2121 = vadd.f32 0.0, %v2120
      %v2122 = vpop.f32.mrf.mxu0
      %v2123 = vadd.f32 0.0, %v2122
      %2124 = vdwg.mxu0
      %2125 = vset.pattern.permute.xlu0 5
      %2126 = vperm.xlu0 %2125, %v372
      %v2127 = vpop.permute.xlu0 %2126
      %2129 = vset.pattern.permute.xlu0 5
      %2130 = vperm.xlu0 %2129, %v373
      %v2131 = vpop.permute.xlu0 %2130
      %2133 = vset.pattern.permute.xlu0 5
      %2134 = vperm.xlu0 %2133, %v374
      %v2135 = vpop.permute.xlu0 %2134
      %2137 = vset.pattern.permute.xlu0 5
      %2138 = vperm.xlu0 %2137, %v375
      %v2139 = vpop.permute.xlu0 %2138
      %2141 = vset.pattern.permute.xlu0 5
      %2142 = vperm.xlu0 %2141, %v376
      %v2143 = vpop.permute.xlu0 %2142
      %2145 = vset.pattern.permute.xlu0 5
      %2146 = vperm.xlu0 %2145, %v377
      %v2147 = vpop.permute.xlu0 %2146
      %2149 = vset.pattern.permute.xlu0 5
      %2150 = vperm.xlu0 %2149, %v378
      %v2151 = vpop.permute.xlu0 %2150
      %2153 = vset.pattern.permute.xlu0 5
      %2154 = vperm.xlu0 %2153, %v379
      %v2155 = vpop.permute.xlu0 %2154
      %2157 = vset.pattern.permute.xlu0 5
      %2158 = vperm.xlu0 %2157, %v380
      %v2159 = vpop.permute.xlu0 %2158
      %2161 = vset.pattern.permute.xlu0 5
      %2162 = vperm.xlu0 %2161, %v381
      %v2163 = vpop.permute.xlu0 %2162
      %2165 = vset.pattern.permute.xlu0 5
      %2166 = vperm.xlu0 %2165, %v382
      %v2167 = vpop.permute.xlu0 %2166
      %2169 = vset.pattern.permute.xlu0 5
      %2170 = vperm.xlu0 %2169, %v383
      %v2171 = vpop.permute.xlu0 %2170
      %2173 = vset.pattern.permute.xlu0 5
      %2174 = vperm.xlu0 %2173, %v384
      %v2175 = vpop.permute.xlu0 %2174
      %2177 = vset.pattern.permute.xlu0 5
      %2178 = vperm.xlu0 %2177, %v385
      %v2179 = vpop.permute.xlu0 %2178
      %2181 = vset.pattern.permute.xlu0 5
      %2182 = vperm.xlu0 %2181, %v386
      %v2183 = vpop.permute.xlu0 %2182
      %2185 = vset.pattern.permute.xlu0 5
      %2186 = vperm.xlu0 %2185, %v387
      %v2187 = vpop.permute.xlu0 %2186
      %2189 = vset.pattern.permute.xlu0 5
      %2190 = vperm.xlu0 %2189, %v388
      %v2191 = vpop.permute.xlu0 %2190
      %2193 = vset.pattern.permute.xlu0 5
      %2194 = vperm.xlu0 %2193, %v389
      %v2195 = vpop.permute.xlu0 %2194
      %2197 = vset.pattern.permute.xlu0 5
      %2198 = vperm.xlu0 %2197, %v390
      %v2199 = vpop.permute.xlu0 %2198
      %2201 = vset.pattern.permute.xlu0 5
      %2202 = vperm.xlu0 %2201, %v391
      %v2203 = vpop.permute.xlu0 %2202
      %2205 = vset.pattern.permute.xlu0 5
      %2206 = vperm.xlu0 %2205, %v392
      %v2207 = vpop.permute.xlu0 %2206
      %2209 = vset.pattern.permute.xlu0 5
      %2210 = vperm.xlu0 %2209, %v393
      %v2211 = vpop.permute.xlu0 %2210
      %2213 = vset.pattern.permute.xlu0 5
      %2214 = vperm.xlu0 %2213, %v394
      %v2215 = vpop.permute.xlu0 %2214
      %2217 = vset.pattern.permute.xlu0 5
      %2218 = vperm.xlu0 %2217, %v395
      %v2219 = vpop.permute.xlu0 %2218
      %2221 = vset.pattern.permute.xlu0 5
      %2222 = vperm.xlu0 %2221, %v396
      %v2223 = vpop.permute.xlu0 %2222
      %2225 = vset.pattern.permute.xlu0 5
      %2226 = vperm.xlu0 %2225, %v397
      %v2227 = vpop.permute.xlu0 %2226
      %2229 = vset.pattern.permute.xlu0 5
      %2230 = vperm.xlu0 %2229, %v398
      %v2231 = vpop.permute.xlu0 %2230
      %2233 = vset.pattern.permute.xlu0 5
      %2234 = vperm.xlu0 %2233, %v399
      %v2235 = vpop.permute.xlu0 %2234
      %2237 = vset.pattern.permute.xlu0 5
      %2238 = vperm.xlu0 %2237, %v400
      %v2239 = vpop.permute.xlu0 %2238
      %2241 = vset.pattern.permute.xlu0 5
      %2242 = vperm.xlu0 %2241, %v401
      %v2243 = vpop.permute.xlu0 %2242
      %2245 = vset.pattern.permute.xlu0 5
      %2246 = vperm.xlu0 %2245, %v402
      %v2247 = vpop.permute.xlu0 %2246
      %2249 = vset.pattern.permute.xlu0 5
      %2250 = vperm.xlu0 %2249, %v403
      %v2251 = vpop.permute.xlu0 %2250
      %v2253 = vmul.f32 %v2046, %v2127
      %v2254 = vmul.f32 %v2048, %v2131
      %v2255 = vmul.f32 %v2051, %v2135
      %v2256 = vmul.f32 %v2053, %v2139
      %v2257 = vmul.f32 %v2056, %v2143
      %v2258 = vmul.f32 %v2058, %v2147
      %v2259 = vmul.f32 %v2061, %v2151
      %v2260 = vmul.f32 %v2063, %v2155
      %v2261 = vmul.f32 %v2066, %v2159
      %v2262 = vmul.f32 %v2068, %v2163
      %v2263 = vmul.f32 %v2071, %v2167
      %v2264 = vmul.f32 %v2073, %v2171
      %v2265 = vmul.f32 %v2076, %v2175
      %v2266 = vmul.f32 %v2078, %v2179
      %v2267 = vmul.f32 %v2081, %v2183
      %v2268 = vmul.f32 %v2083, %v2187
      %v2269 = vmul.f32 %v2086, %v2191
      %v2270 = vmul.f32 %v2088, %v2195
      %v2271 = vmul.f32 %v2091, %v2199
      %v2272 = vmul.f32 %v2093, %v2203
      %v2273 = vmul.f32 %v2096, %v2207
      %v2274 = vmul.f32 %v2098, %v2211
      %v2275 = vmul.f32 %v2101, %v2215
      %v2276 = vmul.f32 %v2103, %v2219
      %v2277 = vmul.f32 %v2106, %v2223
      %v2278 = vmul.f32 %v2108, %v2227
      %v2279 = vmul.f32 %v2111, %v2231
      %v2280 = vmul.f32 %v2113, %v2235
      %v2281 = vmul.f32 %v2116, %v2239
      %v2282 = vmul.f32 %v2118, %v2243
      %v2283 = vmul.f32 %v2121, %v2247
      %v2284 = vmul.f32 %v2123, %v2251
      %v2285 = vadd.f32 %v1999, %v2253
      %v2286 = vadd.f32 %v2000, %v2254
      %v2287 = vadd.f32 %v2001, %v2255
      %v2288 = vadd.f32 %v2002, %v2256
      %v2289 = vadd.f32 %v2003, %v2257
      %v2290 = vadd.f32 %v2004, %v2258
      %v2291 = vadd.f32 %v2005, %v2259
      %v2292 = vadd.f32 %v2006, %v2260
      %v2293 = vadd.f32 %v2007, %v2261
      %v2294 = vadd.f32 %v2008, %v2262
      %v2295 = vadd.f32 %v2009, %v2263
      %v2296 = vadd.f32 %v2010, %v2264
      %v2297 = vadd.f32 %v2011, %v2265
      %v2298 = vadd.f32 %v2012, %v2266
      %v2299 = vadd.f32 %v2013, %v2267
      %v2300 = vadd.f32 %v2014, %v2268
      %v2301 = vadd.f32 %v2015, %v2269
      %v2302 = vadd.f32 %v2016, %v2270
      %v2303 = vadd.f32 %v2017, %v2271
      %v2304 = vadd.f32 %v2018, %v2272
      %v2305 = vadd.f32 %v2019, %v2273
      %v2306 = vadd.f32 %v2020, %v2274
      %v2307 = vadd.f32 %v2021, %v2275
      %v2308 = vadd.f32 %v2022, %v2276
      %v2309 = vadd.f32 %v2023, %v2277
      %v2310 = vadd.f32 %v2024, %v2278
      %v2311 = vadd.f32 %v2025, %v2279
      %v2312 = vadd.f32 %v2026, %v2280
      %v2313 = vadd.f32 %v2027, %v2281
      %v2314 = vadd.f32 %v2028, %v2282
      %v2315 = vadd.f32 %v2029, %v2283
      %v2316 = vadd.f32 %v2030, %v2284
      %s2317 = scalar_lea.vmem %s1, 24
      %v2318 = vld [vmem:[%s2317] sm:$0xf]
      %v2320 = vsel %vm537, %v2318, 0
      %2322 = vmatpush.bf16.msra.mxu0 0
      %2323 = vmatpush.bf16.msra.mxu0 0
      %2324 = vmatpush.bf16.msra.mxu0 0
      %2325 = vmatpush.bf16.msra.mxu0 0
      %2326 = vmatpush.bf16.msra.mxu0 0
      %2327 = vmatpush.bf16.msra.mxu0 0
      %2328 = vmatpush.bf16.msra.mxu0 0
      %2329 = vmatpush.bf16.msra.mxu0 %v2320
      %2330 = vmatmul.bf16.gmra.mxu0 %v496
      %v2331 = vpop.f32.mrf.mxu0
      %v2332 = vadd.f32 0.0, %v2331
      %v2333 = vpop.f32.mrf.mxu0
      %v2334 = vadd.f32 0.0, %v2333
      %2335 = vmatmul.bf16.gmra.mxu0 %v499
      %v2336 = vpop.f32.mrf.mxu0
      %v2337 = vadd.f32 0.0, %v2336
      %v2338 = vpop.f32.mrf.mxu0
      %v2339 = vadd.f32 0.0, %v2338
      %2340 = vmatmul.bf16.gmra.mxu0 %v502
      %v2341 = vpop.f32.mrf.mxu0
      %v2342 = vadd.f32 0.0, %v2341
      %v2343 = vpop.f32.mrf.mxu0
      %v2344 = vadd.f32 0.0, %v2343
      %2345 = vmatmul.bf16.gmra.mxu0 %v505
      %v2346 = vpop.f32.mrf.mxu0
      %v2347 = vadd.f32 0.0, %v2346
      %v2348 = vpop.f32.mrf.mxu0
      %v2349 = vadd.f32 0.0, %v2348
      %2350 = vmatmul.bf16.gmra.mxu0 %v508
      %v2351 = vpop.f32.mrf.mxu0
      %v2352 = vadd.f32 0.0, %v2351
      %v2353 = vpop.f32.mrf.mxu0
      %v2354 = vadd.f32 0.0, %v2353
      %2355 = vmatmul.bf16.gmra.mxu0 %v511
      %v2356 = vpop.f32.mrf.mxu0
      %v2357 = vadd.f32 0.0, %v2356
      %v2358 = vpop.f32.mrf.mxu0
      %v2359 = vadd.f32 0.0, %v2358
      %2360 = vmatmul.bf16.gmra.mxu0 %v514
      %v2361 = vpop.f32.mrf.mxu0
      %v2362 = vadd.f32 0.0, %v2361
      %v2363 = vpop.f32.mrf.mxu0
      %v2364 = vadd.f32 0.0, %v2363
      %2365 = vmatmul.bf16.gmra.mxu0 %v517
      %v2366 = vpop.f32.mrf.mxu0
      %v2367 = vadd.f32 0.0, %v2366
      %v2368 = vpop.f32.mrf.mxu0
      %v2369 = vadd.f32 0.0, %v2368
      %2370 = vmatmul.bf16.gmra.mxu0 %v520
      %v2371 = vpop.f32.mrf.mxu0
      %v2372 = vadd.f32 0.0, %v2371
      %v2373 = vpop.f32.mrf.mxu0
      %v2374 = vadd.f32 0.0, %v2373
      %2375 = vmatmul.bf16.gmra.mxu0 %v523
      %v2376 = vpop.f32.mrf.mxu0
      %v2377 = vadd.f32 0.0, %v2376
      %v2378 = vpop.f32.mrf.mxu0
      %v2379 = vadd.f32 0.0, %v2378
      %2380 = vmatmul.bf16.gmra.mxu0 %v526
      %v2381 = vpop.f32.mrf.mxu0
      %v2382 = vadd.f32 0.0, %v2381
      %v2383 = vpop.f32.mrf.mxu0
      %v2384 = vadd.f32 0.0, %v2383
      %2385 = vmatmul.bf16.gmra.mxu0 %v529
      %v2386 = vpop.f32.mrf.mxu0
      %v2387 = vadd.f32 0.0, %v2386
      %v2388 = vpop.f32.mrf.mxu0
      %v2389 = vadd.f32 0.0, %v2388
      %2390 = vmatmul.bf16.gmra.mxu0 %v532
      %v2391 = vpop.f32.mrf.mxu0
      %v2392 = vadd.f32 0.0, %v2391
      %v2393 = vpop.f32.mrf.mxu0
      %v2394 = vadd.f32 0.0, %v2393
      %2395 = vmatmul.bf16.gmra.mxu0 %v535
      %v2396 = vpop.f32.mrf.mxu0
      %v2397 = vadd.f32 0.0, %v2396
      %v2398 = vpop.f32.mrf.mxu0
      %v2399 = vadd.f32 0.0, %v2398
      %2400 = vmatmul.bf16.gmra.mxu0 %v490
      %v2401 = vpop.f32.mrf.mxu0
      %v2402 = vadd.f32 0.0, %v2401
      %v2403 = vpop.f32.mrf.mxu0
      %v2404 = vadd.f32 0.0, %v2403
      %2405 = vmatmul.bf16.gmra.mxu0 %v493
      %v2406 = vpop.f32.mrf.mxu0
      %v2407 = vadd.f32 0.0, %v2406
      %v2408 = vpop.f32.mrf.mxu0
      %v2409 = vadd.f32 0.0, %v2408
      %2410 = vdwg.mxu0
      %2411 = vset.pattern.permute.xlu0 6
      %2412 = vperm.xlu0 %2411, %v372
      %v2413 = vpop.permute.xlu0 %2412
      %2415 = vset.pattern.permute.xlu0 6
      %2416 = vperm.xlu0 %2415, %v373
      %v2417 = vpop.permute.xlu0 %2416
      %2419 = vset.pattern.permute.xlu0 6
      %2420 = vperm.xlu0 %2419, %v374
      %v2421 = vpop.permute.xlu0 %2420
      %2423 = vset.pattern.permute.xlu0 6
      %2424 = vperm.xlu0 %2423, %v375
      %v2425 = vpop.permute.xlu0 %2424
      %2427 = vset.pattern.permute.xlu0 6
      %2428 = vperm.xlu0 %2427, %v376
      %v2429 = vpop.permute.xlu0 %2428
      %2431 = vset.pattern.permute.xlu0 6
      %2432 = vperm.xlu0 %2431, %v377
      %v2433 = vpop.permute.xlu0 %2432
      %2435 = vset.pattern.permute.xlu0 6
      %2436 = vperm.xlu0 %2435, %v378
      %v2437 = vpop.permute.xlu0 %2436
      %2439 = vset.pattern.permute.xlu0 6
      %2440 = vperm.xlu0 %2439, %v379
      %v2441 = vpop.permute.xlu0 %2440
      %2443 = vset.pattern.permute.xlu0 6
      %2444 = vperm.xlu0 %2443, %v380
      %v2445 = vpop.permute.xlu0 %2444
      %2447 = vset.pattern.permute.xlu0 6
      %2448 = vperm.xlu0 %2447, %v381
      %v2449 = vpop.permute.xlu0 %2448
      %2451 = vset.pattern.permute.xlu0 6
      %2452 = vperm.xlu0 %2451, %v382
      %v2453 = vpop.permute.xlu0 %2452
      %2455 = vset.pattern.permute.xlu0 6
      %2456 = vperm.xlu0 %2455, %v383
      %v2457 = vpop.permute.xlu0 %2456
      %2459 = vset.pattern.permute.xlu0 6
      %2460 = vperm.xlu0 %2459, %v384
      %v2461 = vpop.permute.xlu0 %2460
      %2463 = vset.pattern.permute.xlu0 6
      %2464 = vperm.xlu0 %2463, %v385
      %v2465 = vpop.permute.xlu0 %2464
      %2467 = vset.pattern.permute.xlu0 6
      %2468 = vperm.xlu0 %2467, %v386
      %v2469 = vpop.permute.xlu0 %2468
      %2471 = vset.pattern.permute.xlu0 6
      %2472 = vperm.xlu0 %2471, %v387
      %v2473 = vpop.permute.xlu0 %2472
      %2475 = vset.pattern.permute.xlu0 6
      %2476 = vperm.xlu0 %2475, %v388
      %v2477 = vpop.permute.xlu0 %2476
      %2479 = vset.pattern.permute.xlu0 6
      %2480 = vperm.xlu0 %2479, %v389
      %v2481 = vpop.permute.xlu0 %2480
      %2483 = vset.pattern.permute.xlu0 6
      %2484 = vperm.xlu0 %2483, %v390
      %v2485 = vpop.permute.xlu0 %2484
      %2487 = vset.pattern.permute.xlu0 6
      %2488 = vperm.xlu0 %2487, %v391
      %v2489 = vpop.permute.xlu0 %2488
      %2491 = vset.pattern.permute.xlu0 6
      %2492 = vperm.xlu0 %2491, %v392
      %v2493 = vpop.permute.xlu0 %2492
      %2495 = vset.pattern.permute.xlu0 6
      %2496 = vperm.xlu0 %2495, %v393
      %v2497 = vpop.permute.xlu0 %2496
      %2499 = vset.pattern.permute.xlu0 6
      %2500 = vperm.xlu0 %2499, %v394
      %v2501 = vpop.permute.xlu0 %2500
      %2503 = vset.pattern.permute.xlu0 6
      %2504 = vperm.xlu0 %2503, %v395
      %v2505 = vpop.permute.xlu0 %2504
      %2507 = vset.pattern.permute.xlu0 6
      %2508 = vperm.xlu0 %2507, %v396
      %v2509 = vpop.permute.xlu0 %2508
      %2511 = vset.pattern.permute.xlu0 6
      %2512 = vperm.xlu0 %2511, %v397
      %v2513 = vpop.permute.xlu0 %2512
      %2515 = vset.pattern.permute.xlu0 6
      %2516 = vperm.xlu0 %2515, %v398
      %v2517 = vpop.permute.xlu0 %2516
      %2519 = vset.pattern.permute.xlu0 6
      %2520 = vperm.xlu0 %2519, %v399
      %v2521 = vpop.permute.xlu0 %2520
      %2523 = vset.pattern.permute.xlu0 6
      %2524 = vperm.xlu0 %2523, %v400
      %v2525 = vpop.permute.xlu0 %2524
      %2527 = vset.pattern.permute.xlu0 6
      %2528 = vperm.xlu0 %2527, %v401
      %v2529 = vpop.permute.xlu0 %2528
      %2531 = vset.pattern.permute.xlu0 6
      %2532 = vperm.xlu0 %2531, %v402
      %v2533 = vpop.permute.xlu0 %2532
      %2535 = vset.pattern.permute.xlu0 6
      %2536 = vperm.xlu0 %2535, %v403
      %v2537 = vpop.permute.xlu0 %2536
      %v2539 = vmul.f32 %v2332, %v2413
      %v2540 = vmul.f32 %v2334, %v2417
      %v2541 = vmul.f32 %v2337, %v2421
      %v2542 = vmul.f32 %v2339, %v2425
      %v2543 = vmul.f32 %v2342, %v2429
      %v2544 = vmul.f32 %v2344, %v2433
      %v2545 = vmul.f32 %v2347, %v2437
      %v2546 = vmul.f32 %v2349, %v2441
      %v2547 = vmul.f32 %v2352, %v2445
      %v2548 = vmul.f32 %v2354, %v2449
      %v2549 = vmul.f32 %v2357, %v2453
      %v2550 = vmul.f32 %v2359, %v2457
      %v2551 = vmul.f32 %v2362, %v2461
      %v2552 = vmul.f32 %v2364, %v2465
      %v2553 = vmul.f32 %v2367, %v2469
      %v2554 = vmul.f32 %v2369, %v2473
      %v2555 = vmul.f32 %v2372, %v2477
      %v2556 = vmul.f32 %v2374, %v2481
      %v2557 = vmul.f32 %v2377, %v2485
      %v2558 = vmul.f32 %v2379, %v2489
      %v2559 = vmul.f32 %v2382, %v2493
      %v2560 = vmul.f32 %v2384, %v2497
      %v2561 = vmul.f32 %v2387, %v2501
      %v2562 = vmul.f32 %v2389, %v2505
      %v2563 = vmul.f32 %v2392, %v2509
      %v2564 = vmul.f32 %v2394, %v2513
      %v2565 = vmul.f32 %v2397, %v2517
      %v2566 = vmul.f32 %v2399, %v2521
      %v2567 = vmul.f32 %v2402, %v2525
      %v2568 = vmul.f32 %v2404, %v2529
      %v2569 = vmul.f32 %v2407, %v2533
      %v2570 = vmul.f32 %v2409, %v2537
      %v2571 = vadd.f32 %v2285, %v2539
      %v2572 = vadd.f32 %v2286, %v2540
      %v2573 = vadd.f32 %v2287, %v2541
      %v2574 = vadd.f32 %v2288, %v2542
      %v2575 = vadd.f32 %v2289, %v2543
      %v2576 = vadd.f32 %v2290, %v2544
      %v2577 = vadd.f32 %v2291, %v2545
      %v2578 = vadd.f32 %v2292, %v2546
      %v2579 = vadd.f32 %v2293, %v2547
      %v2580 = vadd.f32 %v2294, %v2548
      %v2581 = vadd.f32 %v2295, %v2549
      %v2582 = vadd.f32 %v2296, %v2550
      %v2583 = vadd.f32 %v2297, %v2551
      %v2584 = vadd.f32 %v2298, %v2552
      %v2585 = vadd.f32 %v2299, %v2553
      %v2586 = vadd.f32 %v2300, %v2554
      %v2587 = vadd.f32 %v2301, %v2555
      %v2588 = vadd.f32 %v2302, %v2556
      %v2589 = vadd.f32 %v2303, %v2557
      %v2590 = vadd.f32 %v2304, %v2558
      %v2591 = vadd.f32 %v2305, %v2559
      %v2592 = vadd.f32 %v2306, %v2560
      %v2593 = vadd.f32 %v2307, %v2561
      %v2594 = vadd.f32 %v2308, %v2562
      %v2595 = vadd.f32 %v2309, %v2563
      %v2596 = vadd.f32 %v2310, %v2564
      %v2597 = vadd.f32 %v2311, %v2565
      %v2598 = vadd.f32 %v2312, %v2566
      %v2599 = vadd.f32 %v2313, %v2567
      %v2600 = vadd.f32 %v2314, %v2568
      %v2601 = vadd.f32 %v2315, %v2569
      %v2602 = vadd.f32 %v2316, %v2570
      %s2603 = scalar_lea.vmem %s1, 28
      %v2604 = vld [vmem:[%s2603] sm:$0xf]
      %v2606 = vsel %vm537, %v2604, 0
      %2608 = vmatpush.bf16.msra.mxu0 0
      %2609 = vmatpush.bf16.msra.mxu0 0
      %2610 = vmatpush.bf16.msra.mxu0 0
      %2611 = vmatpush.bf16.msra.mxu0 0
      %2612 = vmatpush.bf16.msra.mxu0 0
      %2613 = vmatpush.bf16.msra.mxu0 0
      %2614 = vmatpush.bf16.msra.mxu0 0
      %2615 = vmatpush.bf16.msra.mxu0 %v2606
      %2616 = vmatmul.bf16.gmra.mxu0 %v879
      %v2617 = vpop.f32.mrf.mxu0
      %v2618 = vadd.f32 0.0, %v2617
      %v2619 = vpop.f32.mrf.mxu0
      %v2620 = vadd.f32 0.0, %v2619
      %2621 = vmatmul.bf16.gmra.mxu0 %v882
      %v2622 = vpop.f32.mrf.mxu0
      %v2623 = vadd.f32 0.0, %v2622
      %v2624 = vpop.f32.mrf.mxu0
      %v2625 = vadd.f32 0.0, %v2624
      %2626 = vmatmul.bf16.gmra.mxu0 %v885
      %v2627 = vpop.f32.mrf.mxu0
      %v2628 = vadd.f32 0.0, %v2627
      %v2629 = vpop.f32.mrf.mxu0
      %v2630 = vadd.f32 0.0, %v2629
      %2631 = vmatmul.bf16.gmra.mxu0 %v888
      %v2632 = vpop.f32.mrf.mxu0
      %v2633 = vadd.f32 0.0, %v2632
      %v2634 = vpop.f32.mrf.mxu0
      %v2635 = vadd.f32 0.0, %v2634
      %2636 = vmatmul.bf16.gmra.mxu0 %v891
      %v2637 = vpop.f32.mrf.mxu0
      %v2638 = vadd.f32 0.0, %v2637
      %v2639 = vpop.f32.mrf.mxu0
      %v2640 = vadd.f32 0.0, %v2639
      %2641 = vmatmul.bf16.gmra.mxu0 %v894
      %v2642 = vpop.f32.mrf.mxu0
      %v2643 = vadd.f32 0.0, %v2642
      %v2644 = vpop.f32.mrf.mxu0
      %v2645 = vadd.f32 0.0, %v2644
      %2646 = vmatmul.bf16.gmra.mxu0 %v897
      %v2647 = vpop.f32.mrf.mxu0
      %v2648 = vadd.f32 0.0, %v2647
      %v2649 = vpop.f32.mrf.mxu0
      %v2650 = vadd.f32 0.0, %v2649
      %2651 = vmatmul.bf16.gmra.mxu0 %v900
      %v2652 = vpop.f32.mrf.mxu0
      %v2653 = vadd.f32 0.0, %v2652
      %v2654 = vpop.f32.mrf.mxu0
      %v2655 = vadd.f32 0.0, %v2654
      %2656 = vmatmul.bf16.gmra.mxu0 %v903
      %v2657 = vpop.f32.mrf.mxu0
      %v2658 = vadd.f32 0.0, %v2657
      %v2659 = vpop.f32.mrf.mxu0
      %v2660 = vadd.f32 0.0, %v2659
      %2661 = vmatmul.bf16.gmra.mxu0 %v906
      %v2662 = vpop.f32.mrf.mxu0
      %v2663 = vadd.f32 0.0, %v2662
      %v2664 = vpop.f32.mrf.mxu0
      %v2665 = vadd.f32 0.0, %v2664
      %2666 = vmatmul.bf16.gmra.mxu0 %v909
      %v2667 = vpop.f32.mrf.mxu0
      %v2668 = vadd.f32 0.0, %v2667
      %v2669 = vpop.f32.mrf.mxu0
      %v2670 = vadd.f32 0.0, %v2669
      %2671 = vmatmul.bf16.gmra.mxu0 %v912
      %v2672 = vpop.f32.mrf.mxu0
      %v2673 = vadd.f32 0.0, %v2672
      %v2674 = vpop.f32.mrf.mxu0
      %v2675 = vadd.f32 0.0, %v2674
      %2676 = vmatmul.bf16.gmra.mxu0 %v915
      %v2677 = vpop.f32.mrf.mxu0
      %v2678 = vadd.f32 0.0, %v2677
      %v2679 = vpop.f32.mrf.mxu0
      %v2680 = vadd.f32 0.0, %v2679
      %2681 = vmatmul.bf16.gmra.mxu0 %v918
      %v2682 = vpop.f32.mrf.mxu0
      %v2683 = vadd.f32 0.0, %v2682
      %v2684 = vpop.f32.mrf.mxu0
      %v2685 = vadd.f32 0.0, %v2684
      %2686 = vmatmul.bf16.gmra.mxu0 %v873
      %v2687 = vpop.f32.mrf.mxu0
      %v2688 = vadd.f32 0.0, %v2687
      %v2689 = vpop.f32.mrf.mxu0
      %v2690 = vadd.f32 0.0, %v2689
      %2691 = vmatmul.bf16.gmra.mxu0 %v876
      %v2692 = vpop.f32.mrf.mxu0
      %v2693 = vadd.f32 0.0, %v2692
      %v2694 = vpop.f32.mrf.mxu0
      %v2695 = vadd.f32 0.0, %v2694
      %2696 = vdwg.mxu0
      %2697 = vset.pattern.permute.xlu0 7
      %2698 = vperm.xlu0 %2697, %v372
      %v2699 = vpop.permute.xlu0 %2698
      %2701 = vset.pattern.permute.xlu0 7
      %2702 = vperm.xlu0 %2701, %v373
      %v2703 = vpop.permute.xlu0 %2702
      %2705 = vset.pattern.permute.xlu0 7
      %2706 = vperm.xlu0 %2705, %v374
      %v2707 = vpop.permute.xlu0 %2706
      %2709 = vset.pattern.permute.xlu0 7
      %2710 = vperm.xlu0 %2709, %v375
      %v2711 = vpop.permute.xlu0 %2710
      %2713 = vset.pattern.permute.xlu0 7
      %2714 = vperm.xlu0 %2713, %v376
      %v2715 = vpop.permute.xlu0 %2714
      %2717 = vset.pattern.permute.xlu0 7
      %2718 = vperm.xlu0 %2717, %v377
      %v2719 = vpop.permute.xlu0 %2718
      %2721 = vset.pattern.permute.xlu0 7
      %2722 = vperm.xlu0 %2721, %v378
      %v2723 = vpop.permute.xlu0 %2722
      %2725 = vset.pattern.permute.xlu0 7
      %2726 = vperm.xlu0 %2725, %v379
      %v2727 = vpop.permute.xlu0 %2726
      %2729 = vset.pattern.permute.xlu0 7
      %2730 = vperm.xlu0 %2729, %v380
      %v2731 = vpop.permute.xlu0 %2730
      %2733 = vset.pattern.permute.xlu0 7
      %2734 = vperm.xlu0 %2733, %v381
      %v2735 = vpop.permute.xlu0 %2734
      %2737 = vset.pattern.permute.xlu0 7
      %2738 = vperm.xlu0 %2737, %v382
      %v2739 = vpop.permute.xlu0 %2738
      %2741 = vset.pattern.permute.xlu0 7
      %2742 = vperm.xlu0 %2741, %v383
      %v2743 = vpop.permute.xlu0 %2742
      %2745 = vset.pattern.permute.xlu0 7
      %2746 = vperm.xlu0 %2745, %v384
      %v2747 = vpop.permute.xlu0 %2746
      %2749 = vset.pattern.permute.xlu0 7
      %2750 = vperm.xlu0 %2749, %v385
      %v2751 = vpop.permute.xlu0 %2750
      %2753 = vset.pattern.permute.xlu0 7
      %2754 = vperm.xlu0 %2753, %v386
      %v2755 = vpop.permute.xlu0 %2754
      %2757 = vset.pattern.permute.xlu0 7
      %2758 = vperm.xlu0 %2757, %v387
      %v2759 = vpop.permute.xlu0 %2758
      %2761 = vset.pattern.permute.xlu0 7
      %2762 = vperm.xlu0 %2761, %v388
      %v2763 = vpop.permute.xlu0 %2762
      %2765 = vset.pattern.permute.xlu0 7
      %2766 = vperm.xlu0 %2765, %v389
      %v2767 = vpop.permute.xlu0 %2766
      %2769 = vset.pattern.permute.xlu0 7
      %2770 = vperm.xlu0 %2769, %v390
      %v2771 = vpop.permute.xlu0 %2770
      %2773 = vset.pattern.permute.xlu0 7
      %2774 = vperm.xlu0 %2773, %v391
      %v2775 = vpop.permute.xlu0 %2774
      %2777 = vset.pattern.permute.xlu0 7
      %2778 = vperm.xlu0 %2777, %v392
      %v2779 = vpop.permute.xlu0 %2778
      %2781 = vset.pattern.permute.xlu0 7
      %2782 = vperm.xlu0 %2781, %v393
      %v2783 = vpop.permute.xlu0 %2782
      %2785 = vset.pattern.permute.xlu0 7
      %2786 = vperm.xlu0 %2785, %v394
      %v2787 = vpop.permute.xlu0 %2786
      %2789 = vset.pattern.permute.xlu0 7
      %2790 = vperm.xlu0 %2789, %v395
      %v2791 = vpop.permute.xlu0 %2790
      %2793 = vset.pattern.permute.xlu0 7
      %2794 = vperm.xlu0 %2793, %v396
      %v2795 = vpop.permute.xlu0 %2794
      %2797 = vset.pattern.permute.xlu0 7
      %2798 = vperm.xlu0 %2797, %v397
      %v2799 = vpop.permute.xlu0 %2798
      %2801 = vset.pattern.permute.xlu0 7
      %2802 = vperm.xlu0 %2801, %v398
      %v2803 = vpop.permute.xlu0 %2802
      %2805 = vset.pattern.permute.xlu0 7
      %2806 = vperm.xlu0 %2805, %v399
      %v2807 = vpop.permute.xlu0 %2806
      %2809 = vset.pattern.permute.xlu0 7
      %2810 = vperm.xlu0 %2809, %v400
      %v2811 = vpop.permute.xlu0 %2810
      %2813 = vset.pattern.permute.xlu0 7
      %2814 = vperm.xlu0 %2813, %v401
      %v2815 = vpop.permute.xlu0 %2814
      %2817 = vset.pattern.permute.xlu0 7
      %2818 = vperm.xlu0 %2817, %v402
      %v2819 = vpop.permute.xlu0 %2818
      %2821 = vset.pattern.permute.xlu0 7
      %2822 = vperm.xlu0 %2821, %v403
      %v2823 = vpop.permute.xlu0 %2822
      %v2825 = vmul.f32 %v2618, %v2699
      %v2826 = vmul.f32 %v2620, %v2703
      %v2827 = vmul.f32 %v2623, %v2707
      %v2828 = vmul.f32 %v2625, %v2711
      %v2829 = vmul.f32 %v2628, %v2715
      %v2830 = vmul.f32 %v2630, %v2719
      %v2831 = vmul.f32 %v2633, %v2723
      %v2832 = vmul.f32 %v2635, %v2727
      %v2833 = vmul.f32 %v2638, %v2731
      %v2834 = vmul.f32 %v2640, %v2735
      %v2835 = vmul.f32 %v2643, %v2739
      %v2836 = vmul.f32 %v2645, %v2743
      %v2837 = vmul.f32 %v2648, %v2747
      %v2838 = vmul.f32 %v2650, %v2751
      %v2839 = vmul.f32 %v2653, %v2755
      %v2840 = vmul.f32 %v2655, %v2759
      %v2841 = vmul.f32 %v2658, %v2763
      %v2842 = vmul.f32 %v2660, %v2767
      %v2843 = vmul.f32 %v2663, %v2771
      %v2844 = vmul.f32 %v2665, %v2775
      %v2845 = vmul.f32 %v2668, %v2779
      %v2846 = vmul.f32 %v2670, %v2783
      %v2847 = vmul.f32 %v2673, %v2787
      %v2848 = vmul.f32 %v2675, %v2791
      %v2849 = vmul.f32 %v2678, %v2795
      %v2850 = vmul.f32 %v2680, %v2799
      %v2851 = vmul.f32 %v2683, %v2803
      %v2852 = vmul.f32 %v2685, %v2807
      %v2853 = vmul.f32 %v2688, %v2811
      %v2854 = vmul.f32 %v2690, %v2815
      %v2855 = vmul.f32 %v2693, %v2819
      %v2856 = vmul.f32 %v2695, %v2823
      %v2857 = vadd.f32 %v2571, %v2825
      %v2858 = vadd.f32 %v2572, %v2826
      %v2859 = vadd.f32 %v2573, %v2827
      %v2860 = vadd.f32 %v2574, %v2828
      %v2861 = vadd.f32 %v2575, %v2829
      %v2862 = vadd.f32 %v2576, %v2830
      %v2863 = vadd.f32 %v2577, %v2831
      %v2864 = vadd.f32 %v2578, %v2832
      %v2865 = vadd.f32 %v2579, %v2833
      %v2866 = vadd.f32 %v2580, %v2834
      %v2867 = vadd.f32 %v2581, %v2835
      %v2868 = vadd.f32 %v2582, %v2836
      %v2869 = vadd.f32 %v2583, %v2837
      %v2870 = vadd.f32 %v2584, %v2838
      %v2871 = vadd.f32 %v2585, %v2839
      %v2872 = vadd.f32 %v2586, %v2840
      %v2873 = vadd.f32 %v2587, %v2841
      %v2874 = vadd.f32 %v2588, %v2842
      %v2875 = vadd.f32 %v2589, %v2843
      %v2876 = vadd.f32 %v2590, %v2844
      %v2877 = vadd.f32 %v2591, %v2845
      %v2878 = vadd.f32 %v2592, %v2846
      %v2879 = vadd.f32 %v2593, %v2847
      %v2880 = vadd.f32 %v2594, %v2848
      %v2881 = vadd.f32 %v2595, %v2849
      %v2882 = vadd.f32 %v2596, %v2850
      %v2883 = vadd.f32 %v2597, %v2851
      %v2884 = vadd.f32 %v2598, %v2852
      %v2885 = vadd.f32 %v2599, %v2853
      %v2886 = vadd.f32 %v2600, %v2854
      %v2887 = vadd.f32 %v2601, %v2855
      %v2888 = vadd.f32 %v2602, %v2856
      %s2889 = scalar_lea.vmem %s1, 32
      %v2890 = vld [vmem:[%s2889] sm:$0xf]
      %v2892 = vsel %vm537, %v2890, 0
      %2894 = vmatpush.bf16.msra.mxu0 0
      %2895 = vmatpush.bf16.msra.mxu0 0
      %2896 = vmatpush.bf16.msra.mxu0 0
      %2897 = vmatpush.bf16.msra.mxu0 0
      %2898 = vmatpush.bf16.msra.mxu0 0
      %2899 = vmatpush.bf16.msra.mxu0 0
      %2900 = vmatpush.bf16.msra.mxu0 0
      %2901 = vmatpush.bf16.msra.mxu0 %v2892
      %2902 = vmatmul.bf16.gmra.mxu0 %v1294
      %v2903 = vpop.f32.mrf.mxu0
      %v2904 = vadd.f32 0.0, %v2903
      %v2905 = vpop.f32.mrf.mxu0
      %v2906 = vadd.f32 0.0, %v2905
      %2907 = vmatmul.bf16.gmra.mxu0 %v1297
      %v2908 = vpop.f32.mrf.mxu0
      %v2909 = vadd.f32 0.0, %v2908
      %v2910 = vpop.f32.mrf.mxu0
      %v2911 = vadd.f32 0.0, %v2910
      %2912 = vmatmul.bf16.gmra.mxu0 %v1300
      %v2913 = vpop.f32.mrf.mxu0
      %v2914 = vadd.f32 0.0, %v2913
      %v2915 = vpop.f32.mrf.mxu0
      %v2916 = vadd.f32 0.0, %v2915
      %2917 = vmatmul.bf16.gmra.mxu0 %v1303
      %v2918 = vpop.f32.mrf.mxu0
      %v2919 = vadd.f32 0.0, %v2918
      %v2920 = vpop.f32.mrf.mxu0
      %v2921 = vadd.f32 0.0, %v2920
      %2922 = vmatmul.bf16.gmra.mxu0 %v1306
      %v2923 = vpop.f32.mrf.mxu0
      %v2924 = vadd.f32 0.0, %v2923
      %v2925 = vpop.f32.mrf.mxu0
      %v2926 = vadd.f32 0.0, %v2925
      %2927 = vmatmul.bf16.gmra.mxu0 %v1309
      %v2928 = vpop.f32.mrf.mxu0
      %v2929 = vadd.f32 0.0, %v2928
      %v2930 = vpop.f32.mrf.mxu0
      %v2931 = vadd.f32 0.0, %v2930
      %2932 = vmatmul.bf16.gmra.mxu0 %v1312
      %v2933 = vpop.f32.mrf.mxu0
      %v2934 = vadd.f32 0.0, %v2933
      %v2935 = vpop.f32.mrf.mxu0
      %v2936 = vadd.f32 0.0, %v2935
      %2937 = vmatmul.bf16.gmra.mxu0 %v1315
      %v2938 = vpop.f32.mrf.mxu0
      %v2939 = vadd.f32 0.0, %v2938
      %v2940 = vpop.f32.mrf.mxu0
      %v2941 = vadd.f32 0.0, %v2940
      %2942 = vmatmul.bf16.gmra.mxu0 %v1318
      %v2943 = vpop.f32.mrf.mxu0
      %v2944 = vadd.f32 0.0, %v2943
      %v2945 = vpop.f32.mrf.mxu0
      %v2946 = vadd.f32 0.0, %v2945
      %2947 = vmatmul.bf16.gmra.mxu0 %v1321
      %v2948 = vpop.f32.mrf.mxu0
      %v2949 = vadd.f32 0.0, %v2948
      %v2950 = vpop.f32.mrf.mxu0
      %v2951 = vadd.f32 0.0, %v2950
      %2952 = vmatmul.bf16.gmra.mxu0 %v1324
      %v2953 = vpop.f32.mrf.mxu0
      %v2954 = vadd.f32 0.0, %v2953
      %v2955 = vpop.f32.mrf.mxu0
      %v2956 = vadd.f32 0.0, %v2955
      %2957 = vmatmul.bf16.gmra.mxu0 %v1327
      %v2958 = vpop.f32.mrf.mxu0
      %v2959 = vadd.f32 0.0, %v2958
      %v2960 = vpop.f32.mrf.mxu0
      %v2961 = vadd.f32 0.0, %v2960
      %2962 = vmatmul.bf16.gmra.mxu0 %v1330
      %v2963 = vpop.f32.mrf.mxu0
      %v2964 = vadd.f32 0.0, %v2963
      %v2965 = vpop.f32.mrf.mxu0
      %v2966 = vadd.f32 0.0, %v2965
      %2967 = vmatmul.bf16.gmra.mxu0 %v1333
      %v2968 = vpop.f32.mrf.mxu0
      %v2969 = vadd.f32 0.0, %v2968
      %v2970 = vpop.f32.mrf.mxu0
      %v2971 = vadd.f32 0.0, %v2970
      %2972 = vmatmul.bf16.gmra.mxu0 %v1288
      %v2973 = vpop.f32.mrf.mxu0
      %v2974 = vadd.f32 0.0, %v2973
      %v2975 = vpop.f32.mrf.mxu0
      %v2976 = vadd.f32 0.0, %v2975
      %2977 = vmatmul.bf16.gmra.mxu0 %v1291
      %v2978 = vpop.f32.mrf.mxu0
      %v2979 = vadd.f32 0.0, %v2978
      %v2980 = vpop.f32.mrf.mxu0
      %v2981 = vadd.f32 0.0, %v2980
      %2982 = vdwg.mxu0
      %2983 = vset.pattern.permute.xlu0 8
      %2984 = vperm.xlu0 %2983, %v372
      %v2985 = vpop.permute.xlu0 %2984
      %2987 = vset.pattern.permute.xlu0 8
      %2988 = vperm.xlu0 %2987, %v373
      %v2989 = vpop.permute.xlu0 %2988
      %2991 = vset.pattern.permute.xlu0 8
      %2992 = vperm.xlu0 %2991, %v374
      %v2993 = vpop.permute.xlu0 %2992
      %2995 = vset.pattern.permute.xlu0 8
      %2996 = vperm.xlu0 %2995, %v375
      %v2997 = vpop.permute.xlu0 %2996
      %2999 = vset.pattern.permute.xlu0 8
      %3000 = vperm.xlu0 %2999, %v376
      %v3001 = vpop.permute.xlu0 %3000
      %3003 = vset.pattern.permute.xlu0 8
      %3004 = vperm.xlu0 %3003, %v377
      %v3005 = vpop.permute.xlu0 %3004
      %3007 = vset.pattern.permute.xlu0 8
      %3008 = vperm.xlu0 %3007, %v378
      %v3009 = vpop.permute.xlu0 %3008
      %3011 = vset.pattern.permute.xlu0 8
      %3012 = vperm.xlu0 %3011, %v379
      %v3013 = vpop.permute.xlu0 %3012
      %3015 = vset.pattern.permute.xlu0 8
      %3016 = vperm.xlu0 %3015, %v380
      %v3017 = vpop.permute.xlu0 %3016
      %3019 = vset.pattern.permute.xlu0 8
      %3020 = vperm.xlu0 %3019, %v381
      %v3021 = vpop.permute.xlu0 %3020
      %3023 = vset.pattern.permute.xlu0 8
      %3024 = vperm.xlu0 %3023, %v382
      %v3025 = vpop.permute.xlu0 %3024
      %3027 = vset.pattern.permute.xlu0 8
      %3028 = vperm.xlu0 %3027, %v383
      %v3029 = vpop.permute.xlu0 %3028
      %3031 = vset.pattern.permute.xlu0 8
      %3032 = vperm.xlu0 %3031, %v384
      %v3033 = vpop.permute.xlu0 %3032
      %3035 = vset.pattern.permute.xlu0 8
      %3036 = vperm.xlu0 %3035, %v385
      %v3037 = vpop.permute.xlu0 %3036
      %3039 = vset.pattern.permute.xlu0 8
      %3040 = vperm.xlu0 %3039, %v386
      %v3041 = vpop.permute.xlu0 %3040
      %3043 = vset.pattern.permute.xlu0 8
      %3044 = vperm.xlu0 %3043, %v387
      %v3045 = vpop.permute.xlu0 %3044
      %3047 = vset.pattern.permute.xlu0 8
      %3048 = vperm.xlu0 %3047, %v388
      %v3049 = vpop.permute.xlu0 %3048
      %3051 = vset.pattern.permute.xlu0 8
      %3052 = vperm.xlu0 %3051, %v389
      %v3053 = vpop.permute.xlu0 %3052
      %3055 = vset.pattern.permute.xlu0 8
      %3056 = vperm.xlu0 %3055, %v390
      %v3057 = vpop.permute.xlu0 %3056
      %3059 = vset.pattern.permute.xlu0 8
      %3060 = vperm.xlu0 %3059, %v391
      %v3061 = vpop.permute.xlu0 %3060
      %3063 = vset.pattern.permute.xlu0 8
      %3064 = vperm.xlu0 %3063, %v392
      %v3065 = vpop.permute.xlu0 %3064
      %3067 = vset.pattern.permute.xlu0 8
      %3068 = vperm.xlu0 %3067, %v393
      %v3069 = vpop.permute.xlu0 %3068
      %3071 = vset.pattern.permute.xlu0 8
      %3072 = vperm.xlu0 %3071, %v394
      %v3073 = vpop.permute.xlu0 %3072
      %3075 = vset.pattern.permute.xlu0 8
      %3076 = vperm.xlu0 %3075, %v395
      %v3077 = vpop.permute.xlu0 %3076
      %3079 = vset.pattern.permute.xlu0 8
      %3080 = vperm.xlu0 %3079, %v396
      %v3081 = vpop.permute.xlu0 %3080
      %3083 = vset.pattern.permute.xlu0 8
      %3084 = vperm.xlu0 %3083, %v397
      %v3085 = vpop.permute.xlu0 %3084
      %3087 = vset.pattern.permute.xlu0 8
      %3088 = vperm.xlu0 %3087, %v398
      %v3089 = vpop.permute.xlu0 %3088
      %3091 = vset.pattern.permute.xlu0 8
      %3092 = vperm.xlu0 %3091, %v399
      %v3093 = vpop.permute.xlu0 %3092
      %3095 = vset.pattern.permute.xlu0 8
      %3096 = vperm.xlu0 %3095, %v400
      %v3097 = vpop.permute.xlu0 %3096
      %3099 = vset.pattern.permute.xlu0 8
      %3100 = vperm.xlu0 %3099, %v401
      %v3101 = vpop.permute.xlu0 %3100
      %3103 = vset.pattern.permute.xlu0 8
      %3104 = vperm.xlu0 %3103, %v402
      %v3105 = vpop.permute.xlu0 %3104
      %3107 = vset.pattern.permute.xlu0 8
      %3108 = vperm.xlu0 %3107, %v403
      %v3109 = vpop.permute.xlu0 %3108
      %v3111 = vmul.f32 %v2904, %v2985
      %v3112 = vmul.f32 %v2906, %v2989
      %v3113 = vmul.f32 %v2909, %v2993
      %v3114 = vmul.f32 %v2911, %v2997
      %v3115 = vmul.f32 %v2914, %v3001
      %v3116 = vmul.f32 %v2916, %v3005
      %v3117 = vmul.f32 %v2919, %v3009
      %v3118 = vmul.f32 %v2921, %v3013
      %v3119 = vmul.f32 %v2924, %v3017
      %v3120 = vmul.f32 %v2926, %v3021
      %v3121 = vmul.f32 %v2929, %v3025
      %v3122 = vmul.f32 %v2931, %v3029
      %v3123 = vmul.f32 %v2934, %v3033
      %v3124 = vmul.f32 %v2936, %v3037
      %v3125 = vmul.f32 %v2939, %v3041
      %v3126 = vmul.f32 %v2941, %v3045
      %v3127 = vmul.f32 %v2944, %v3049
      %v3128 = vmul.f32 %v2946, %v3053
      %v3129 = vmul.f32 %v2949, %v3057
      %v3130 = vmul.f32 %v2951, %v3061
      %v3131 = vmul.f32 %v2954, %v3065
      %v3132 = vmul.f32 %v2956, %v3069
      %v3133 = vmul.f32 %v2959, %v3073
      %v3134 = vmul.f32 %v2961, %v3077
      %v3135 = vmul.f32 %v2964, %v3081
      %v3136 = vmul.f32 %v2966, %v3085
      %v3137 = vmul.f32 %v2969, %v3089
      %v3138 = vmul.f32 %v2971, %v3093
      %v3139 = vmul.f32 %v2974, %v3097
      %v3140 = vmul.f32 %v2976, %v3101
      %v3141 = vmul.f32 %v2979, %v3105
      %v3142 = vmul.f32 %v2981, %v3109
      %v3143 = vadd.f32 %v2857, %v3111
      %v3144 = vadd.f32 %v2858, %v3112
      %v3145 = vadd.f32 %v2859, %v3113
      %v3146 = vadd.f32 %v2860, %v3114
      %v3147 = vadd.f32 %v2861, %v3115
      %v3148 = vadd.f32 %v2862, %v3116
      %v3149 = vadd.f32 %v2863, %v3117
      %v3150 = vadd.f32 %v2864, %v3118
      %v3151 = vadd.f32 %v2865, %v3119
      %v3152 = vadd.f32 %v2866, %v3120
      %v3153 = vadd.f32 %v2867, %v3121
      %v3154 = vadd.f32 %v2868, %v3122
      %v3155 = vadd.f32 %v2869, %v3123
      %v3156 = vadd.f32 %v2870, %v3124
      %v3157 = vadd.f32 %v2871, %v3125
      %v3158 = vadd.f32 %v2872, %v3126
      %v3159 = vadd.f32 %v2873, %v3127
      %v3160 = vadd.f32 %v2874, %v3128
      %v3161 = vadd.f32 %v2875, %v3129
      %v3162 = vadd.f32 %v2876, %v3130
      %v3163 = vadd.f32 %v2877, %v3131
      %v3164 = vadd.f32 %v2878, %v3132
      %v3165 = vadd.f32 %v2879, %v3133
      %v3166 = vadd.f32 %v2880, %v3134
      %v3167 = vadd.f32 %v2881, %v3135
      %v3168 = vadd.f32 %v2882, %v3136
      %v3169 = vadd.f32 %v2883, %v3137
      %v3170 = vadd.f32 %v2884, %v3138
      %v3171 = vadd.f32 %v2885, %v3139
      %v3172 = vadd.f32 %v2886, %v3140
      %v3173 = vadd.f32 %v2887, %v3141
      %v3174 = vadd.f32 %v2888, %v3142
      %3175 = vst.msk [vmem:[%s233] sm:$0xff] %vm488, %v3143
      %3176 = vst.msk [vmem:[%s233 + $0x8] sm:$0xff] %vm488, %v3144
      %3177 = vst.msk [vmem:[%s233 + $0x10] sm:$0xff] %vm488, %v3145
      %3178 = vst.msk [vmem:[%s233 + $0x18] sm:$0xff] %vm488, %v3146
      %3179 = vst.msk [vmem:[%s233 + $0x20] sm:$0xff] %vm488, %v3147
      %3180 = vst.msk [vmem:[%s233 + $0x28] sm:$0xff] %vm488, %v3148
      %3181 = vst.msk [vmem:[%s233 + $0x30] sm:$0xff] %vm488, %v3149
      %3182 = vst.msk [vmem:[%s233 + $0x38] sm:$0xff] %vm488, %v3150
      %3183 = vst.msk [vmem:[%s233 + $0x40] sm:$0xff] %vm488, %v3151
      %3184 = vst.msk [vmem:[%s233 + $0x48] sm:$0xff] %vm488, %v3152
      %3185 = vst.msk [vmem:[%s233 + $0x50] sm:$0xff] %vm488, %v3153
      %3186 = vst.msk [vmem:[%s233 + $0x58] sm:$0xff] %vm488, %v3154
      %3187 = vst.msk [vmem:[%s233 + $0x60] sm:$0xff] %vm488, %v3155
      %3188 = vst.msk [vmem:[%s233 + $0x68] sm:$0xff] %vm488, %v3156
      %3189 = vst.msk [vmem:[%s233 + $0x70] sm:$0xff] %vm488, %v3157
      %3190 = vst.msk [vmem:[%s233 + $0x78] sm:$0xff] %vm488, %v3158
      %3191 = vst.msk [vmem:[%s233 + $0x80] sm:$0xff] %vm488, %v3159
      %3192 = vst.msk [vmem:[%s233 + $0x88] sm:$0xff] %vm488, %v3160
      %3193 = vst.msk [vmem:[%s233 + $0x90] sm:$0xff] %vm488, %v3161
      %3194 = vst.msk [vmem:[%s233 + $0x98] sm:$0xff] %vm488, %v3162
      %3195 = vst.msk [vmem:[%s233 + $0xa0] sm:$0xff] %vm488, %v3163
      %3196 = vst.msk [vmem:[%s233 + $0xa8] sm:$0xff] %vm488, %v3164
      %3197 = vst.msk [vmem:[%s233 + $0xb0] sm:$0xff] %vm488, %v3165
      %3198 = vst.msk [vmem:[%s233 + $0xb8] sm:$0xff] %vm488, %v3166
      %3199 = vst.msk [vmem:[%s233 + $0xc0] sm:$0xff] %vm488, %v3167
      %3200 = vst.msk [vmem:[%s233 + $0xc8] sm:$0xff] %vm488, %v3168
      %3201 = vst.msk [vmem:[%s233 + $0xd0] sm:$0xff] %vm488, %v3169
      %3202 = vst.msk [vmem:[%s233 + $0xd8] sm:$0xff] %vm488, %v3170
      %3203 = vst.msk [vmem:[%s233 + $0xe0] sm:$0xff] %vm488, %v3171
      %3204 = vst.msk [vmem:[%s233 + $0xe8] sm:$0xff] %vm488, %v3172
      %3205 = vst.msk [vmem:[%s233 + $0xf0] sm:$0xff] %vm488, %v3173
      %3206 = vst.msk [vmem:[%s233 + $0xf8] sm:$0xff] %vm488, %v3174
      %v3207 = vsel %vm488, %v3143, 0.0
      %v3208 = vsel %vm488, %v3144, 0.0
      %v3209 = vadd.f32 %v3207, %v3208
      %v3210 = vsel %vm488, %v3145, 0.0
      %v3211 = vadd.f32 %v3209, %v3210
      %v3212 = vsel %vm488, %v3146, 0.0
      %v3213 = vadd.f32 %v3211, %v3212
      %v3214 = vsel %vm488, %v3147, 0.0
      %v3215 = vadd.f32 %v3213, %v3214
      %v3216 = vsel %vm488, %v3148, 0.0
      %v3217 = vadd.f32 %v3215, %v3216
      %v3218 = vsel %vm488, %v3149, 0.0
      %v3219 = vadd.f32 %v3217, %v3218
      %v3220 = vsel %vm488, %v3150, 0.0
      %v3221 = vadd.f32 %v3219, %v3220
      %v3222 = vsel %vm488, %v3151, 0.0
      %v3223 = vadd.f32 %v3221, %v3222
      %v3224 = vsel %vm488, %v3152, 0.0
      %v3225 = vadd.f32 %v3223, %v3224
      %v3226 = vsel %vm488, %v3153, 0.0
      %v3227 = vadd.f32 %v3225, %v3226
      %v3228 = vsel %vm488, %v3154, 0.0
      %v3229 = vadd.f32 %v3227, %v3228
      %v3230 = vsel %vm488, %v3155, 0.0
      %v3231 = vadd.f32 %v3229, %v3230
      %v3232 = vsel %vm488, %v3156, 0.0
      %v3233 = vadd.f32 %v3231, %v3232
      %v3234 = vsel %vm488, %v3157, 0.0
      %v3235 = vadd.f32 %v3233, %v3234
      %v3236 = vsel %vm488, %v3158, 0.0
      %v3237 = vadd.f32 %v3235, %v3236
      %v3238 = vsel %vm488, %v3159, 0.0
      %v3239 = vadd.f32 %v3237, %v3238
      %v3240 = vsel %vm488, %v3160, 0.0
      %v3241 = vadd.f32 %v3239, %v3240
      %v3242 = vsel %vm488, %v3161, 0.0
      %v3243 = vadd.f32 %v3241, %v3242
      %v3244 = vsel %vm488, %v3162, 0.0
      %v3245 = vadd.f32 %v3243, %v3244
      %v3246 = vsel %vm488, %v3163, 0.0
      %v3247 = vadd.f32 %v3245, %v3246
      %v3248 = vsel %vm488, %v3164, 0.0
      %v3249 = vadd.f32 %v3247, %v3248
      %v3250 = vsel %vm488, %v3165, 0.0
      %v3251 = vadd.f32 %v3249, %v3250
      %v3252 = vsel %vm488, %v3166, 0.0
      %v3253 = vadd.f32 %v3251, %v3252
      %v3254 = vsel %vm488, %v3167, 0.0
      %v3255 = vadd.f32 %v3253, %v3254
      %v3256 = vsel %vm488, %v3168, 0.0
      %v3257 = vadd.f32 %v3255, %v3256
      %v3258 = vsel %vm488, %v3169, 0.0
      %v3259 = vadd.f32 %v3257, %v3258
      %v3260 = vsel %vm488, %v3170, 0.0
      %v3261 = vadd.f32 %v3259, %v3260
      %v3262 = vsel %vm488, %v3171, 0.0
      %v3263 = vadd.f32 %v3261, %v3262
      %v3264 = vsel %vm488, %v3172, 0.0
      %v3265 = vadd.f32 %v3263, %v3264
      %v3266 = vsel %vm488, %v3173, 0.0
      %v3267 = vadd.f32 %v3265, %v3266
      %v3268 = vsel %vm488, %v3174, 0.0
      %v3269 = vadd.f32 %v3267, %v3268
      %v3270 = vrot.slane %v3269, 4
      %v3271 = vadd.f32 %v3269, %v3270
      %v3272 = vrot.slane %v3271, 2
      %v3273 = vadd.f32 %v3271, %v3272
      %v3274 = vrot.slane %v3273, 1
      %v3275 = vadd.f32 %v3273, %v3274
      %vm3276 = vcmask 57344
      %3277 = vst.msk [vmem:[%s238] sm:$0x1] %vm3276, %v3275
      %v3278 = vmul.f32 %v3143, %v3143
      %v3279 = vmul.f32 %v3144, %v3144
      %v3280 = vmul.f32 %v3145, %v3145
      %v3281 = vmul.f32 %v3146, %v3146
      %v3282 = vmul.f32 %v3147, %v3147
      %v3283 = vmul.f32 %v3148, %v3148
      %v3284 = vmul.f32 %v3149, %v3149
      %v3285 = vmul.f32 %v3150, %v3150
      %v3286 = vmul.f32 %v3151, %v3151
      %v3287 = vmul.f32 %v3152, %v3152
      %v3288 = vmul.f32 %v3153, %v3153
      %v3289 = vmul.f32 %v3154, %v3154
      %v3290 = vmul.f32 %v3155, %v3155
      %v3291 = vmul.f32 %v3156, %v3156
      %v3292 = vmul.f32 %v3157, %v3157
      %v3293 = vmul.f32 %v3158, %v3158
      %v3294 = vmul.f32 %v3159, %v3159
      %v3295 = vmul.f32 %v3160, %v3160
      %v3296 = vmul.f32 %v3161, %v3161
      %v3297 = vmul.f32 %v3162, %v3162
      %v3298 = vmul.f32 %v3163, %v3163
      %v3299 = vmul.f32 %v3164, %v3164
      %v3300 = vmul.f32 %v3165, %v3165
      %v3301 = vmul.f32 %v3166, %v3166
      %v3302 = vmul.f32 %v3167, %v3167
      %v3303 = vmul.f32 %v3168, %v3168
      %v3304 = vmul.f32 %v3169, %v3169
      %v3305 = vmul.f32 %v3170, %v3170
      %v3306 = vmul.f32 %v3171, %v3171
      %v3307 = vmul.f32 %v3172, %v3172
      %v3308 = vmul.f32 %v3173, %v3173
      %v3309 = vmul.f32 %v3174, %v3174
      %v3310 = vsel %vm488, %v3278, 0.0
      %v3311 = vsel %vm488, %v3279, 0.0
      %v3312 = vadd.f32 %v3310, %v3311
      %v3313 = vsel %vm488, %v3280, 0.0
      %v3314 = vadd.f32 %v3312, %v3313
      %v3315 = vsel %vm488, %v3281, 0.0
      %v3316 = vadd.f32 %v3314, %v3315
      %v3317 = vsel %vm488, %v3282, 0.0
      %v3318 = vadd.f32 %v3316, %v3317
      %v3319 = vsel %vm488, %v3283, 0.0
      %v3320 = vadd.f32 %v3318, %v3319
      %v3321 = vsel %vm488, %v3284, 0.0
      %v3322 = vadd.f32 %v3320, %v3321
      %v3323 = vsel %vm488, %v3285, 0.0
      %v3324 = vadd.f32 %v3322, %v3323
      %v3325 = vsel %vm488, %v3286, 0.0
      %v3326 = vadd.f32 %v3324, %v3325
      %v3327 = vsel %vm488, %v3287, 0.0
      %v3328 = vadd.f32 %v3326, %v3327
      %v3329 = vsel %vm488, %v3288, 0.0
      %v3330 = vadd.f32 %v3328, %v3329
      %v3331 = vsel %vm488, %v3289, 0.0
      %v3332 = vadd.f32 %v3330, %v3331
      %v3333 = vsel %vm488, %v3290, 0.0
      %v3334 = vadd.f32 %v3332, %v3333
      %v3335 = vsel %vm488, %v3291, 0.0
      %v3336 = vadd.f32 %v3334, %v3335
      %v3337 = vsel %vm488, %v3292, 0.0
      %v3338 = vadd.f32 %v3336, %v3337
      %v3339 = vsel %vm488, %v3293, 0.0
      %v3340 = vadd.f32 %v3338, %v3339
      %v3341 = vsel %vm488, %v3294, 0.0
      %v3342 = vadd.f32 %v3340, %v3341
      %v3343 = vsel %vm488, %v3295, 0.0
      %v3344 = vadd.f32 %v3342, %v3343
      %v3345 = vsel %vm488, %v3296, 0.0
      %v3346 = vadd.f32 %v3344, %v3345
      %v3347 = vsel %vm488, %v3297, 0.0
      %v3348 = vadd.f32 %v3346, %v3347
      %v3349 = vsel %vm488, %v3298, 0.0
      %v3350 = vadd.f32 %v3348, %v3349
      %v3351 = vsel %vm488, %v3299, 0.0
      %v3352 = vadd.f32 %v3350, %v3351
      %v3353 = vsel %vm488, %v3300, 0.0
      %v3354 = vadd.f32 %v3352, %v3353
      %v3355 = vsel %vm488, %v3301, 0.0
      %v3356 = vadd.f32 %v3354, %v3355
      %v3357 = vsel %vm488, %v3302, 0.0
      %v3358 = vadd.f32 %v3356, %v3357
      %v3359 = vsel %vm488, %v3303, 0.0
      %v3360 = vadd.f32 %v3358, %v3359
      %v3361 = vsel %vm488, %v3304, 0.0
      %v3362 = vadd.f32 %v3360, %v3361
      %v3363 = vsel %vm488, %v3305, 0.0
      %v3364 = vadd.f32 %v3362, %v3363
      %v3365 = vsel %vm488, %v3306, 0.0
      %v3366 = vadd.f32 %v3364, %v3365
      %v3367 = vsel %vm488, %v3307, 0.0
      %v3368 = vadd.f32 %v3366, %v3367
      %v3369 = vsel %vm488, %v3308, 0.0
      %v3370 = vadd.f32 %v3368, %v3369
      %v3371 = vsel %vm488, %v3309, 0.0
      %v3372 = vadd.f32 %v3370, %v3371
      %v3373 = vrot.slane %v3372, 4
      %v3374 = vadd.f32 %v3372, %v3373
      %v3375 = vrot.slane %v3374, 2
      %v3376 = vadd.f32 %v3374, %v3375
      %v3377 = vrot.slane %v3376, 1
      %v3378 = vadd.f32 %v3376, %v3377
      %3379 = vst.msk [vmem:[%s238 + $0x1] sm:$0x1] %vm3276, %v3378
      %s3380 = smul.u32 32, %s17
      %p3381 = scmp.lt.s32.totalorder %s3380, 63
      %s3382 = scalar_select %p3381, %s3380, 63
      %s3383 = smul.addr %s3382, 8
      %s3384 = scalar_lea.vmem %s4, %s3383
      %p3385 = scmp.lt.s32.totalorder %s17, 1
      %s3386 = scalar_select %p3385, %s17, 1
      %s3387 = smul.addr %s3386, 2
      %s3388 = scalar_lea.vmem %s5, %s3387
      // Predicated region
      $region37: #{bottleneck_block.5} parent=35 // pred_check
        %p3389 = pneg %p124
      $region38: #{bottleneck_block.5} parent=35 // pred_check_branch
        %3391 = sbr.rel (%p3389) target = $region40
      $region39: #{bottleneck_block.5} parent=35 // pred_region
        %s3392 = smul.u32 32, %s17
      $region40: #{bottleneck_block.5} parent=35 // pred_fallthru
        _
      // Predicated region
      $region41: #{bottleneck_block.5} parent=35 // pred_check
        %p3393 = pneg %p150
      $region42: #{bottleneck_block.5} parent=35 // pred_check_branch
        %3395 = sbr.rel (%p3393) target = $region44
      $region43: #{bottleneck_block.5} parent=35 // pred_region
        _
      $region44: #{bottleneck_block.5} parent=35 // pred_fallthru
        _
    $region36: #{bottleneck_block.5} parent=5 // pred_fallthru
      _
    %p3396 = scmp.le.s32.totalorder 2, %s12
    // Predicated region
    $region45: #{bottleneck_block.5} parent=5 // pred_check
      %p3397 = pneg %p3396
    $region46: #{bottleneck_block.5} parent=5 // pred_check_branch
      %3399 = sbr.rel (%p3397) target = $region48
    $region47: #{bottleneck_block.5} parent=5 // pred_region
      %s3400 = ssub.s32 %s12, 2
      // Predicated region
      $region49: #{bottleneck_block.5} parent=47 // pred_check
        %p3401 = pneg %p130
      $region50: #{bottleneck_block.5} parent=47 // pred_check_branch
        %3403 = sbr.rel (%p3401) target = $region52
      $region51: #{bottleneck_block.5} parent=47 // pred_region
        %s3404 = smul.u32 32, %s18
        %p3405 = scmp.lt.s32.totalorder %s3404, 63
        %s3406 = scalar_select %p3405, %s3404, 63
        %s3407 = smul.addr %s3406, 8
        %s3408 = scalar_lea.vmem %s4, %s3407
      $region52: #{bottleneck_block.5} parent=47 // pred_fallthru
        _
      // Predicated region
      $region53: #{bottleneck_block.5} parent=47 // pred_check
        %p3409 = pneg %p156
      $region54: #{bottleneck_block.5} parent=47 // pred_check_branch
        %3411 = sbr.rel (%p3409) target = $region56
      $region55: #{bottleneck_block.5} parent=47 // pred_region
        %p3412 = scmp.lt.s32.totalorder %s18, 1
        %s3413 = scalar_select %p3412, %s18, 1
        %s3414 = smul.addr %s3413, 2
        %s3415 = scalar_lea.vmem %s5, %s3414
      $region56: #{bottleneck_block.5} parent=47 // pred_fallthru
        _
    $region48: #{bottleneck_block.5} parent=5 // pred_fallthru
      _
  $region6: #{bottleneck_block.5} parent=0 // loop_footer
    %s16 = sadd.s32 1, %s12
  $region7: #{bottleneck_block.5} parent=0 // loop_footer_branch
    %11 = sbr.rel target = $region3
  $region8: #{bottleneck_block.5} parent=0 // loop_exit
    _

</llo_original>
